<compile_context>
chip_gen: v7x
topology: tpu7x:2x2x1
jax: 0.10.0
libtpu: 0.0.40
codegen_flags: <defaults>
</compile_context>

<pallas_src>
import functools
import math

import jax
import jax.numpy as jnp
from jax.experimental import pallas as pl
from jax.experimental.pallas import tpu as pltpu

K = 11          # conv kernel size
PAD = 5         # padding (keeps sequence length)
BN_EPS = 1e-5


# ----------------------------------------------------------------------------
# Fused decoder kernel: single invocation, all layers resident in VMEM/vregs.
# ----------------------------------------------------------------------------
def fused_decoder_kernel(x_ref, col_ref, w_res_ref, b_res_ref, w_out_ref,
                         b_out_ref, o_ref, stack_ref, *, C, L, res_num):
    # x_ref:     [C, B*L]            batch collapsed into the lane axis
    # col_ref:   [C, B*L] int32      within-segment column index (t = j mod L)
    # w_res_ref: [2*res_num, C, K*C] BN-scale-folded conv weights, tap-major flat
    # b_res_ref: [2*res_num, C, 1]   folded conv+BN bias
    # w_out_ref: [Cout, K*C], b_out_ref: [Cout, 1]
    # o_ref:     [Cout, B*L]
    # stack_ref: VMEM [K*C, B*L]     K-shifted tap stack for the wide matmul

    BL = x_ref.shape[-1]

    # Hoist the K per-tap edge masks out of BOTH the tap loop and the layer
    # loop: they depend only on the within-segment column index and are built
    # exactly once.  mask_k selects columns t with 0 <= t + k - PAD < L, so the
    # conv sees zeros outside each batch element's segment (no cross-batch bleed).
    col = col_ref[...]
    masks = []
    for k in range(K):
        if k < PAD:
            masks.append(col >= (PAD - k))          # zero the left edge
        elif k > PAD:
            masks.append(col < (L + PAD - k))       # zero the right edge
        else:
            masks.append(None)                      # centre tap: no masking

    def conv(act, w_flat, bias):
        # act: [C, BL] f32 value, w_flat: [Cout_l, K*C], bias: [Cout_l, 1]
        # Build the shifted tap stack with XLU rolls (otherwise-idle slot) and
        # precomputed masks; every store into stack_ref is lane-aligned.
        for k in range(K):                           # static unroll over taps
            if k == PAD:
                shifted = act
            else:
                # roll (jnp.roll semantics): out[:, t] = act[:, t + k - PAD]
                shifted = pltpu.roll(act, shift=(PAD - k) % BL, axis=1)
            if masks[k] is not None:
                shifted = jnp.where(masks[k], shifted, 0.0)
            stack_ref[k * C:(k + 1) * C, :] = shifted
        # One wide (K*C)-deep MXU contraction instead of K shallow ones.
        return jnp.dot(w_flat, stack_ref[...],
                       preferred_element_type=jnp.float32) + bias

    x = x_ref[...]                                   # [C, BL] f32
    for r in range(res_num):                         # static unroll (res_num small)
        h = jnp.maximum(conv(x, w_res_ref[2 * r], b_res_ref[2 * r]), 0.0)
        h = jnp.maximum(conv(h, w_res_ref[2 * r + 1], b_res_ref[2 * r + 1]), 0.0)
        x = x + h                                    # residual add, in-register
    o_ref[...] = jax.nn.sigmoid(conv(x, w_out_ref[...], b_out_ref[...]))


def decoder_pallas(x, w_res, b_res, w_out, b_out):
    """x: [B, C, L] f32.  Returns sigmoid(conv_out(rescnn^res_num(x))) : [B, Cout, L]."""
    B, C, L = x.shape
    n_conv = w_res.shape[0]
    res_num = n_conv // 2
    Cout = w_out.shape[0]
    BL = B * L

    # Layout plumbing (done by XLA outside the kernel): collapse batch into the
    # lane axis -> [C, B*L], and precompute the within-segment column index used
    # for the conv edge masks.
    x_flat = jnp.transpose(x, (1, 0, 2)).reshape(C, BL)
    col = jnp.broadcast_to(
        (jnp.arange(BL, dtype=jnp.int32) % L)[None, :], (C, BL))

    kernel = functools.partial(fused_decoder_kernel, C=C, L=L, res_num=res_num)
    y_flat = pl.pallas_call(
        kernel,
        out_shape=jax.ShapeDtypeStruct((Cout, BL), jnp.float32),
        grid_spec=pltpu.PrefetchScalarGridSpec(
            num_scalar_prefetch=0,
            grid=(1,),                                               # single fused step
            in_specs=[
                pl.BlockSpec((C, BL), lambda i: (0, 0)),             # activation
                pl.BlockSpec((C, BL), lambda i: (0, 0)),             # column index
                pl.BlockSpec((n_conv, C, K * C), lambda i: (0, 0, 0)),  # resident weights
                pl.BlockSpec((n_conv, C, 1), lambda i: (0, 0, 0)),      # resident biases
                pl.BlockSpec((Cout, K * C), lambda i: (0, 0)),       # out-conv weight
                pl.BlockSpec((Cout, 1), lambda i: (0, 0)),           # out-conv bias
            ],
            out_specs=pl.BlockSpec((Cout, BL), lambda i: (0, 0)),
            scratch_shapes=[
                pltpu.VMEM((K * C, BL), jnp.float32),                # shifted tap stack
            ],
        ),
    )(x_flat, col, w_res, b_res, w_out, b_out)
    return jnp.transpose(y_flat.reshape(Cout, B, L), (1, 0, 2))


# ----------------------------------------------------------------------------
# Deterministic parameter construction (Conv1d + BatchNorm1d, scale folded into W)
# ----------------------------------------------------------------------------
def init_conv_bn(key, cin, cout, with_bn=True):
    kw, kb, kg, kbt, km, kv = jax.random.split(key, 6)
    bound = 1.0 / math.sqrt(cin * K)
    w = jax.random.uniform(kw, (cout, cin, K), jnp.float32, -bound, bound)
    b = jax.random.uniform(kb, (cout,), jnp.float32, -bound, bound)
    if with_bn:
        gamma = jax.random.uniform(kg, (cout,), jnp.float32, 0.5, 1.5)
        beta = jax.random.uniform(kbt, (cout,), jnp.float32, -0.1, 0.1)
        mean = jax.random.normal(km, (cout,), jnp.float32) * 0.1
        var = jax.random.uniform(kv, (cout,), jnp.float32, 0.5, 1.5)
        scale = gamma / jnp.sqrt(var + BN_EPS)
        bias = beta + scale * (b - mean)
    else:
        scale = jnp.ones((cout,), jnp.float32)
        bias = b
    # Fold BN scale into the conv weight (per output channel) and flatten taps so
    # that W_flat[o, k*cin + c] = scale[o] * W[o, c, k]  (matches the stack layout).
    w_folded = w * scale[:, None, None]
    w_flat = jnp.transpose(w_folded, (0, 2, 1)).reshape(cout, K * cin)
    return w_flat, bias.reshape(cout, 1)


def init_decoder_params(key, feature_num, out_channels, res_num):
    keys = jax.random.split(key, 2 * res_num + 1)
    w_list, b_list = [], []
    for i in range(2 * res_num):
        w, b = init_conv_bn(keys[i], feature_num, feature_num, with_bn=True)
        w_list.append(w)
        b_list.append(b)
    w_res = jnp.stack(w_list)                    # [2*res_num, C, K*C]
    b_res = jnp.stack(b_list)                    # [2*res_num, C, 1]
    w_out, b_out = init_conv_bn(keys[-1], feature_num, out_channels, with_bn=False)
    return {"w_res": w_res, "b_res": b_res, "w_out": w_out, "b_out": b_out}


def decoder_forward(x, params):
    return decoder_pallas(x, params["w_res"], params["b_res"],
                          params["w_out"], params["b_out"])


# ----------------------------------------------------------------------------
# Pure-JAX reference (same folded math) used only for verification
# ----------------------------------------------------------------------------
def conv1d_ref(x, w_flat, bias):
    """x: [B, Cin, L], w_flat: [Cout, K*Cin] (tap-major), bias: [Cout, 1]."""
    cout = w_flat.shape[0]
    cin = x.shape[1]
    w = jnp.transpose(w_flat.reshape(cout, K, cin), (0, 2, 1))   # [Cout, Cin, K]
    y = jax.lax.conv_general_dilated(
        x, w, window_strides=(1,), padding=[(PAD, PAD)],
        dimension_numbers=("NCH", "OIH", "NCH"))
    return y + bias[None]                                        # bias applied here


def decoder_ref(x, params):
    w_res, b_res = params["w_res"], params["b_res"]
    res_num = w_res.shape[0] // 2
    for r in range(res_num):
        h = jnp.maximum(conv1d_ref(x, w_res[2 * r], b_res[2 * r]), 0.0)
        h = jnp.maximum(conv1d_ref(h, w_res[2 * r + 1], b_res[2 * r + 1]), 0.0)
        x = x + h
    return jax.nn.sigmoid(conv1d_ref(x, params["w_out"], params["b_out"]))


if __name__ == "__main__":
    B, FEATURE_NUM, OUT_CHANNELS, L, RES_NUM = 2, 32, 1, 128, 2

    key = jax.random.PRNGKey(0)
    kx, kp = jax.random.split(key)
    x = jax.random.normal(kx, (B, FEATURE_NUM, L), jnp.float32)   # [B, C, L]
    params = init_decoder_params(kp, FEATURE_NUM, OUT_CHANNELS, RES_NUM)

    out = decoder_forward(x, params)
    out = jax.block_until_ready(out)
    assert out.shape == (B, OUT_CHANNELS, L)

    ref = jax.block_until_ready(decoder_ref(x, params))
    assert jnp.allclose(out, ref, rtol=2e-3, atol=2e-3), "mismatch vs reference"

    print("KERNEL_OK")
</pallas_src>

<mosaic_0001>
module attributes {stable_mosaic.version = 11 : i64} {
  func.func @fused_decoder_kernel(%arg0: i32, %arg1: memref<32x256xf32, #tpu.memory_space<vmem>>, %arg2: memref<32x256xi32, #tpu.memory_space<vmem>>, %arg3: memref<4x32x352xf32, #tpu.memory_space<vmem>>, %arg4: memref<4x32x1xf32, #tpu.memory_space<vmem>>, %arg5: memref<1x352xf32, #tpu.memory_space<vmem>>, %arg6: memref<1x1xf32, #tpu.memory_space<vmem>>, %arg7: memref<1x256xf32, #tpu.memory_space<vmem>>, %arg8: memref<352x256xf32, #tpu.memory_space<vmem>>) attributes {dimension_semantics = [#tpu.dimension_semantics<arbitrary>], iteration_bounds = array<i64: 1>, scalar_prefetch = 0 : i64, scratch_operands = 1 : i64, tpu.core_type = #tpu.core_type<tc>, window_params = [{pipeline_mode = #tpu.pipeline_mode<synchronous>, transform_indices = @transform_0, window_bounds = array<i64: 32, 256>}, {pipeline_mode = #tpu.pipeline_mode<synchronous>, transform_indices = @transform_1, window_bounds = array<i64: 32, 256>}, {pipeline_mode = #tpu.pipeline_mode<synchronous>, transform_indices = @transform_2, window_bounds = array<i64: 4, 32, 352>}, {pipeline_mode = #tpu.pipeline_mode<synchronous>, transform_indices = @transform_3, window_bounds = array<i64: 4, 32, 1>}, {pipeline_mode = #tpu.pipeline_mode<synchronous>, transform_indices = @transform_4, window_bounds = array<i64: 1, 352>}, {pipeline_mode = #tpu.pipeline_mode<synchronous>, transform_indices = @transform_5, window_bounds = array<i64: 1, 1>}, {pipeline_mode = #tpu.pipeline_mode<synchronous>, transform_indices = @transform_6, window_bounds = array<i64: 1, 256>}]} {
    %c0 = arith.constant 0 : index
    %c0_0 = arith.constant 0 : index
    %0 = vector.load %arg2[%c0, %c0_0] : memref<32x256xi32, #tpu.memory_space<vmem>>, vector<32x256xi32>
    %c5_i32 = arith.constant 5 : i32
    %1 = vector.broadcast %c5_i32 : i32 to vector<32x256xi32>
    %2 = arith.cmpi sge, %0, %1 : vector<32x256xi32>
    %c4_i32 = arith.constant 4 : i32
    %3 = vector.broadcast %c4_i32 : i32 to vector<32x256xi32>
    %4 = arith.cmpi sge, %0, %3 : vector<32x256xi32>
    %c3_i32 = arith.constant 3 : i32
    %5 = vector.broadcast %c3_i32 : i32 to vector<32x256xi32>
    %6 = arith.cmpi sge, %0, %5 : vector<32x256xi32>
    %c2_i32 = arith.constant 2 : i32
    %7 = vector.broadcast %c2_i32 : i32 to vector<32x256xi32>
    %8 = arith.cmpi sge, %0, %7 : vector<32x256xi32>
    %c1_i32 = arith.constant 1 : i32
    %9 = vector.broadcast %c1_i32 : i32 to vector<32x256xi32>
    %10 = arith.cmpi sge, %0, %9 : vector<32x256xi32>
    %c127_i32 = arith.constant 127 : i32
    %11 = vector.broadcast %c127_i32 : i32 to vector<32x256xi32>
    %12 = arith.cmpi slt, %0, %11 : vector<32x256xi32>
    %c126_i32 = arith.constant 126 : i32
    %13 = vector.broadcast %c126_i32 : i32 to vector<32x256xi32>
    %14 = arith.cmpi slt, %0, %13 : vector<32x256xi32>
    %c125_i32 = arith.constant 125 : i32
    %15 = vector.broadcast %c125_i32 : i32 to vector<32x256xi32>
    %16 = arith.cmpi slt, %0, %15 : vector<32x256xi32>
    %c124_i32 = arith.constant 124 : i32
    %17 = vector.broadcast %c124_i32 : i32 to vector<32x256xi32>
    %18 = arith.cmpi slt, %0, %17 : vector<32x256xi32>
    %c123_i32 = arith.constant 123 : i32
    %19 = vector.broadcast %c123_i32 : i32 to vector<32x256xi32>
    %20 = arith.cmpi slt, %0, %19 : vector<32x256xi32>
    %c0_1 = arith.constant 0 : index
    %c0_2 = arith.constant 0 : index
    %21 = vector.load %arg1[%c0_1, %c0_2] : memref<32x256xf32, #tpu.memory_space<vmem>>, vector<32x256xf32>
    %c0_3 = arith.constant 0 : index
    %c0_4 = arith.constant 0 : index
    %c0_5 = arith.constant 0 : index
    %22 = vector.load %arg3[%c0_3, %c0_4, %c0_5] : memref<4x32x352xf32, #tpu.memory_space<vmem>>, vector<1x32x352xf32>
    %23 = vector.shape_cast %22 : vector<1x32x352xf32> to vector<32x352xf32>
    %c0_6 = arith.constant 0 : index
    %c0_7 = arith.constant 0 : index
    %c0_8 = arith.constant 0 : index
    %24 = vector.load %arg4[%c0_6, %c0_7, %c0_8] : memref<4x32x1xf32, #tpu.memory_space<vmem>>, vector<1x32x1xf32>
    %25 = vector.shape_cast %24 : vector<1x32x1xf32> to vector<32x1xf32>
    %c5_i32_9 = arith.constant 5 : i32
    %26 = tpu.dynamic_rotate %21 by %c5_i32_9 dim 1 : vector<32x256xf32>, i32 -> vector<32x256xf32>
    %cst = arith.constant 0.000000e+00 : f32
    %27 = vector.broadcast %cst : f32 to vector<32x256xf32>
    %28 = arith.select %2, %26, %27 : vector<32x256xi1>, vector<32x256xf32>
    %c0_10 = arith.constant 0 : index
    %c0_11 = arith.constant 0 : index
    %29 = vector.load %arg8[%c0_10, %c0_11] : memref<352x256xf32, #tpu.memory_space<vmem>>, vector<32x256xf32>
    tpu.vector_store %arg8[%c0_10, %c0_11], %28 {strides = array<i32>} : memref<352x256xf32, #tpu.memory_space<vmem>>, vector<32x256xf32>,
    %c4_i32_12 = arith.constant 4 : i32
    %30 = tpu.dynamic_rotate %21 by %c4_i32_12 dim 1 : vector<32x256xf32>, i32 -> vector<32x256xf32>
    %cst_13 = arith.constant 0.000000e+00 : f32
    %31 = vector.broadcast %cst_13 : f32 to vector<32x256xf32>
    %32 = arith.select %4, %30, %31 : vector<32x256xi1>, vector<32x256xf32>
    %c32 = arith.constant 32 : index
    %c0_14 = arith.constant 0 : index
    %33 = vector.load %arg8[%c32, %c0_14] : memref<352x256xf32, #tpu.memory_space<vmem>>, vector<32x256xf32>
    tpu.vector_store %arg8[%c32, %c0_14], %32 {strides = array<i32>} : memref<352x256xf32, #tpu.memory_space<vmem>>, vector<32x256xf32>,
    %c3_i32_15 = arith.constant 3 : i32
    %34 = tpu.dynamic_rotate %21 by %c3_i32_15 dim 1 : vector<32x256xf32>, i32 -> vector<32x256xf32>
    %cst_16 = arith.constant 0.000000e+00 : f32
    %35 = vector.broadcast %cst_16 : f32 to vector<32x256xf32>
    %36 = arith.select %6, %34, %35 : vector<32x256xi1>, vector<32x256xf32>
    %c64 = arith.constant 64 : index
    %c0_17 = arith.constant 0 : index
    %37 = vector.load %arg8[%c64, %c0_17] : memref<352x256xf32, #tpu.memory_space<vmem>>, vector<32x256xf32>
    tpu.vector_store %arg8[%c64, %c0_17], %36 {strides = array<i32>} : memref<352x256xf32, #tpu.memory_space<vmem>>, vector<32x256xf32>,
    %c2_i32_18 = arith.constant 2 : i32
    %38 = tpu.dynamic_rotate %21 by %c2_i32_18 dim 1 : vector<32x256xf32>, i32 -> vector<32x256xf32>
    %cst_19 = arith.constant 0.000000e+00 : f32
    %39 = vector.broadcast %cst_19 : f32 to vector<32x256xf32>
    %40 = arith.select %8, %38, %39 : vector<32x256xi1>, vector<32x256xf32>
    %c96 = arith.constant 96 : index
    %c0_20 = arith.constant 0 : index
    %41 = vector.load %arg8[%c96, %c0_20] : memref<352x256xf32, #tpu.memory_space<vmem>>, vector<32x256xf32>
    tpu.vector_store %arg8[%c96, %c0_20], %40 {strides = array<i32>} : memref<352x256xf32, #tpu.memory_space<vmem>>, vector<32x256xf32>,
    %c1_i32_21 = arith.constant 1 : i32
    %42 = tpu.dynamic_rotate %21 by %c1_i32_21 dim 1 : vector<32x256xf32>, i32 -> vector<32x256xf32>
    %cst_22 = arith.constant 0.000000e+00 : f32
    %43 = vector.broadcast %cst_22 : f32 to vector<32x256xf32>
    %44 = arith.select %10, %42, %43 : vector<32x256xi1>, vector<32x256xf32>
    %c128 = arith.constant 128 : index
    %c0_23 = arith.constant 0 : index
    %45 = vector.load %arg8[%c128, %c0_23] : memref<352x256xf32, #tpu.memory_space<vmem>>, vector<32x256xf32>
    tpu.vector_store %arg8[%c128, %c0_23], %44 {strides = array<i32>} : memref<352x256xf32, #tpu.memory_space<vmem>>, vector<32x256xf32>,
    %c160 = arith.constant 160 : index
    %c0_24 = arith.constant 0 : index
    %46 = vector.load %arg8[%c160, %c0_24] : memref<352x256xf32, #tpu.memory_space<vmem>>, vector<32x256xf32>
    tpu.vector_store %arg8[%c160, %c0_24], %21 {strides = array<i32>} : memref<352x256xf32, #tpu.memory_space<vmem>>, vector<32x256xf32>,
    %c255_i32 = arith.constant 255 : i32
    %47 = tpu.dynamic_rotate %21 by %c255_i32 dim 1 : vector<32x256xf32>, i32 -> vector<32x256xf32>
    %cst_25 = arith.constant 0.000000e+00 : f32
    %48 = vector.broadcast %cst_25 : f32 to vector<32x256xf32>
    %49 = arith.select %12, %47, %48 : vector<32x256xi1>, vector<32x256xf32>
    %c192 = arith.constant 192 : index
    %c0_26 = arith.constant 0 : index
    %50 = vector.load %arg8[%c192, %c0_26] : memref<352x256xf32, #tpu.memory_space<vmem>>, vector<32x256xf32>
    tpu.vector_store %arg8[%c192, %c0_26], %49 {strides = array<i32>} : memref<352x256xf32, #tpu.memory_space<vmem>>, vector<32x256xf32>,
    %c254_i32 = arith.constant 254 : i32
    %51 = tpu.dynamic_rotate %21 by %c254_i32 dim 1 : vector<32x256xf32>, i32 -> vector<32x256xf32>
    %cst_27 = arith.constant 0.000000e+00 : f32
    %52 = vector.broadcast %cst_27 : f32 to vector<32x256xf32>
    %53 = arith.select %14, %51, %52 : vector<32x256xi1>, vector<32x256xf32>
    %c224 = arith.constant 224 : index
    %c0_28 = arith.constant 0 : index
    %54 = vector.load %arg8[%c224, %c0_28] : memref<352x256xf32, #tpu.memory_space<vmem>>, vector<32x256xf32>
    tpu.vector_store %arg8[%c224, %c0_28], %53 {strides = array<i32>} : memref<352x256xf32, #tpu.memory_space<vmem>>, vector<32x256xf32>,
    %c253_i32 = arith.constant 253 : i32
    %55 = tpu.dynamic_rotate %21 by %c253_i32 dim 1 : vector<32x256xf32>, i32 -> vector<32x256xf32>
    %cst_29 = arith.constant 0.000000e+00 : f32
    %56 = vector.broadcast %cst_29 : f32 to vector<32x256xf32>
    %57 = arith.select %16, %55, %56 : vector<32x256xi1>, vector<32x256xf32>
    %c256 = arith.constant 256 : index
    %c0_30 = arith.constant 0 : index
    %58 = vector.load %arg8[%c256, %c0_30] : memref<352x256xf32, #tpu.memory_space<vmem>>, vector<32x256xf32>
    tpu.vector_store %arg8[%c256, %c0_30], %57 {strides = array<i32>} : memref<352x256xf32, #tpu.memory_space<vmem>>, vector<32x256xf32>,
    %c252_i32 = arith.constant 252 : i32
    %59 = tpu.dynamic_rotate %21 by %c252_i32 dim 1 : vector<32x256xf32>, i32 -> vector<32x256xf32>
    %cst_31 = arith.constant 0.000000e+00 : f32
    %60 = vector.broadcast %cst_31 : f32 to vector<32x256xf32>
    %61 = arith.select %18, %59, %60 : vector<32x256xi1>, vector<32x256xf32>
    %c288 = arith.constant 288 : index
    %c0_32 = arith.constant 0 : index
    %62 = vector.load %arg8[%c288, %c0_32] : memref<352x256xf32, #tpu.memory_space<vmem>>, vector<32x256xf32>
    tpu.vector_store %arg8[%c288, %c0_32], %61 {strides = array<i32>} : memref<352x256xf32, #tpu.memory_space<vmem>>, vector<32x256xf32>,
    %c251_i32 = arith.constant 251 : i32
    %63 = tpu.dynamic_rotate %21 by %c251_i32 dim 1 : vector<32x256xf32>, i32 -> vector<32x256xf32>
    %cst_33 = arith.constant 0.000000e+00 : f32
    %64 = vector.broadcast %cst_33 : f32 to vector<32x256xf32>
    %65 = arith.select %20, %63, %64 : vector<32x256xi1>, vector<32x256xf32>
    %c320 = arith.constant 320 : index
    %c0_34 = arith.constant 0 : index
    %66 = vector.load %arg8[%c320, %c0_34] : memref<352x256xf32, #tpu.memory_space<vmem>>, vector<32x256xf32>
    tpu.vector_store %arg8[%c320, %c0_34], %65 {strides = array<i32>} : memref<352x256xf32, #tpu.memory_space<vmem>>, vector<32x256xf32>,
    %c0_35 = arith.constant 0 : index
    %c0_36 = arith.constant 0 : index
    %67 = vector.load %arg8[%c0_35, %c0_36] : memref<352x256xf32, #tpu.memory_space<vmem>>, vector<352x256xf32>
    %cst_37 = arith.constant dense<0.000000e+00> : vector<32x256xf32>
    %68 = tpu.matmul %23, %67, %cst_37 {dimension_numbers = #tpu.dot_dimension_numbers<[1], [0], [0], [1], [0, 0, 1, 1], [], []>} : vector<32x352xf32>, vector<352x256xf32>, vector<32x256xf32> -> vector<32x256xf32>
    %69 = vector.broadcast %25 : vector<32x1xf32> to vector<32x256xf32>
    %70 = arith.addf %68, %69 : vector<32x256xf32>
    %cst_38 = arith.constant 0.000000e+00 : f32
    %71 = vector.broadcast %cst_38 : f32 to vector<32x256xf32>
    %72 = arith.maximumf %70, %71 : vector<32x256xf32>
    %c1 = arith.constant 1 : index
    %c0_39 = arith.constant 0 : index
    %c0_40 = arith.constant 0 : index
    %73 = vector.load %arg3[%c1, %c0_39, %c0_40] : memref<4x32x352xf32, #tpu.memory_space<vmem>>, vector<1x32x352xf32>
    %74 = vector.shape_cast %73 : vector<1x32x352xf32> to vector<32x352xf32>
    %c1_41 = arith.constant 1 : index
    %c0_42 = arith.constant 0 : index
    %c0_43 = arith.constant 0 : index
    %75 = vector.load %arg4[%c1_41, %c0_42, %c0_43] : memref<4x32x1xf32, #tpu.memory_space<vmem>>, vector<1x32x1xf32>
    %76 = vector.shape_cast %75 : vector<1x32x1xf32> to vector<32x1xf32>
    %c5_i32_44 = arith.constant 5 : i32
    %77 = tpu.dynamic_rotate %72 by %c5_i32_44 dim 1 : vector<32x256xf32>, i32 -> vector<32x256xf32>
    %cst_45 = arith.constant 0.000000e+00 : f32
    %78 = vector.broadcast %cst_45 : f32 to vector<32x256xf32>
    %79 = arith.select %2, %77, %78 : vector<32x256xi1>, vector<32x256xf32>
    %c0_46 = arith.constant 0 : index
    %c0_47 = arith.constant 0 : index
    %80 = vector.load %arg8[%c0_46, %c0_47] : memref<352x256xf32, #tpu.memory_space<vmem>>, vector<32x256xf32>
    tpu.vector_store %arg8[%c0_46, %c0_47], %79 {strides = array<i32>} : memref<352x256xf32, #tpu.memory_space<vmem>>, vector<32x256xf32>,
    %c4_i32_48 = arith.constant 4 : i32
    %81 = tpu.dynamic_rotate %72 by %c4_i32_48 dim 1 : vector<32x256xf32>, i32 -> vector<32x256xf32>
    %cst_49 = arith.constant 0.000000e+00 : f32
    %82 = vector.broadcast %cst_49 : f32 to vector<32x256xf32>
    %83 = arith.select %4, %81, %82 : vector<32x256xi1>, vector<32x256xf32>
    %c32_50 = arith.constant 32 : index
    %c0_51 = arith.constant 0 : index
    %84 = vector.load %arg8[%c32_50, %c0_51] : memref<352x256xf32, #tpu.memory_space<vmem>>, vector<32x256xf32>
    tpu.vector_store %arg8[%c32_50, %c0_51], %83 {strides = array<i32>} : memref<352x256xf32, #tpu.memory_space<vmem>>, vector<32x256xf32>,
    %c3_i32_52 = arith.constant 3 : i32
    %85 = tpu.dynamic_rotate %72 by %c3_i32_52 dim 1 : vector<32x256xf32>, i32 -> vector<32x256xf32>
    %cst_53 = arith.constant 0.000000e+00 : f32
    %86 = vector.broadcast %cst_53 : f32 to vector<32x256xf32>
    %87 = arith.select %6, %85, %86 : vector<32x256xi1>, vector<32x256xf32>
    %c64_54 = arith.constant 64 : index
    %c0_55 = arith.constant 0 : index
    %88 = vector.load %arg8[%c64_54, %c0_55] : memref<352x256xf32, #tpu.memory_space<vmem>>, vector<32x256xf32>
    tpu.vector_store %arg8[%c64_54, %c0_55], %87 {strides = array<i32>} : memref<352x256xf32, #tpu.memory_space<vmem>>, vector<32x256xf32>,
    %c2_i32_56 = arith.constant 2 : i32
    %89 = tpu.dynamic_rotate %72 by %c2_i32_56 dim 1 : vector<32x256xf32>, i32 -> vector<32x256xf32>
    %cst_57 = arith.constant 0.000000e+00 : f32
    %90 = vector.broadcast %cst_57 : f32 to vector<32x256xf32>
    %91 = arith.select %8, %89, %90 : vector<32x256xi1>, vector<32x256xf32>
    %c96_58 = arith.constant 96 : index
    %c0_59 = arith.constant 0 : index
    %92 = vector.load %arg8[%c96_58, %c0_59] : memref<352x256xf32, #tpu.memory_space<vmem>>, vector<32x256xf32>
    tpu.vector_store %arg8[%c96_58, %c0_59], %91 {strides = array<i32>} : memref<352x256xf32, #tpu.memory_space<vmem>>, vector<32x256xf32>,
    %c1_i32_60 = arith.constant 1 : i32
    %93 = tpu.dynamic_rotate %72 by %c1_i32_60 dim 1 : vector<32x256xf32>, i32 -> vector<32x256xf32>
    %cst_61 = arith.constant 0.000000e+00 : f32
    %94 = vector.broadcast %cst_61 : f32 to vector<32x256xf32>
    %95 = arith.select %10, %93, %94 : vector<32x256xi1>, vector<32x256xf32>
    %c128_62 = arith.constant 128 : index
    %c0_63 = arith.constant 0 : index
    %96 = vector.load %arg8[%c128_62, %c0_63] : memref<352x256xf32, #tpu.memory_space<vmem>>, vector<32x256xf32>
    tpu.vector_store %arg8[%c128_62, %c0_63], %95 {strides = array<i32>} : memref<352x256xf32, #tpu.memory_space<vmem>>, vector<32x256xf32>,
    %c160_64 = arith.constant 160 : index
    %c0_65 = arith.constant 0 : index
    %97 = vector.load %arg8[%c160_64, %c0_65] : memref<352x256xf32, #tpu.memory_space<vmem>>, vector<32x256xf32>
    tpu.vector_store %arg8[%c160_64, %c0_65], %72 {strides = array<i32>} : memref<352x256xf32, #tpu.memory_space<vmem>>, vector<32x256xf32>,
    %c255_i32_66 = arith.constant 255 : i32
    %98 = tpu.dynamic_rotate %72 by %c255_i32_66 dim 1 : vector<32x256xf32>, i32 -> vector<32x256xf32>
    %cst_67 = arith.constant 0.000000e+00 : f32
    %99 = vector.broadcast %cst_67 : f32 to vector<32x256xf32>
    %100 = arith.select %12, %98, %99 : vector<32x256xi1>, vector<32x256xf32>
    %c192_68 = arith.constant 192 : index
    %c0_69 = arith.constant 0 : index
    %101 = vector.load %arg8[%c192_68, %c0_69] : memref<352x256xf32, #tpu.memory_space<vmem>>, vector<32x256xf32>
    tpu.vector_store %arg8[%c192_68, %c0_69], %100 {strides = array<i32>} : memref<352x256xf32, #tpu.memory_space<vmem>>, vector<32x256xf32>,
    %c254_i32_70 = arith.constant 254 : i32
    %102 = tpu.dynamic_rotate %72 by %c254_i32_70 dim 1 : vector<32x256xf32>, i32 -> vector<32x256xf32>
    %cst_71 = arith.constant 0.000000e+00 : f32
    %103 = vector.broadcast %cst_71 : f32 to vector<32x256xf32>
    %104 = arith.select %14, %102, %103 : vector<32x256xi1>, vector<32x256xf32>
    %c224_72 = arith.constant 224 : index
    %c0_73 = arith.constant 0 : index
    %105 = vector.load %arg8[%c224_72, %c0_73] : memref<352x256xf32, #tpu.memory_space<vmem>>, vector<32x256xf32>
    tpu.vector_store %arg8[%c224_72, %c0_73], %104 {strides = array<i32>} : memref<352x256xf32, #tpu.memory_space<vmem>>, vector<32x256xf32>,
    %c253_i32_74 = arith.constant 253 : i32
    %106 = tpu.dynamic_rotate %72 by %c253_i32_74 dim 1 : vector<32x256xf32>, i32 -> vector<32x256xf32>
    %cst_75 = arith.constant 0.000000e+00 : f32
    %107 = vector.broadcast %cst_75 : f32 to vector<32x256xf32>
    %108 = arith.select %16, %106, %107 : vector<32x256xi1>, vector<32x256xf32>
    %c256_76 = arith.constant 256 : index
    %c0_77 = arith.constant 0 : index
    %109 = vector.load %arg8[%c256_76, %c0_77] : memref<352x256xf32, #tpu.memory_space<vmem>>, vector<32x256xf32>
    tpu.vector_store %arg8[%c256_76, %c0_77], %108 {strides = array<i32>} : memref<352x256xf32, #tpu.memory_space<vmem>>, vector<32x256xf32>,
    %c252_i32_78 = arith.constant 252 : i32
    %110 = tpu.dynamic_rotate %72 by %c252_i32_78 dim 1 : vector<32x256xf32>, i32 -> vector<32x256xf32>
    %cst_79 = arith.constant 0.000000e+00 : f32
    %111 = vector.broadcast %cst_79 : f32 to vector<32x256xf32>
    %112 = arith.select %18, %110, %111 : vector<32x256xi1>, vector<32x256xf32>
    %c288_80 = arith.constant 288 : index
    %c0_81 = arith.constant 0 : index
    %113 = vector.load %arg8[%c288_80, %c0_81] : memref<352x256xf32, #tpu.memory_space<vmem>>, vector<32x256xf32>
    tpu.vector_store %arg8[%c288_80, %c0_81], %112 {strides = array<i32>} : memref<352x256xf32, #tpu.memory_space<vmem>>, vector<32x256xf32>,
    %c251_i32_82 = arith.constant 251 : i32
    %114 = tpu.dynamic_rotate %72 by %c251_i32_82 dim 1 : vector<32x256xf32>, i32 -> vector<32x256xf32>
    %cst_83 = arith.constant 0.000000e+00 : f32
    %115 = vector.broadcast %cst_83 : f32 to vector<32x256xf32>
    %116 = arith.select %20, %114, %115 : vector<32x256xi1>, vector<32x256xf32>
    %c320_84 = arith.constant 320 : index
    %c0_85 = arith.constant 0 : index
    %117 = vector.load %arg8[%c320_84, %c0_85] : memref<352x256xf32, #tpu.memory_space<vmem>>, vector<32x256xf32>
    tpu.vector_store %arg8[%c320_84, %c0_85], %116 {strides = array<i32>} : memref<352x256xf32, #tpu.memory_space<vmem>>, vector<32x256xf32>,
    %c0_86 = arith.constant 0 : index
    %c0_87 = arith.constant 0 : index
    %118 = vector.load %arg8[%c0_86, %c0_87] : memref<352x256xf32, #tpu.memory_space<vmem>>, vector<352x256xf32>
    %cst_88 = arith.constant dense<0.000000e+00> : vector<32x256xf32>
    %119 = tpu.matmul %74, %118, %cst_88 {dimension_numbers = #tpu.dot_dimension_numbers<[1], [0], [0], [1], [0, 0, 1, 1], [], []>} : vector<32x352xf32>, vector<352x256xf32>, vector<32x256xf32> -> vector<32x256xf32>
    %120 = vector.broadcast %76 : vector<32x1xf32> to vector<32x256xf32>
    %121 = arith.addf %119, %120 : vector<32x256xf32>
    %cst_89 = arith.constant 0.000000e+00 : f32
    %122 = vector.broadcast %cst_89 : f32 to vector<32x256xf32>
    %123 = arith.maximumf %121, %122 : vector<32x256xf32>
    %124 = arith.addf %21, %123 : vector<32x256xf32>
    %c2 = arith.constant 2 : index
    %c0_90 = arith.constant 0 : index
    %c0_91 = arith.constant 0 : index
    %125 = vector.load %arg3[%c2, %c0_90, %c0_91] : memref<4x32x352xf32, #tpu.memory_space<vmem>>, vector<1x32x352xf32>
    %126 = vector.shape_cast %125 : vector<1x32x352xf32> to vector<32x352xf32>
    %c2_92 = arith.constant 2 : index
    %c0_93 = arith.constant 0 : index
    %c0_94 = arith.constant 0 : index
    %127 = vector.load %arg4[%c2_92, %c0_93, %c0_94] : memref<4x32x1xf32, #tpu.memory_space<vmem>>, vector<1x32x1xf32>
    %128 = vector.shape_cast %127 : vector<1x32x1xf32> to vector<32x1xf32>
    %c5_i32_95 = arith.constant 5 : i32
    %129 = tpu.dynamic_rotate %124 by %c5_i32_95 dim 1 : vector<32x256xf32>, i32 -> vector<32x256xf32>
    %cst_96 = arith.constant 0.000000e+00 : f32
    %130 = vector.broadcast %cst_96 : f32 to vector<32x256xf32>
    %131 = arith.select %2, %129, %130 : vector<32x256xi1>, vector<32x256xf32>
    %c0_97 = arith.constant 0 : index
    %c0_98 = arith.constant 0 : index
    %132 = vector.load %arg8[%c0_97, %c0_98] : memref<352x256xf32, #tpu.memory_space<vmem>>, vector<32x256xf32>
    tpu.vector_store %arg8[%c0_97, %c0_98], %131 {strides = array<i32>} : memref<352x256xf32, #tpu.memory_space<vmem>>, vector<32x256xf32>,
    %c4_i32_99 = arith.constant 4 : i32
    %133 = tpu.dynamic_rotate %124 by %c4_i32_99 dim 1 : vector<32x256xf32>, i32 -> vector<32x256xf32>
    %cst_100 = arith.constant 0.000000e+00 : f32
    %134 = vector.broadcast %cst_100 : f32 to vector<32x256xf32>
    %135 = arith.select %4, %133, %134 : vector<32x256xi1>, vector<32x256xf32>
    %c32_101 = arith.constant 32 : index
    %c0_102 = arith.constant 0 : index
    %136 = vector.load %arg8[%c32_101, %c0_102] : memref<352x256xf32, #tpu.memory_space<vmem>>, vector<32x256xf32>
    tpu.vector_store %arg8[%c32_101, %c0_102], %135 {strides = array<i32>} : memref<352x256xf32, #tpu.memory_space<vmem>>, vector<32x256xf32>,
    %c3_i32_103 = arith.constant 3 : i32
    %137 = tpu.dynamic_rotate %124 by %c3_i32_103 dim 1 : vector<32x256xf32>, i32 -> vector<32x256xf32>
    %cst_104 = arith.constant 0.000000e+00 : f32
    %138 = vector.broadcast %cst_104 : f32 to vector<32x256xf32>
    %139 = arith.select %6, %137, %138 : vector<32x256xi1>, vector<32x256xf32>
    %c64_105 = arith.constant 64 : index
    %c0_106 = arith.constant 0 : index
    %140 = vector.load %arg8[%c64_105, %c0_106] : memref<352x256xf32, #tpu.memory_space<vmem>>, vector<32x256xf32>
    tpu.vector_store %arg8[%c64_105, %c0_106], %139 {strides = array<i32>} : memref<352x256xf32, #tpu.memory_space<vmem>>, vector<32x256xf32>,
    %c2_i32_107 = arith.constant 2 : i32
    %141 = tpu.dynamic_rotate %124 by %c2_i32_107 dim 1 : vector<32x256xf32>, i32 -> vector<32x256xf32>
    %cst_108 = arith.constant 0.000000e+00 : f32
    %142 = vector.broadcast %cst_108 : f32 to vector<32x256xf32>
    %143 = arith.select %8, %141, %142 : vector<32x256xi1>, vector<32x256xf32>
    %c96_109 = arith.constant 96 : index
    %c0_110 = arith.constant 0 : index
    %144 = vector.load %arg8[%c96_109, %c0_110] : memref<352x256xf32, #tpu.memory_space<vmem>>, vector<32x256xf32>
    tpu.vector_store %arg8[%c96_109, %c0_110], %143 {strides = array<i32>} : memref<352x256xf32, #tpu.memory_space<vmem>>, vector<32x256xf32>,
    %c1_i32_111 = arith.constant 1 : i32
    %145 = tpu.dynamic_rotate %124 by %c1_i32_111 dim 1 : vector<32x256xf32>, i32 -> vector<32x256xf32>
    %cst_112 = arith.constant 0.000000e+00 : f32
    %146 = vector.broadcast %cst_112 : f32 to vector<32x256xf32>
    %147 = arith.select %10, %145, %146 : vector<32x256xi1>, vector<32x256xf32>
    %c128_113 = arith.constant 128 : index
    %c0_114 = arith.constant 0 : index
    %148 = vector.load %arg8[%c128_113, %c0_114] : memref<352x256xf32, #tpu.memory_space<vmem>>, vector<32x256xf32>
    tpu.vector_store %arg8[%c128_113, %c0_114], %147 {strides = array<i32>} : memref<352x256xf32, #tpu.memory_space<vmem>>, vector<32x256xf32>,
    %c160_115 = arith.constant 160 : index
    %c0_116 = arith.constant 0 : index
    %149 = vector.load %arg8[%c160_115, %c0_116] : memref<352x256xf32, #tpu.memory_space<vmem>>, vector<32x256xf32>
    tpu.vector_store %arg8[%c160_115, %c0_116], %124 {strides = array<i32>} : memref<352x256xf32, #tpu.memory_space<vmem>>, vector<32x256xf32>,
    %c255_i32_117 = arith.constant 255 : i32
    %150 = tpu.dynamic_rotate %124 by %c255_i32_117 dim 1 : vector<32x256xf32>, i32 -> vector<32x256xf32>
    %cst_118 = arith.constant 0.000000e+00 : f32
    %151 = vector.broadcast %cst_118 : f32 to vector<32x256xf32>
    %152 = arith.select %12, %150, %151 : vector<32x256xi1>, vector<32x256xf32>
    %c192_119 = arith.constant 192 : index
    %c0_120 = arith.constant 0 : index
    %153 = vector.load %arg8[%c192_119, %c0_120] : memref<352x256xf32, #tpu.memory_space<vmem>>, vector<32x256xf32>
    tpu.vector_store %arg8[%c192_119, %c0_120], %152 {strides = array<i32>} : memref<352x256xf32, #tpu.memory_space<vmem>>, vector<32x256xf32>,
    %c254_i32_121 = arith.constant 254 : i32
    %154 = tpu.dynamic_rotate %124 by %c254_i32_121 dim 1 : vector<32x256xf32>, i32 -> vector<32x256xf32>
    %cst_122 = arith.constant 0.000000e+00 : f32
    %155 = vector.broadcast %cst_122 : f32 to vector<32x256xf32>
    %156 = arith.select %14, %154, %155 : vector<32x256xi1>, vector<32x256xf32>
    %c224_123 = arith.constant 224 : index
    %c0_124 = arith.constant 0 : index
    %157 = vector.load %arg8[%c224_123, %c0_124] : memref<352x256xf32, #tpu.memory_space<vmem>>, vector<32x256xf32>
    tpu.vector_store %arg8[%c224_123, %c0_124], %156 {strides = array<i32>} : memref<352x256xf32, #tpu.memory_space<vmem>>, vector<32x256xf32>,
    %c253_i32_125 = arith.constant 253 : i32
    %158 = tpu.dynamic_rotate %124 by %c253_i32_125 dim 1 : vector<32x256xf32>, i32 -> vector<32x256xf32>
    %cst_126 = arith.constant 0.000000e+00 : f32
    %159 = vector.broadcast %cst_126 : f32 to vector<32x256xf32>
    %160 = arith.select %16, %158, %159 : vector<32x256xi1>, vector<32x256xf32>
    %c256_127 = arith.constant 256 : index
    %c0_128 = arith.constant 0 : index
    %161 = vector.load %arg8[%c256_127, %c0_128] : memref<352x256xf32, #tpu.memory_space<vmem>>, vector<32x256xf32>
    tpu.vector_store %arg8[%c256_127, %c0_128], %160 {strides = array<i32>} : memref<352x256xf32, #tpu.memory_space<vmem>>, vector<32x256xf32>,
    %c252_i32_129 = arith.constant 252 : i32
    %162 = tpu.dynamic_rotate %124 by %c252_i32_129 dim 1 : vector<32x256xf32>, i32 -> vector<32x256xf32>
    %cst_130 = arith.constant 0.000000e+00 : f32
    %163 = vector.broadcast %cst_130 : f32 to vector<32x256xf32>
    %164 = arith.select %18, %162, %163 : vector<32x256xi1>, vector<32x256xf32>
    %c288_131 = arith.constant 288 : index
    %c0_132 = arith.constant 0 : index
    %165 = vector.load %arg8[%c288_131, %c0_132] : memref<352x256xf32, #tpu.memory_space<vmem>>, vector<32x256xf32>
    tpu.vector_store %arg8[%c288_131, %c0_132], %164 {strides = array<i32>} : memref<352x256xf32, #tpu.memory_space<vmem>>, vector<32x256xf32>,
    %c251_i32_133 = arith.constant 251 : i32
    %166 = tpu.dynamic_rotate %124 by %c251_i32_133 dim 1 : vector<32x256xf32>, i32 -> vector<32x256xf32>
    %cst_134 = arith.constant 0.000000e+00 : f32
    %167 = vector.broadcast %cst_134 : f32 to vector<32x256xf32>
    %168 = arith.select %20, %166, %167 : vector<32x256xi1>, vector<32x256xf32>
    %c320_135 = arith.constant 320 : index
    %c0_136 = arith.constant 0 : index
    %169 = vector.load %arg8[%c320_135, %c0_136] : memref<352x256xf32, #tpu.memory_space<vmem>>, vector<32x256xf32>
    tpu.vector_store %arg8[%c320_135, %c0_136], %168 {strides = array<i32>} : memref<352x256xf32, #tpu.memory_space<vmem>>, vector<32x256xf32>,
    %c0_137 = arith.constant 0 : index
    %c0_138 = arith.constant 0 : index
    %170 = vector.load %arg8[%c0_137, %c0_138] : memref<352x256xf32, #tpu.memory_space<vmem>>, vector<352x256xf32>
    %cst_139 = arith.constant dense<0.000000e+00> : vector<32x256xf32>
    %171 = tpu.matmul %126, %170, %cst_139 {dimension_numbers = #tpu.dot_dimension_numbers<[1], [0], [0], [1], [0, 0, 1, 1], [], []>} : vector<32x352xf32>, vector<352x256xf32>, vector<32x256xf32> -> vector<32x256xf32>
    %172 = vector.broadcast %128 : vector<32x1xf32> to vector<32x256xf32>
    %173 = arith.addf %171, %172 : vector<32x256xf32>
    %cst_140 = arith.constant 0.000000e+00 : f32
    %174 = vector.broadcast %cst_140 : f32 to vector<32x256xf32>
    %175 = arith.maximumf %173, %174 : vector<32x256xf32>
    %c3 = arith.constant 3 : index
    %c0_141 = arith.constant 0 : index
    %c0_142 = arith.constant 0 : index
    %176 = vector.load %arg3[%c3, %c0_141, %c0_142] : memref<4x32x352xf32, #tpu.memory_space<vmem>>, vector<1x32x352xf32>
    %177 = vector.shape_cast %176 : vector<1x32x352xf32> to vector<32x352xf32>
    %c3_143 = arith.constant 3 : index
    %c0_144 = arith.constant 0 : index
    %c0_145 = arith.constant 0 : index
    %178 = vector.load %arg4[%c3_143, %c0_144, %c0_145] : memref<4x32x1xf32, #tpu.memory_space<vmem>>, vector<1x32x1xf32>
    %179 = vector.shape_cast %178 : vector<1x32x1xf32> to vector<32x1xf32>
    %c5_i32_146 = arith.constant 5 : i32
    %180 = tpu.dynamic_rotate %175 by %c5_i32_146 dim 1 : vector<32x256xf32>, i32 -> vector<32x256xf32>
    %cst_147 = arith.constant 0.000000e+00 : f32
    %181 = vector.broadcast %cst_147 : f32 to vector<32x256xf32>
    %182 = arith.select %2, %180, %181 : vector<32x256xi1>, vector<32x256xf32>
    %c0_148 = arith.constant 0 : index
    %c0_149 = arith.constant 0 : index
    %183 = vector.load %arg8[%c0_148, %c0_149] : memref<352x256xf32, #tpu.memory_space<vmem>>, vector<32x256xf32>
    tpu.vector_store %arg8[%c0_148, %c0_149], %182 {strides = array<i32>} : memref<352x256xf32, #tpu.memory_space<vmem>>, vector<32x256xf32>,
    %c4_i32_150 = arith.constant 4 : i32
    %184 = tpu.dynamic_rotate %175 by %c4_i32_150 dim 1 : vector<32x256xf32>, i32 -> vector<32x256xf32>
    %cst_151 = arith.constant 0.000000e+00 : f32
    %185 = vector.broadcast %cst_151 : f32 to vector<32x256xf32>
    %186 = arith.select %4, %184, %185 : vector<32x256xi1>, vector<32x256xf32>
    %c32_152 = arith.constant 32 : index
    %c0_153 = arith.constant 0 : index
    %187 = vector.load %arg8[%c32_152, %c0_153] : memref<352x256xf32, #tpu.memory_space<vmem>>, vector<32x256xf32>
    tpu.vector_store %arg8[%c32_152, %c0_153], %186 {strides = array<i32>} : memref<352x256xf32, #tpu.memory_space<vmem>>, vector<32x256xf32>,
    %c3_i32_154 = arith.constant 3 : i32
    %188 = tpu.dynamic_rotate %175 by %c3_i32_154 dim 1 : vector<32x256xf32>, i32 -> vector<32x256xf32>
    %cst_155 = arith.constant 0.000000e+00 : f32
    %189 = vector.broadcast %cst_155 : f32 to vector<32x256xf32>
    %190 = arith.select %6, %188, %189 : vector<32x256xi1>, vector<32x256xf32>
    %c64_156 = arith.constant 64 : index
    %c0_157 = arith.constant 0 : index
    %191 = vector.load %arg8[%c64_156, %c0_157] : memref<352x256xf32, #tpu.memory_space<vmem>>, vector<32x256xf32>
    tpu.vector_store %arg8[%c64_156, %c0_157], %190 {strides = array<i32>} : memref<352x256xf32, #tpu.memory_space<vmem>>, vector<32x256xf32>,
    %c2_i32_158 = arith.constant 2 : i32
    %192 = tpu.dynamic_rotate %175 by %c2_i32_158 dim 1 : vector<32x256xf32>, i32 -> vector<32x256xf32>
    %cst_159 = arith.constant 0.000000e+00 : f32
    %193 = vector.broadcast %cst_159 : f32 to vector<32x256xf32>
    %194 = arith.select %8, %192, %193 : vector<32x256xi1>, vector<32x256xf32>
    %c96_160 = arith.constant 96 : index
    %c0_161 = arith.constant 0 : index
    %195 = vector.load %arg8[%c96_160, %c0_161] : memref<352x256xf32, #tpu.memory_space<vmem>>, vector<32x256xf32>
    tpu.vector_store %arg8[%c96_160, %c0_161], %194 {strides = array<i32>} : memref<352x256xf32, #tpu.memory_space<vmem>>, vector<32x256xf32>,
    %c1_i32_162 = arith.constant 1 : i32
    %196 = tpu.dynamic_rotate %175 by %c1_i32_162 dim 1 : vector<32x256xf32>, i32 -> vector<32x256xf32>
    %cst_163 = arith.constant 0.000000e+00 : f32
    %197 = vector.broadcast %cst_163 : f32 to vector<32x256xf32>
    %198 = arith.select %10, %196, %197 : vector<32x256xi1>, vector<32x256xf32>
    %c128_164 = arith.constant 128 : index
    %c0_165 = arith.constant 0 : index
    %199 = vector.load %arg8[%c128_164, %c0_165] : memref<352x256xf32, #tpu.memory_space<vmem>>, vector<32x256xf32>
    tpu.vector_store %arg8[%c128_164, %c0_165], %198 {strides = array<i32>} : memref<352x256xf32, #tpu.memory_space<vmem>>, vector<32x256xf32>,
    %c160_166 = arith.constant 160 : index
    %c0_167 = arith.constant 0 : index
    %200 = vector.load %arg8[%c160_166, %c0_167] : memref<352x256xf32, #tpu.memory_space<vmem>>, vector<32x256xf32>
    tpu.vector_store %arg8[%c160_166, %c0_167], %175 {strides = array<i32>} : memref<352x256xf32, #tpu.memory_space<vmem>>, vector<32x256xf32>,
    %c255_i32_168 = arith.constant 255 : i32
    %201 = tpu.dynamic_rotate %175 by %c255_i32_168 dim 1 : vector<32x256xf32>, i32 -> vector<32x256xf32>
    %cst_169 = arith.constant 0.000000e+00 : f32
    %202 = vector.broadcast %cst_169 : f32 to vector<32x256xf32>
    %203 = arith.select %12, %201, %202 : vector<32x256xi1>, vector<32x256xf32>
    %c192_170 = arith.constant 192 : index
    %c0_171 = arith.constant 0 : index
    %204 = vector.load %arg8[%c192_170, %c0_171] : memref<352x256xf32, #tpu.memory_space<vmem>>, vector<32x256xf32>
    tpu.vector_store %arg8[%c192_170, %c0_171], %203 {strides = array<i32>} : memref<352x256xf32, #tpu.memory_space<vmem>>, vector<32x256xf32>,
    %c254_i32_172 = arith.constant 254 : i32
    %205 = tpu.dynamic_rotate %175 by %c254_i32_172 dim 1 : vector<32x256xf32>, i32 -> vector<32x256xf32>
    %cst_173 = arith.constant 0.000000e+00 : f32
    %206 = vector.broadcast %cst_173 : f32 to vector<32x256xf32>
    %207 = arith.select %14, %205, %206 : vector<32x256xi1>, vector<32x256xf32>
    %c224_174 = arith.constant 224 : index
    %c0_175 = arith.constant 0 : index
    %208 = vector.load %arg8[%c224_174, %c0_175] : memref<352x256xf32, #tpu.memory_space<vmem>>, vector<32x256xf32>
    tpu.vector_store %arg8[%c224_174, %c0_175], %207 {strides = array<i32>} : memref<352x256xf32, #tpu.memory_space<vmem>>, vector<32x256xf32>,
    %c253_i32_176 = arith.constant 253 : i32
    %209 = tpu.dynamic_rotate %175 by %c253_i32_176 dim 1 : vector<32x256xf32>, i32 -> vector<32x256xf32>
    %cst_177 = arith.constant 0.000000e+00 : f32
    %210 = vector.broadcast %cst_177 : f32 to vector<32x256xf32>
    %211 = arith.select %16, %209, %210 : vector<32x256xi1>, vector<32x256xf32>
    %c256_178 = arith.constant 256 : index
    %c0_179 = arith.constant 0 : index
    %212 = vector.load %arg8[%c256_178, %c0_179] : memref<352x256xf32, #tpu.memory_space<vmem>>, vector<32x256xf32>
    tpu.vector_store %arg8[%c256_178, %c0_179], %211 {strides = array<i32>} : memref<352x256xf32, #tpu.memory_space<vmem>>, vector<32x256xf32>,
    %c252_i32_180 = arith.constant 252 : i32
    %213 = tpu.dynamic_rotate %175 by %c252_i32_180 dim 1 : vector<32x256xf32>, i32 -> vector<32x256xf32>
    %cst_181 = arith.constant 0.000000e+00 : f32
    %214 = vector.broadcast %cst_181 : f32 to vector<32x256xf32>
    %215 = arith.select %18, %213, %214 : vector<32x256xi1>, vector<32x256xf32>
    %c288_182 = arith.constant 288 : index
    %c0_183 = arith.constant 0 : index
    %216 = vector.load %arg8[%c288_182, %c0_183] : memref<352x256xf32, #tpu.memory_space<vmem>>, vector<32x256xf32>
    tpu.vector_store %arg8[%c288_182, %c0_183], %215 {strides = array<i32>} : memref<352x256xf32, #tpu.memory_space<vmem>>, vector<32x256xf32>,
    %c251_i32_184 = arith.constant 251 : i32
    %217 = tpu.dynamic_rotate %175 by %c251_i32_184 dim 1 : vector<32x256xf32>, i32 -> vector<32x256xf32>
    %cst_185 = arith.constant 0.000000e+00 : f32
    %218 = vector.broadcast %cst_185 : f32 to vector<32x256xf32>
    %219 = arith.select %20, %217, %218 : vector<32x256xi1>, vector<32x256xf32>
    %c320_186 = arith.constant 320 : index
    %c0_187 = arith.constant 0 : index
    %220 = vector.load %arg8[%c320_186, %c0_187] : memref<352x256xf32, #tpu.memory_space<vmem>>, vector<32x256xf32>
    tpu.vector_store %arg8[%c320_186, %c0_187], %219 {strides = array<i32>} : memref<352x256xf32, #tpu.memory_space<vmem>>, vector<32x256xf32>,
    %c0_188 = arith.constant 0 : index
    %c0_189 = arith.constant 0 : index
    %221 = vector.load %arg8[%c0_188, %c0_189] : memref<352x256xf32, #tpu.memory_space<vmem>>, vector<352x256xf32>
    %cst_190 = arith.constant dense<0.000000e+00> : vector<32x256xf32>
    %222 = tpu.matmul %177, %221, %cst_190 {dimension_numbers = #tpu.dot_dimension_numbers<[1], [0], [0], [1], [0, 0, 1, 1], [], []>} : vector<32x352xf32>, vector<352x256xf32>, vector<32x256xf32> -> vector<32x256xf32>
    %223 = vector.broadcast %179 : vector<32x1xf32> to vector<32x256xf32>
    %224 = arith.addf %222, %223 : vector<32x256xf32>
    %cst_191 = arith.constant 0.000000e+00 : f32
    %225 = vector.broadcast %cst_191 : f32 to vector<32x256xf32>
    %226 = arith.maximumf %224, %225 : vector<32x256xf32>
    %227 = arith.addf %124, %226 : vector<32x256xf32>
    %c0_192 = arith.constant 0 : index
    %c0_193 = arith.constant 0 : index
    %228 = vector.load %arg5[%c0_192, %c0_193] : memref<1x352xf32, #tpu.memory_space<vmem>>, vector<1x352xf32>
    %c0_194 = arith.constant 0 : index
    %c0_195 = arith.constant 0 : index
    %229 = vector.load %arg6[%c0_194, %c0_195] : memref<1x1xf32, #tpu.memory_space<vmem>>, vector<1x1xf32>
    %c5_i32_196 = arith.constant 5 : i32
    %230 = tpu.dynamic_rotate %227 by %c5_i32_196 dim 1 : vector<32x256xf32>, i32 -> vector<32x256xf32>
    %cst_197 = arith.constant 0.000000e+00 : f32
    %231 = vector.broadcast %cst_197 : f32 to vector<32x256xf32>
    %232 = arith.select %2, %230, %231 : vector<32x256xi1>, vector<32x256xf32>
    %c0_198 = arith.constant 0 : index
    %c0_199 = arith.constant 0 : index
    %233 = vector.load %arg8[%c0_198, %c0_199] : memref<352x256xf32, #tpu.memory_space<vmem>>, vector<32x256xf32>
    tpu.vector_store %arg8[%c0_198, %c0_199], %232 {strides = array<i32>} : memref<352x256xf32, #tpu.memory_space<vmem>>, vector<32x256xf32>,
    %c4_i32_200 = arith.constant 4 : i32
    %234 = tpu.dynamic_rotate %227 by %c4_i32_200 dim 1 : vector<32x256xf32>, i32 -> vector<32x256xf32>
    %cst_201 = arith.constant 0.000000e+00 : f32
    %235 = vector.broadcast %cst_201 : f32 to vector<32x256xf32>
    %236 = arith.select %4, %234, %235 : vector<32x256xi1>, vector<32x256xf32>
    %c32_202 = arith.constant 32 : index
    %c0_203 = arith.constant 0 : index
    %237 = vector.load %arg8[%c32_202, %c0_203] : memref<352x256xf32, #tpu.memory_space<vmem>>, vector<32x256xf32>
    tpu.vector_store %arg8[%c32_202, %c0_203], %236 {strides = array<i32>} : memref<352x256xf32, #tpu.memory_space<vmem>>, vector<32x256xf32>,
    %c3_i32_204 = arith.constant 3 : i32
    %238 = tpu.dynamic_rotate %227 by %c3_i32_204 dim 1 : vector<32x256xf32>, i32 -> vector<32x256xf32>
    %cst_205 = arith.constant 0.000000e+00 : f32
    %239 = vector.broadcast %cst_205 : f32 to vector<32x256xf32>
    %240 = arith.select %6, %238, %239 : vector<32x256xi1>, vector<32x256xf32>
    %c64_206 = arith.constant 64 : index
    %c0_207 = arith.constant 0 : index
    %241 = vector.load %arg8[%c64_206, %c0_207] : memref<352x256xf32, #tpu.memory_space<vmem>>, vector<32x256xf32>
    tpu.vector_store %arg8[%c64_206, %c0_207], %240 {strides = array<i32>} : memref<352x256xf32, #tpu.memory_space<vmem>>, vector<32x256xf32>,
    %c2_i32_208 = arith.constant 2 : i32
    %242 = tpu.dynamic_rotate %227 by %c2_i32_208 dim 1 : vector<32x256xf32>, i32 -> vector<32x256xf32>
    %cst_209 = arith.constant 0.000000e+00 : f32
    %243 = vector.broadcast %cst_209 : f32 to vector<32x256xf32>
    %244 = arith.select %8, %242, %243 : vector<32x256xi1>, vector<32x256xf32>
    %c96_210 = arith.constant 96 : index
    %c0_211 = arith.constant 0 : index
    %245 = vector.load %arg8[%c96_210, %c0_211] : memref<352x256xf32, #tpu.memory_space<vmem>>, vector<32x256xf32>
    tpu.vector_store %arg8[%c96_210, %c0_211], %244 {strides = array<i32>} : memref<352x256xf32, #tpu.memory_space<vmem>>, vector<32x256xf32>,
    %c1_i32_212 = arith.constant 1 : i32
    %246 = tpu.dynamic_rotate %227 by %c1_i32_212 dim 1 : vector<32x256xf32>, i32 -> vector<32x256xf32>
    %cst_213 = arith.constant 0.000000e+00 : f32
    %247 = vector.broadcast %cst_213 : f32 to vector<32x256xf32>
    %248 = arith.select %10, %246, %247 : vector<32x256xi1>, vector<32x256xf32>
    %c128_214 = arith.constant 128 : index
    %c0_215 = arith.constant 0 : index
    %249 = vector.load %arg8[%c128_214, %c0_215] : memref<352x256xf32, #tpu.memory_space<vmem>>, vector<32x256xf32>
    tpu.vector_store %arg8[%c128_214, %c0_215], %248 {strides = array<i32>} : memref<352x256xf32, #tpu.memory_space<vmem>>, vector<32x256xf32>,
    %c160_216 = arith.constant 160 : index
    %c0_217 = arith.constant 0 : index
    %250 = vector.load %arg8[%c160_216, %c0_217] : memref<352x256xf32, #tpu.memory_space<vmem>>, vector<32x256xf32>
    tpu.vector_store %arg8[%c160_216, %c0_217], %227 {strides = array<i32>} : memref<352x256xf32, #tpu.memory_space<vmem>>, vector<32x256xf32>,
    %c255_i32_218 = arith.constant 255 : i32
    %251 = tpu.dynamic_rotate %227 by %c255_i32_218 dim 1 : vector<32x256xf32>, i32 -> vector<32x256xf32>
    %cst_219 = arith.constant 0.000000e+00 : f32
    %252 = vector.broadcast %cst_219 : f32 to vector<32x256xf32>
    %253 = arith.select %12, %251, %252 : vector<32x256xi1>, vector<32x256xf32>
    %c192_220 = arith.constant 192 : index
    %c0_221 = arith.constant 0 : index
    %254 = vector.load %arg8[%c192_220, %c0_221] : memref<352x256xf32, #tpu.memory_space<vmem>>, vector<32x256xf32>
    tpu.vector_store %arg8[%c192_220, %c0_221], %253 {strides = array<i32>} : memref<352x256xf32, #tpu.memory_space<vmem>>, vector<32x256xf32>,
    %c254_i32_222 = arith.constant 254 : i32
    %255 = tpu.dynamic_rotate %227 by %c254_i32_222 dim 1 : vector<32x256xf32>, i32 -> vector<32x256xf32>
    %cst_223 = arith.constant 0.000000e+00 : f32
    %256 = vector.broadcast %cst_223 : f32 to vector<32x256xf32>
    %257 = arith.select %14, %255, %256 : vector<32x256xi1>, vector<32x256xf32>
    %c224_224 = arith.constant 224 : index
    %c0_225 = arith.constant 0 : index
    %258 = vector.load %arg8[%c224_224, %c0_225] : memref<352x256xf32, #tpu.memory_space<vmem>>, vector<32x256xf32>
    tpu.vector_store %arg8[%c224_224, %c0_225], %257 {strides = array<i32>} : memref<352x256xf32, #tpu.memory_space<vmem>>, vector<32x256xf32>,
    %c253_i32_226 = arith.constant 253 : i32
    %259 = tpu.dynamic_rotate %227 by %c253_i32_226 dim 1 : vector<32x256xf32>, i32 -> vector<32x256xf32>
    %cst_227 = arith.constant 0.000000e+00 : f32
    %260 = vector.broadcast %cst_227 : f32 to vector<32x256xf32>
    %261 = arith.select %16, %259, %260 : vector<32x256xi1>, vector<32x256xf32>
    %c256_228 = arith.constant 256 : index
    %c0_229 = arith.constant 0 : index
    %262 = vector.load %arg8[%c256_228, %c0_229] : memref<352x256xf32, #tpu.memory_space<vmem>>, vector<32x256xf32>
    tpu.vector_store %arg8[%c256_228, %c0_229], %261 {strides = array<i32>} : memref<352x256xf32, #tpu.memory_space<vmem>>, vector<32x256xf32>,
    %c252_i32_230 = arith.constant 252 : i32
    %263 = tpu.dynamic_rotate %227 by %c252_i32_230 dim 1 : vector<32x256xf32>, i32 -> vector<32x256xf32>
    %cst_231 = arith.constant 0.000000e+00 : f32
    %264 = vector.broadcast %cst_231 : f32 to vector<32x256xf32>
    %265 = arith.select %18, %263, %264 : vector<32x256xi1>, vector<32x256xf32>
    %c288_232 = arith.constant 288 : index
    %c0_233 = arith.constant 0 : index
    %266 = vector.load %arg8[%c288_232, %c0_233] : memref<352x256xf32, #tpu.memory_space<vmem>>, vector<32x256xf32>
    tpu.vector_store %arg8[%c288_232, %c0_233], %265 {strides = array<i32>} : memref<352x256xf32, #tpu.memory_space<vmem>>, vector<32x256xf32>,
    %c251_i32_234 = arith.constant 251 : i32
    %267 = tpu.dynamic_rotate %227 by %c251_i32_234 dim 1 : vector<32x256xf32>, i32 -> vector<32x256xf32>
    %cst_235 = arith.constant 0.000000e+00 : f32
    %268 = vector.broadcast %cst_235 : f32 to vector<32x256xf32>
    %269 = arith.select %20, %267, %268 : vector<32x256xi1>, vector<32x256xf32>
    %c320_236 = arith.constant 320 : index
    %c0_237 = arith.constant 0 : index
    %270 = vector.load %arg8[%c320_236, %c0_237] : memref<352x256xf32, #tpu.memory_space<vmem>>, vector<32x256xf32>
    tpu.vector_store %arg8[%c320_236, %c0_237], %269 {strides = array<i32>} : memref<352x256xf32, #tpu.memory_space<vmem>>, vector<32x256xf32>,
    %c0_238 = arith.constant 0 : index
    %c0_239 = arith.constant 0 : index
    %271 = vector.load %arg8[%c0_238, %c0_239] : memref<352x256xf32, #tpu.memory_space<vmem>>, vector<352x256xf32>
    %cst_240 = arith.constant dense<0.000000e+00> : vector<1x256xf32>
    %272 = tpu.matmul %228, %271, %cst_240 {dimension_numbers = #tpu.dot_dimension_numbers<[1], [0], [0], [1], [0, 0, 1, 1], [], []>} : vector<1x352xf32>, vector<352x256xf32>, vector<1x256xf32> -> vector<1x256xf32>
    %273 = vector.broadcast %229 : vector<1x1xf32> to vector<1x256xf32>
    %274 = arith.addf %272, %273 : vector<1x256xf32>
    %275 = arith.negf %274 : vector<1x256xf32>
    %276 = math.exp %275 : vector<1x256xf32>
    %cst_241 = arith.constant 1.000000e+00 : f32
    %277 = vector.broadcast %cst_241 : f32 to vector<1x256xf32>
    %278 = arith.addf %277, %276 : vector<1x256xf32>
    %279 = arith.divf %277, %278 : vector<1x256xf32>
    %c0_242 = arith.constant 0 : index
    %c0_243 = arith.constant 0 : index
    %280 = vector.load %arg7[%c0_242, %c0_243] : memref<1x256xf32, #tpu.memory_space<vmem>>, vector<1x256xf32>
    tpu.vector_store %arg7[%c0_242, %c0_243], %279 {strides = array<i32>} : memref<1x256xf32, #tpu.memory_space<vmem>>, vector<1x256xf32>,
    return
  }
  func.func @transform_0(%arg0: i32) -> (i32, i32) {
    %c0_i32 = arith.constant 0 : i32
    %c0_i32_0 = arith.constant 0 : i32
    %c0_i32_1 = arith.constant 0 : i32
    return %c0_i32, %c0_i32_0 : i32, i32
  }
  func.func @transform_1(%arg0: i32) -> (i32, i32) {
    %c0_i32 = arith.constant 0 : i32
    %c0_i32_0 = arith.constant 0 : i32
    %c0_i32_1 = arith.constant 0 : i32
    return %c0_i32, %c0_i32_0 : i32, i32
  }
  func.func @transform_2(%arg0: i32) -> (i32, i32, i32) {
    %c0_i32 = arith.constant 0 : i32
    %c0_i32_0 = arith.constant 0 : i32
    %c0_i32_1 = arith.constant 0 : i32
    %c0_i32_2 = arith.constant 0 : i32
    return %c0_i32, %c0_i32_0, %c0_i32_1 : i32, i32, i32
  }
  func.func @transform_3(%arg0: i32) -> (i32, i32, i32) {
    %c0_i32 = arith.constant 0 : i32
    %c0_i32_0 = arith.constant 0 : i32
    %c0_i32_1 = arith.constant 0 : i32
    %c0_i32_2 = arith.constant 0 : i32
    return %c0_i32, %c0_i32_0, %c0_i32_1 : i32, i32, i32
  }
  func.func @transform_4(%arg0: i32) -> (i32, i32) {
    %c0_i32 = arith.constant 0 : i32
    %c0_i32_0 = arith.constant 0 : i32
    %c0_i32_1 = arith.constant 0 : i32
    return %c0_i32, %c0_i32_0 : i32, i32
  }
  func.func @transform_5(%arg0: i32) -> (i32, i32) {
    %c0_i32 = arith.constant 0 : i32
    %c0_i32_0 = arith.constant 0 : i32
    %c0_i32_1 = arith.constant 0 : i32
    return %c0_i32, %c0_i32_0 : i32, i32
  }
  func.func @transform_6(%arg0: i32) -> (i32, i32) {
    %c0_i32 = arith.constant 0 : i32
    %c0_i32_0 = arith.constant 0 : i32
    %c0_i32_1 = arith.constant 0 : i32
    return %c0_i32, %c0_i32_0 : i32, i32
  }
}

</mosaic_0001>

<llo_original>
// kernel: tpu_custom_call.1
$region0: #{tpu_custom_call.1}
  #allocation0 [shape = 'u32[]', space=smem, size = 0x4, offset = 0x4, fixed_abs, tag = 'smem constant byte address 0x4 - core index']
  #allocation1 [shape = 'u32[144,128]{1,0:T(1,128)}', space=vmem, size = 0x12000, scoped, tag = 'internal scratch']
  #allocation2 [shape = 'f32[352,256]{1,0:T(8,128)}', space=vmem, size = 0x58000, scoped, tag = 'scratch operand']
  #allocation3 [shape = 'f32[1,1]{1,0:T(1,128)S(1)}', space=vmem, size = 0x200, scoped, tag = 'scoped memory for tpu_custom_call.1']
  %s0 = inlined_call_operand.vmem [shape: f32[32,256], index: 0, kind: input, shape index: {}]
  %s1 = inlined_call_operand.vmem [shape: s32[32,256], index: 1, kind: input, shape index: {}]
  %s2 = inlined_call_operand.hbm [shape: f32[4,32,352], index: 2, kind: input, shape index: {}]
  %s3 = inlined_call_operand.vmem [shape: f32[4,32,1], index: 3, kind: input, shape index: {}]
  %s4 = inlined_call_operand.vmem [shape: f32[1,352], index: 4, kind: input, shape index: {}]
  %s5 = inlined_call_operand.<no memory space> [shape: f32[1,1], index: 5, kind: input, shape index: {}]
  %s6 = inlined_call_operand.hbm [shape: f32[1,256], index: 6, kind: output, shape index: {}]
  %s7 = sld [smem:[#allocation0]]
  $region38: #{tpu_custom_call.1} parent=0
    _
  %s9 = ssub.s32 1, %s7
  %s10 = scalar_select 0, %s9, %s7
  %v11 = vstv %s5
  %12 = vst [vmem:[#allocation3] sm:$0x1] %v11
  $region1: #{tpu_custom_call.1} parent=0
    #allocation4 [shape = 'u8[196608]{0}', space=vmem, size = 0x30000, scoped, tag = 'input window, operand 2, single buffered']
    #allocation5 [shape = 's32[1]{0}', space=sflag, size = 0x4, scoped, tag = 'scoped memory for tpu_custom_call.1']
    #allocation6 [shape = 's32[1]{0}', space=sflag, size = 0x4, scoped, tag = 'scoped memory for tpu_custom_call.1']
    #allocation7 [shape = 'u8[1024]{0}', space=vmem, size = 0x400, scoped, tag = 'output window, operand 0, single buffered']
    %13 = vsyncpa [#allocation5], 0
    %14 = vsyncpa [#allocation6], 0
    // Predicated region
    $region2: #{tpu_custom_call.1} parent=1 // pred_check
      _
    $region3: #{tpu_custom_call.1} parent=1 // pred_check_branch
      %16 = sbr.rel (0) target = $region5
    $region4: #{tpu_custom_call.1} parent=1 // pred_region
      _
    $region5: #{tpu_custom_call.1} parent=1 // pred_fallthru
      _
    // Predicated region
    $region6: #{tpu_custom_call.1} parent=1 // pred_check
      _
    $region7: #{tpu_custom_call.1} parent=1 // pred_check_branch
      %18 = sbr.rel (0) target = $region9
    $region8: #{tpu_custom_call.1} parent=1 // pred_region
      _
    $region9: #{tpu_custom_call.1} parent=1 // pred_fallthru
      _
    // Predicated region
    $region10: #{tpu_custom_call.1} parent=1 // pred_check
      _
    $region11: #{tpu_custom_call.1} parent=1 // pred_check_branch
      %20 = sbr.rel (0) target = $region13
    $region12: #{tpu_custom_call.1} parent=1 // pred_region
      %s22 = ssub.s32 6144, 6144
      %23 = vsyncadd [#allocation5], %s22
      %s24 = sshll.u32 [#allocation4], 4
      %s25 = int_to_ptr.vmem [resolvable:$true] %s24
      %30 = dma.hbm_to_vmem [thread:$0]  %s2, 6144, %s25, [#allocation5], 384, 384, 24
    $region13: #{tpu_custom_call.1} parent=1 // pred_fallthru
      _
    // Predicated region
    $region14: #{tpu_custom_call.1} parent=1 // pred_check
      _
    $region15: #{tpu_custom_call.1} parent=1 // pred_check_branch
      %32 = sbr.rel (0) target = $region17
    $region16: #{tpu_custom_call.1} parent=1 // pred_region
      _
    $region17: #{tpu_custom_call.1} parent=1 // pred_fallthru
      _
    // Predicated region
    $region18: #{tpu_custom_call.1} parent=1 // pred_check
      _
    $region19: #{tpu_custom_call.1} parent=1 // pred_check_branch
      %34 = sbr.rel (0) target = $region21
    $region20: #{tpu_custom_call.1} parent=1 // pred_region
      _
    $region21: #{tpu_custom_call.1} parent=1 // pred_fallthru
      _
    // Predicated region
    $region22: #{tpu_custom_call.1} parent=1 // pred_check
      _
    $region23: #{tpu_custom_call.1} parent=1 // pred_check_branch
      %36 = sbr.rel (0) target = $region25
    $region24: #{tpu_custom_call.1} parent=1 // pred_region
      _
    $region25: #{tpu_custom_call.1} parent=1 // pred_fallthru
      _
    // Predicated region
    $region26: #{tpu_custom_call.1} parent=1 // pred_check
      _
    $region27: #{tpu_custom_call.1} parent=1 // pred_check_branch
      %38 = sbr.rel (0) target = $region29
    $region28: #{tpu_custom_call.1} parent=1 // pred_region
      %39 = dma.done [#allocation5], 6144
    $region29: #{tpu_custom_call.1} parent=1 // pred_fallthru
      _
    %v40 = vld [vmem:[%s1] sm:$0xff]
    %v41 = vld [vmem:[%s1 + $0x8] sm:$0xff]
    %v42 = vld [vmem:[%s1 + $0x10] sm:$0xff]
    %v43 = vld [vmem:[%s1 + $0x18] sm:$0xff]
    %v44 = vld [vmem:[%s1 + $0x20] sm:$0xff]
    %v45 = vld [vmem:[%s1 + $0x28] sm:$0xff]
    %v46 = vld [vmem:[%s1 + $0x30] sm:$0xff]
    %v47 = vld [vmem:[%s1 + $0x38] sm:$0xff]
    %vm48 = vcmp.ge.s32.totalorder %v40, 5
    %vm49 = vcmp.ge.s32.totalorder %v41, 5
    %vm50 = vcmp.ge.s32.totalorder %v42, 5
    %vm51 = vcmp.ge.s32.totalorder %v43, 5
    %vm52 = vcmp.ge.s32.totalorder %v44, 5
    %vm53 = vcmp.ge.s32.totalorder %v45, 5
    %vm54 = vcmp.ge.s32.totalorder %v46, 5
    %vm55 = vcmp.ge.s32.totalorder %v47, 5
    %vm56 = vcmp.ge.s32.totalorder %v40, 4
    %vm57 = vcmp.ge.s32.totalorder %v41, 4
    %vm58 = vcmp.ge.s32.totalorder %v42, 4
    %vm59 = vcmp.ge.s32.totalorder %v43, 4
    %vm60 = vcmp.ge.s32.totalorder %v44, 4
    %vm61 = vcmp.ge.s32.totalorder %v45, 4
    %vm62 = vcmp.ge.s32.totalorder %v46, 4
    %vm63 = vcmp.ge.s32.totalorder %v47, 4
    %vm64 = vcmp.ge.s32.totalorder %v40, 3
    %vm65 = vcmp.ge.s32.totalorder %v41, 3
    %vm66 = vcmp.ge.s32.totalorder %v42, 3
    %vm67 = vcmp.ge.s32.totalorder %v43, 3
    %vm68 = vcmp.ge.s32.totalorder %v44, 3
    %vm69 = vcmp.ge.s32.totalorder %v45, 3
    %vm70 = vcmp.ge.s32.totalorder %v46, 3
    %vm71 = vcmp.ge.s32.totalorder %v47, 3
    %vm72 = vcmp.ge.s32.totalorder %v40, 2
    %vm73 = vcmp.ge.s32.totalorder %v41, 2
    %vm74 = vcmp.ge.s32.totalorder %v42, 2
    %vm75 = vcmp.ge.s32.totalorder %v43, 2
    %vm76 = vcmp.ge.s32.totalorder %v44, 2
    %vm77 = vcmp.ge.s32.totalorder %v45, 2
    %vm78 = vcmp.ge.s32.totalorder %v46, 2
    %vm79 = vcmp.ge.s32.totalorder %v47, 2
    %vm80 = vcmp.ge.s32.totalorder %v40, 1
    %vm81 = vcmp.ge.s32.totalorder %v41, 1
    %vm82 = vcmp.ge.s32.totalorder %v42, 1
    %vm83 = vcmp.ge.s32.totalorder %v43, 1
    %vm84 = vcmp.ge.s32.totalorder %v44, 1
    %vm85 = vcmp.ge.s32.totalorder %v45, 1
    %vm86 = vcmp.ge.s32.totalorder %v46, 1
    %vm87 = vcmp.ge.s32.totalorder %v47, 1
    %vm88 = vcmp.lt.s32.totalorder %v40, 127
    %vm89 = vcmp.lt.s32.totalorder %v41, 127
    %vm90 = vcmp.lt.s32.totalorder %v42, 127
    %vm91 = vcmp.lt.s32.totalorder %v43, 127
    %vm92 = vcmp.lt.s32.totalorder %v44, 127
    %vm93 = vcmp.lt.s32.totalorder %v45, 127
    %vm94 = vcmp.lt.s32.totalorder %v46, 127
    %vm95 = vcmp.lt.s32.totalorder %v47, 127
    %vm96 = vcmp.lt.s32.totalorder %v40, 126
    %vm97 = vcmp.lt.s32.totalorder %v41, 126
    %vm98 = vcmp.lt.s32.totalorder %v42, 126
    %vm99 = vcmp.lt.s32.totalorder %v43, 126
    %vm100 = vcmp.lt.s32.totalorder %v44, 126
    %vm101 = vcmp.lt.s32.totalorder %v45, 126
    %vm102 = vcmp.lt.s32.totalorder %v46, 126
    %vm103 = vcmp.lt.s32.totalorder %v47, 126
    %vm104 = vcmp.lt.s32.totalorder %v40, 125
    %vm105 = vcmp.lt.s32.totalorder %v41, 125
    %vm106 = vcmp.lt.s32.totalorder %v42, 125
    %vm107 = vcmp.lt.s32.totalorder %v43, 125
    %vm108 = vcmp.lt.s32.totalorder %v44, 125
    %vm109 = vcmp.lt.s32.totalorder %v45, 125
    %vm110 = vcmp.lt.s32.totalorder %v46, 125
    %vm111 = vcmp.lt.s32.totalorder %v47, 125
    %vm112 = vcmp.lt.s32.totalorder %v40, 124
    %vm113 = vcmp.lt.s32.totalorder %v41, 124
    %vm114 = vcmp.lt.s32.totalorder %v42, 124
    %vm115 = vcmp.lt.s32.totalorder %v43, 124
    %vm116 = vcmp.lt.s32.totalorder %v44, 124
    %vm117 = vcmp.lt.s32.totalorder %v45, 124
    %vm118 = vcmp.lt.s32.totalorder %v46, 124
    %vm119 = vcmp.lt.s32.totalorder %v47, 124
    %vm120 = vcmp.lt.s32.totalorder %v40, 123
    %vm121 = vcmp.lt.s32.totalorder %v41, 123
    %vm122 = vcmp.lt.s32.totalorder %v42, 123
    %vm123 = vcmp.lt.s32.totalorder %v43, 123
    %vm124 = vcmp.lt.s32.totalorder %v44, 123
    %vm125 = vcmp.lt.s32.totalorder %v45, 123
    %vm126 = vcmp.lt.s32.totalorder %v46, 123
    %vm127 = vcmp.lt.s32.totalorder %v47, 123
    %v128 = vld [vmem:[%s0] sm:$0xff]
    %v129 = vld [vmem:[%s0 + $0x8] sm:$0xff]
    %v130 = vld [vmem:[%s0 + $0x10] sm:$0xff]
    %v131 = vld [vmem:[%s0 + $0x18] sm:$0xff]
    %v132 = vld [vmem:[%s0 + $0x20] sm:$0xff]
    %v133 = vld [vmem:[%s0 + $0x28] sm:$0xff]
    %v134 = vld [vmem:[%s0 + $0x30] sm:$0xff]
    %v135 = vld [vmem:[%s0 + $0x38] sm:$0xff]
    %v136 = vld [vmem:[#allocation4] sm:$0xff]
    %v137 = vld [vmem:[#allocation4 + $0x8] sm:$0xff]
    %v138 = vld [vmem:[#allocation4 + $0x10] sm:$0xff]
    %v139 = vld [vmem:[#allocation4 + $0x18] sm:$0xff]
    %v140 = vld [vmem:[#allocation4 + $0x20] sm:$0xff]
    %v141 = vld [vmem:[#allocation4 + $0x28] sm:$0xff]
    %v142 = vld [vmem:[#allocation4 + $0x30] sm:$0xff]
    %v143 = vld [vmem:[#allocation4 + $0x38] sm:$0xff]
    %v144 = vld [vmem:[#allocation4 + $0x40] sm:$0xff]
    %v145 = vld [vmem:[#allocation4 + $0x48] sm:$0xff]
    %v146 = vld [vmem:[#allocation4 + $0x50] sm:$0xff]
    %v147 = vld [vmem:[#allocation4 + $0x58] sm:$0xff]
    %v148 = vld [vmem:[%s3] sm:$0xff]
    %v149 = vld [vmem:[%s3 + $0x8] sm:$0xff]
    %v150 = vld [vmem:[%s3 + $0x10] sm:$0xff]
    %v151 = vld [vmem:[%s3 + $0x18] sm:$0xff]
    %152 = vrot.lane.b32.xlu0 %v128, 5
    %v153 = vpop.permute.xlu0 %152
    %154 = vrot.lane.b32.xlu0 %v130, 5
    %v155 = vpop.permute.xlu0 %154
    %156 = vrot.lane.b32.xlu0 %v132, 5
    %v157 = vpop.permute.xlu0 %156
    %158 = vrot.lane.b32.xlu0 %v134, 5
    %v159 = vpop.permute.xlu0 %158
    %160 = vrot.lane.b32.xlu0 %v129, 5
    %v161 = vpop.permute.xlu0 %160
    %162 = vrot.lane.b32.xlu0 %v131, 5
    %v163 = vpop.permute.xlu0 %162
    %164 = vrot.lane.b32.xlu0 %v133, 5
    %v165 = vpop.permute.xlu0 %164
    %166 = vrot.lane.b32.xlu0 %v135, 5
    %v167 = vpop.permute.xlu0 %166
    %v168 = vlaneseq
    %v169 = vand.u32 %v168, 127
    %vm170 = vcmp.lt.s32.totalorder %v169, 5
    %v171 = vsel %vm170, %v153, %v161
    %v172 = vsel %vm170, %v155, %v163
    %v173 = vsel %vm170, %v157, %v165
    %v174 = vsel %vm170, %v159, %v167
    %v175 = vsel %vm170, %v161, %v153
    %v176 = vsel %vm170, %v163, %v155
    %v177 = vsel %vm170, %v165, %v157
    %v178 = vsel %vm170, %v167, %v159
    %v179 = vsel %vm48, %v175, 0.0
    %v180 = vsel %vm49, %v171, 0.0
    %v181 = vsel %vm50, %v176, 0.0
    %v182 = vsel %vm51, %v172, 0.0
    %v183 = vsel %vm52, %v177, 0.0
    %v184 = vsel %vm53, %v173, 0.0
    %v185 = vsel %vm54, %v178, 0.0
    %v186 = vsel %vm55, %v174, 0.0
    %187 = vst [vmem:[#allocation2] sm:$0xff] %v179
    %188 = vst [vmem:[#allocation2 + $0x8] sm:$0xff] %v180
    %189 = vst [vmem:[#allocation2 + $0x10] sm:$0xff] %v181
    %190 = vst [vmem:[#allocation2 + $0x18] sm:$0xff] %v182
    %191 = vst [vmem:[#allocation2 + $0x20] sm:$0xff] %v183
    %192 = vst [vmem:[#allocation2 + $0x28] sm:$0xff] %v184
    %193 = vst [vmem:[#allocation2 + $0x30] sm:$0xff] %v185
    %194 = vst [vmem:[#allocation2 + $0x38] sm:$0xff] %v186
    %195 = vrot.lane.b32.xlu0 %v128, 4
    %v196 = vpop.permute.xlu0 %195
    %197 = vrot.lane.b32.xlu0 %v130, 4
    %v198 = vpop.permute.xlu0 %197
    %199 = vrot.lane.b32.xlu0 %v132, 4
    %v200 = vpop.permute.xlu0 %199
    %201 = vrot.lane.b32.xlu0 %v134, 4
    %v202 = vpop.permute.xlu0 %201
    %203 = vrot.lane.b32.xlu0 %v129, 4
    %v204 = vpop.permute.xlu0 %203
    %205 = vrot.lane.b32.xlu0 %v131, 4
    %v206 = vpop.permute.xlu0 %205
    %207 = vrot.lane.b32.xlu0 %v133, 4
    %v208 = vpop.permute.xlu0 %207
    %209 = vrot.lane.b32.xlu0 %v135, 4
    %v210 = vpop.permute.xlu0 %209
    %vm211 = vcmp.lt.s32.totalorder %v169, 4
    %v212 = vsel %vm211, %v196, %v204
    %v213 = vsel %vm211, %v198, %v206
    %v214 = vsel %vm211, %v200, %v208
    %v215 = vsel %vm211, %v202, %v210
    %v216 = vsel %vm211, %v204, %v196
    %v217 = vsel %vm211, %v206, %v198
    %v218 = vsel %vm211, %v208, %v200
    %v219 = vsel %vm211, %v210, %v202
    %v220 = vsel %vm56, %v216, 0.0
    %v221 = vsel %vm57, %v212, 0.0
    %v222 = vsel %vm58, %v217, 0.0
    %v223 = vsel %vm59, %v213, 0.0
    %v224 = vsel %vm60, %v218, 0.0
    %v225 = vsel %vm61, %v214, 0.0
    %v226 = vsel %vm62, %v219, 0.0
    %v227 = vsel %vm63, %v215, 0.0
    %228 = vst [vmem:[#allocation2 + $0x40] sm:$0xff] %v220
    %229 = vst [vmem:[#allocation2 + $0x48] sm:$0xff] %v221
    %230 = vst [vmem:[#allocation2 + $0x50] sm:$0xff] %v222
    %231 = vst [vmem:[#allocation2 + $0x58] sm:$0xff] %v223
    %232 = vst [vmem:[#allocation2 + $0x60] sm:$0xff] %v224
    %233 = vst [vmem:[#allocation2 + $0x68] sm:$0xff] %v225
    %234 = vst [vmem:[#allocation2 + $0x70] sm:$0xff] %v226
    %235 = vst [vmem:[#allocation2 + $0x78] sm:$0xff] %v227
    %236 = vrot.lane.b32.xlu0 %v128, 3
    %v237 = vpop.permute.xlu0 %236
    %238 = vrot.lane.b32.xlu0 %v130, 3
    %v239 = vpop.permute.xlu0 %238
    %240 = vrot.lane.b32.xlu0 %v132, 3
    %v241 = vpop.permute.xlu0 %240
    %242 = vrot.lane.b32.xlu0 %v134, 3
    %v243 = vpop.permute.xlu0 %242
    %244 = vrot.lane.b32.xlu0 %v129, 3
    %v245 = vpop.permute.xlu0 %244
    %246 = vrot.lane.b32.xlu0 %v131, 3
    %v247 = vpop.permute.xlu0 %246
    %248 = vrot.lane.b32.xlu0 %v133, 3
    %v249 = vpop.permute.xlu0 %248
    %250 = vrot.lane.b32.xlu0 %v135, 3
    %v251 = vpop.permute.xlu0 %250
    %vm252 = vcmp.lt.s32.totalorder %v169, 3
    %v253 = vsel %vm252, %v237, %v245
    %v254 = vsel %vm252, %v239, %v247
    %v255 = vsel %vm252, %v241, %v249
    %v256 = vsel %vm252, %v243, %v251
    %v257 = vsel %vm252, %v245, %v237
    %v258 = vsel %vm252, %v247, %v239
    %v259 = vsel %vm252, %v249, %v241
    %v260 = vsel %vm252, %v251, %v243
    %v261 = vsel %vm64, %v257, 0.0
    %v262 = vsel %vm65, %v253, 0.0
    %v263 = vsel %vm66, %v258, 0.0
    %v264 = vsel %vm67, %v254, 0.0
    %v265 = vsel %vm68, %v259, 0.0
    %v266 = vsel %vm69, %v255, 0.0
    %v267 = vsel %vm70, %v260, 0.0
    %v268 = vsel %vm71, %v256, 0.0
    %269 = vst [vmem:[#allocation2 + $0x80] sm:$0xff] %v261
    %270 = vst [vmem:[#allocation2 + $0x88] sm:$0xff] %v262
    %271 = vst [vmem:[#allocation2 + $0x90] sm:$0xff] %v263
    %272 = vst [vmem:[#allocation2 + $0x98] sm:$0xff] %v264
    %273 = vst [vmem:[#allocation2 + $0xa0] sm:$0xff] %v265
    %274 = vst [vmem:[#allocation2 + $0xa8] sm:$0xff] %v266
    %275 = vst [vmem:[#allocation2 + $0xb0] sm:$0xff] %v267
    %276 = vst [vmem:[#allocation2 + $0xb8] sm:$0xff] %v268
    %277 = vrot.lane.b32.xlu0 %v128, 2
    %v278 = vpop.permute.xlu0 %277
    %279 = vrot.lane.b32.xlu0 %v130, 2
    %v280 = vpop.permute.xlu0 %279
    %281 = vrot.lane.b32.xlu0 %v132, 2
    %v282 = vpop.permute.xlu0 %281
    %283 = vrot.lane.b32.xlu0 %v134, 2
    %v284 = vpop.permute.xlu0 %283
    %285 = vrot.lane.b32.xlu0 %v129, 2
    %v286 = vpop.permute.xlu0 %285
    %287 = vrot.lane.b32.xlu0 %v131, 2
    %v288 = vpop.permute.xlu0 %287
    %289 = vrot.lane.b32.xlu0 %v133, 2
    %v290 = vpop.permute.xlu0 %289
    %291 = vrot.lane.b32.xlu0 %v135, 2
    %v292 = vpop.permute.xlu0 %291
    %vm293 = vcmp.lt.s32.totalorder %v169, 2
    %v294 = vsel %vm293, %v278, %v286
    %v295 = vsel %vm293, %v280, %v288
    %v296 = vsel %vm293, %v282, %v290
    %v297 = vsel %vm293, %v284, %v292
    %v298 = vsel %vm293, %v286, %v278
    %v299 = vsel %vm293, %v288, %v280
    %v300 = vsel %vm293, %v290, %v282
    %v301 = vsel %vm293, %v292, %v284
    %v302 = vsel %vm72, %v298, 0.0
    %v303 = vsel %vm73, %v294, 0.0
    %v304 = vsel %vm74, %v299, 0.0
    %v305 = vsel %vm75, %v295, 0.0
    %v306 = vsel %vm76, %v300, 0.0
    %v307 = vsel %vm77, %v296, 0.0
    %v308 = vsel %vm78, %v301, 0.0
    %v309 = vsel %vm79, %v297, 0.0
    %310 = vst [vmem:[#allocation2 + $0xc0] sm:$0xff] %v302
    %311 = vst [vmem:[#allocation2 + $0xc8] sm:$0xff] %v303
    %312 = vst [vmem:[#allocation2 + $0xd0] sm:$0xff] %v304
    %313 = vst [vmem:[#allocation2 + $0xd8] sm:$0xff] %v305
    %314 = vst [vmem:[#allocation2 + $0xe0] sm:$0xff] %v306
    %315 = vst [vmem:[#allocation2 + $0xe8] sm:$0xff] %v307
    %316 = vst [vmem:[#allocation2 + $0xf0] sm:$0xff] %v308
    %317 = vst [vmem:[#allocation2 + $0xf8] sm:$0xff] %v309
    %318 = vrot.lane.b32.xlu0 %v128, 1
    %v319 = vpop.permute.xlu0 %318
    %320 = vrot.lane.b32.xlu0 %v130, 1
    %v321 = vpop.permute.xlu0 %320
    %322 = vrot.lane.b32.xlu0 %v132, 1
    %v323 = vpop.permute.xlu0 %322
    %324 = vrot.lane.b32.xlu0 %v134, 1
    %v325 = vpop.permute.xlu0 %324
    %326 = vrot.lane.b32.xlu0 %v129, 1
    %v327 = vpop.permute.xlu0 %326
    %328 = vrot.lane.b32.xlu0 %v131, 1
    %v329 = vpop.permute.xlu0 %328
    %330 = vrot.lane.b32.xlu0 %v133, 1
    %v331 = vpop.permute.xlu0 %330
    %332 = vrot.lane.b32.xlu0 %v135, 1
    %v333 = vpop.permute.xlu0 %332
    %vm334 = vcmp.lt.s32.totalorder %v169, 1
    %v335 = vsel %vm334, %v319, %v327
    %v336 = vsel %vm334, %v321, %v329
    %v337 = vsel %vm334, %v323, %v331
    %v338 = vsel %vm334, %v325, %v333
    %v339 = vsel %vm334, %v327, %v319
    %v340 = vsel %vm334, %v329, %v321
    %v341 = vsel %vm334, %v331, %v323
    %v342 = vsel %vm334, %v333, %v325
    %v343 = vsel %vm80, %v339, 0.0
    %v344 = vsel %vm81, %v335, 0.0
    %v345 = vsel %vm82, %v340, 0.0
    %v346 = vsel %vm83, %v336, 0.0
    %v347 = vsel %vm84, %v341, 0.0
    %v348 = vsel %vm85, %v337, 0.0
    %v349 = vsel %vm86, %v342, 0.0
    %v350 = vsel %vm87, %v338, 0.0
    %351 = vst [vmem:[#allocation2 + $0x100] sm:$0xff] %v343
    %352 = vst [vmem:[#allocation2 + $0x108] sm:$0xff] %v344
    %353 = vst [vmem:[#allocation2 + $0x110] sm:$0xff] %v345
    %354 = vst [vmem:[#allocation2 + $0x118] sm:$0xff] %v346
    %355 = vst [vmem:[#allocation2 + $0x120] sm:$0xff] %v347
    %356 = vst [vmem:[#allocation2 + $0x128] sm:$0xff] %v348
    %357 = vst [vmem:[#allocation2 + $0x130] sm:$0xff] %v349
    %358 = vst [vmem:[#allocation2 + $0x138] sm:$0xff] %v350
    %359 = vst [vmem:[#allocation2 + $0x140] sm:$0xff] %v128
    %360 = vst [vmem:[#allocation2 + $0x148] sm:$0xff] %v129
    %361 = vst [vmem:[#allocation2 + $0x150] sm:$0xff] %v130
    %362 = vst [vmem:[#allocation2 + $0x158] sm:$0xff] %v131
    %363 = vst [vmem:[#allocation2 + $0x160] sm:$0xff] %v132
    %364 = vst [vmem:[#allocation2 + $0x168] sm:$0xff] %v133
    %365 = vst [vmem:[#allocation2 + $0x170] sm:$0xff] %v134
    %366 = vst [vmem:[#allocation2 + $0x178] sm:$0xff] %v135
    %367 = vrot.lane.b32.xlu0 %v128, 127
    %v368 = vpop.permute.xlu0 %367
    %369 = vrot.lane.b32.xlu0 %v130, 127
    %v370 = vpop.permute.xlu0 %369
    %371 = vrot.lane.b32.xlu0 %v132, 127
    %v372 = vpop.permute.xlu0 %371
    %373 = vrot.lane.b32.xlu0 %v134, 127
    %v374 = vpop.permute.xlu0 %373
    %375 = vrot.lane.b32.xlu0 %v129, 127
    %v376 = vpop.permute.xlu0 %375
    %377 = vrot.lane.b32.xlu0 %v131, 127
    %v378 = vpop.permute.xlu0 %377
    %379 = vrot.lane.b32.xlu0 %v133, 127
    %v380 = vpop.permute.xlu0 %379
    %381 = vrot.lane.b32.xlu0 %v135, 127
    %v382 = vpop.permute.xlu0 %381
    %vm383 = vcmp.lt.s32.totalorder %v169, 127
    %v384 = vsel %vm383, %v368, %v376
    %v385 = vsel %vm383, %v370, %v378
    %v386 = vsel %vm383, %v372, %v380
    %v387 = vsel %vm383, %v374, %v382
    %v388 = vsel %vm383, %v376, %v368
    %v389 = vsel %vm383, %v378, %v370
    %v390 = vsel %vm383, %v380, %v372
    %v391 = vsel %vm383, %v382, %v374
    %v392 = vsel %vm88, %v384, 0.0
    %v393 = vsel %vm89, %v388, 0.0
    %v394 = vsel %vm90, %v385, 0.0
    %v395 = vsel %vm91, %v389, 0.0
    %v396 = vsel %vm92, %v386, 0.0
    %v397 = vsel %vm93, %v390, 0.0
    %v398 = vsel %vm94, %v387, 0.0
    %v399 = vsel %vm95, %v391, 0.0
    %400 = vst [vmem:[#allocation2 + $0x180] sm:$0xff] %v392
    %401 = vst [vmem:[#allocation2 + $0x188] sm:$0xff] %v393
    %402 = vst [vmem:[#allocation2 + $0x190] sm:$0xff] %v394
    %403 = vst [vmem:[#allocation2 + $0x198] sm:$0xff] %v395
    %404 = vst [vmem:[#allocation2 + $0x1a0] sm:$0xff] %v396
    %405 = vst [vmem:[#allocation2 + $0x1a8] sm:$0xff] %v397
    %406 = vst [vmem:[#allocation2 + $0x1b0] sm:$0xff] %v398
    %407 = vst [vmem:[#allocation2 + $0x1b8] sm:$0xff] %v399
    %408 = vrot.lane.b32.xlu0 %v128, 126
    %v409 = vpop.permute.xlu0 %408
    %410 = vrot.lane.b32.xlu0 %v130, 126
    %v411 = vpop.permute.xlu0 %410
    %412 = vrot.lane.b32.xlu0 %v132, 126
    %v413 = vpop.permute.xlu0 %412
    %414 = vrot.lane.b32.xlu0 %v134, 126
    %v415 = vpop.permute.xlu0 %414
    %416 = vrot.lane.b32.xlu0 %v129, 126
    %v417 = vpop.permute.xlu0 %416
    %418 = vrot.lane.b32.xlu0 %v131, 126
    %v419 = vpop.permute.xlu0 %418
    %420 = vrot.lane.b32.xlu0 %v133, 126
    %v421 = vpop.permute.xlu0 %420
    %422 = vrot.lane.b32.xlu0 %v135, 126
    %v423 = vpop.permute.xlu0 %422
    %vm424 = vcmp.lt.s32.totalorder %v169, 126
    %v425 = vsel %vm424, %v409, %v417
    %v426 = vsel %vm424, %v411, %v419
    %v427 = vsel %vm424, %v413, %v421
    %v428 = vsel %vm424, %v415, %v423
    %v429 = vsel %vm424, %v417, %v409
    %v430 = vsel %vm424, %v419, %v411
    %v431 = vsel %vm424, %v421, %v413
    %v432 = vsel %vm424, %v423, %v415
    %v433 = vsel %vm96, %v425, 0.0
    %v434 = vsel %vm97, %v429, 0.0
    %v435 = vsel %vm98, %v426, 0.0
    %v436 = vsel %vm99, %v430, 0.0
    %v437 = vsel %vm100, %v427, 0.0
    %v438 = vsel %vm101, %v431, 0.0
    %v439 = vsel %vm102, %v428, 0.0
    %v440 = vsel %vm103, %v432, 0.0
    %441 = vst [vmem:[#allocation2 + $0x1c0] sm:$0xff] %v433
    %442 = vst [vmem:[#allocation2 + $0x1c8] sm:$0xff] %v434
    %443 = vst [vmem:[#allocation2 + $0x1d0] sm:$0xff] %v435
    %444 = vst [vmem:[#allocation2 + $0x1d8] sm:$0xff] %v436
    %445 = vst [vmem:[#allocation2 + $0x1e0] sm:$0xff] %v437
    %446 = vst [vmem:[#allocation2 + $0x1e8] sm:$0xff] %v438
    %447 = vst [vmem:[#allocation2 + $0x1f0] sm:$0xff] %v439
    %448 = vst [vmem:[#allocation2 + $0x1f8] sm:$0xff] %v440
    %449 = vrot.lane.b32.xlu0 %v128, 125
    %v450 = vpop.permute.xlu0 %449
    %451 = vrot.lane.b32.xlu0 %v130, 125
    %v452 = vpop.permute.xlu0 %451
    %453 = vrot.lane.b32.xlu0 %v132, 125
    %v454 = vpop.permute.xlu0 %453
    %455 = vrot.lane.b32.xlu0 %v134, 125
    %v456 = vpop.permute.xlu0 %455
    %457 = vrot.lane.b32.xlu0 %v129, 125
    %v458 = vpop.permute.xlu0 %457
    %459 = vrot.lane.b32.xlu0 %v131, 125
    %v460 = vpop.permute.xlu0 %459
    %461 = vrot.lane.b32.xlu0 %v133, 125
    %v462 = vpop.permute.xlu0 %461
    %463 = vrot.lane.b32.xlu0 %v135, 125
    %v464 = vpop.permute.xlu0 %463
    %vm465 = vcmp.lt.s32.totalorder %v169, 125
    %v466 = vsel %vm465, %v450, %v458
    %v467 = vsel %vm465, %v452, %v460
    %v468 = vsel %vm465, %v454, %v462
    %v469 = vsel %vm465, %v456, %v464
    %v470 = vsel %vm465, %v458, %v450
    %v471 = vsel %vm465, %v460, %v452
    %v472 = vsel %vm465, %v462, %v454
    %v473 = vsel %vm465, %v464, %v456
    %v474 = vsel %vm104, %v466, 0.0
    %v475 = vsel %vm105, %v470, 0.0
    %v476 = vsel %vm106, %v467, 0.0
    %v477 = vsel %vm107, %v471, 0.0
    %v478 = vsel %vm108, %v468, 0.0
    %v479 = vsel %vm109, %v472, 0.0
    %v480 = vsel %vm110, %v469, 0.0
    %v481 = vsel %vm111, %v473, 0.0
    %482 = vst [vmem:[#allocation2 + $0x200] sm:$0xff] %v474
    %483 = vst [vmem:[#allocation2 + $0x208] sm:$0xff] %v475
    %484 = vst [vmem:[#allocation2 + $0x210] sm:$0xff] %v476
    %485 = vst [vmem:[#allocation2 + $0x218] sm:$0xff] %v477
    %486 = vst [vmem:[#allocation2 + $0x220] sm:$0xff] %v478
    %487 = vst [vmem:[#allocation2 + $0x228] sm:$0xff] %v479
    %488 = vst [vmem:[#allocation2 + $0x230] sm:$0xff] %v480
    %489 = vst [vmem:[#allocation2 + $0x238] sm:$0xff] %v481
    %490 = vrot.lane.b32.xlu0 %v128, 124
    %v491 = vpop.permute.xlu0 %490
    %492 = vrot.lane.b32.xlu0 %v130, 124
    %v493 = vpop.permute.xlu0 %492
    %494 = vrot.lane.b32.xlu0 %v132, 124
    %v495 = vpop.permute.xlu0 %494
    %496 = vrot.lane.b32.xlu0 %v134, 124
    %v497 = vpop.permute.xlu0 %496
    %498 = vrot.lane.b32.xlu0 %v129, 124
    %v499 = vpop.permute.xlu0 %498
    %500 = vrot.lane.b32.xlu0 %v131, 124
    %v501 = vpop.permute.xlu0 %500
    %502 = vrot.lane.b32.xlu0 %v133, 124
    %v503 = vpop.permute.xlu0 %502
    %504 = vrot.lane.b32.xlu0 %v135, 124
    %v505 = vpop.permute.xlu0 %504
    %vm506 = vcmp.lt.s32.totalorder %v169, 124
    %v507 = vsel %vm506, %v491, %v499
    %v508 = vsel %vm506, %v493, %v501
    %v509 = vsel %vm506, %v495, %v503
    %v510 = vsel %vm506, %v497, %v505
    %v511 = vsel %vm506, %v499, %v491
    %v512 = vsel %vm506, %v501, %v493
    %v513 = vsel %vm506, %v503, %v495
    %v514 = vsel %vm506, %v505, %v497
    %v515 = vsel %vm112, %v507, 0.0
    %v516 = vsel %vm113, %v511, 0.0
    %v517 = vsel %vm114, %v508, 0.0
    %v518 = vsel %vm115, %v512, 0.0
    %v519 = vsel %vm116, %v509, 0.0
    %v520 = vsel %vm117, %v513, 0.0
    %v521 = vsel %vm118, %v510, 0.0
    %v522 = vsel %vm119, %v514, 0.0
    %523 = vst [vmem:[#allocation2 + $0x240] sm:$0xff] %v515
    %524 = vst [vmem:[#allocation2 + $0x248] sm:$0xff] %v516
    %525 = vst [vmem:[#allocation2 + $0x250] sm:$0xff] %v517
    %526 = vst [vmem:[#allocation2 + $0x258] sm:$0xff] %v518
    %527 = vst [vmem:[#allocation2 + $0x260] sm:$0xff] %v519
    %528 = vst [vmem:[#allocation2 + $0x268] sm:$0xff] %v520
    %529 = vst [vmem:[#allocation2 + $0x270] sm:$0xff] %v521
    %530 = vst [vmem:[#allocation2 + $0x278] sm:$0xff] %v522
    %531 = vrot.lane.b32.xlu0 %v128, 123
    %v532 = vpop.permute.xlu0 %531
    %533 = vrot.lane.b32.xlu0 %v130, 123
    %v534 = vpop.permute.xlu0 %533
    %535 = vrot.lane.b32.xlu0 %v132, 123
    %v536 = vpop.permute.xlu0 %535
    %537 = vrot.lane.b32.xlu0 %v134, 123
    %v538 = vpop.permute.xlu0 %537
    %539 = vrot.lane.b32.xlu0 %v129, 123
    %v540 = vpop.permute.xlu0 %539
    %541 = vrot.lane.b32.xlu0 %v131, 123
    %v542 = vpop.permute.xlu0 %541
    %543 = vrot.lane.b32.xlu0 %v133, 123
    %v544 = vpop.permute.xlu0 %543
    %545 = vrot.lane.b32.xlu0 %v135, 123
    %v546 = vpop.permute.xlu0 %545
    %vm547 = vcmp.lt.s32.totalorder %v169, 123
    %v548 = vsel %vm547, %v532, %v540
    %v549 = vsel %vm547, %v534, %v542
    %v550 = vsel %vm547, %v536, %v544
    %v551 = vsel %vm547, %v538, %v546
    %v552 = vsel %vm547, %v540, %v532
    %v553 = vsel %vm547, %v542, %v534
    %v554 = vsel %vm547, %v544, %v536
    %v555 = vsel %vm547, %v546, %v538
    %v556 = vsel %vm120, %v548, 0.0
    %v557 = vsel %vm121, %v552, 0.0
    %v558 = vsel %vm122, %v549, 0.0
    %v559 = vsel %vm123, %v553, 0.0
    %v560 = vsel %vm124, %v550, 0.0
    %v561 = vsel %vm125, %v554, 0.0
    %v562 = vsel %vm126, %v551, 0.0
    %v563 = vsel %vm127, %v555, 0.0
    %564 = vst [vmem:[#allocation2 + $0x280] sm:$0xff] %v556
    %565 = vst [vmem:[#allocation2 + $0x288] sm:$0xff] %v557
    %566 = vst [vmem:[#allocation2 + $0x290] sm:$0xff] %v558
    %567 = vst [vmem:[#allocation2 + $0x298] sm:$0xff] %v559
    %568 = vst [vmem:[#allocation2 + $0x2a0] sm:$0xff] %v560
    %569 = vst [vmem:[#allocation2 + $0x2a8] sm:$0xff] %v561
    %570 = vst [vmem:[#allocation2 + $0x2b0] sm:$0xff] %v562
    %571 = vst [vmem:[#allocation2 + $0x2b8] sm:$0xff] %v563
    %v572 = vld [vmem:[#allocation2] sm:$0xff]
    %v573 = vld [vmem:[#allocation2 + $0x8] sm:$0xff]
    %v574 = vld [vmem:[#allocation2 + $0x10] sm:$0xff]
    %v575 = vld [vmem:[#allocation2 + $0x18] sm:$0xff]
    %v576 = vld [vmem:[#allocation2 + $0x20] sm:$0xff]
    %v577 = vld [vmem:[#allocation2 + $0x28] sm:$0xff]
    %v578 = vld [vmem:[#allocation2 + $0x30] sm:$0xff]
    %v579 = vld [vmem:[#allocation2 + $0x38] sm:$0xff]
    %v580 = vld [vmem:[#allocation2 + $0x40] sm:$0xff]
    %v581 = vld [vmem:[#allocation2 + $0x48] sm:$0xff]
    %v582 = vld [vmem:[#allocation2 + $0x50] sm:$0xff]
    %v583 = vld [vmem:[#allocation2 + $0x58] sm:$0xff]
    %v584 = vld [vmem:[#allocation2 + $0x60] sm:$0xff]
    %v585 = vld [vmem:[#allocation2 + $0x68] sm:$0xff]
    %v586 = vld [vmem:[#allocation2 + $0x70] sm:$0xff]
    %v587 = vld [vmem:[#allocation2 + $0x78] sm:$0xff]
    %v588 = vld [vmem:[#allocation2 + $0x80] sm:$0xff]
    %v589 = vld [vmem:[#allocation2 + $0x88] sm:$0xff]
    %v590 = vld [vmem:[#allocation2 + $0x90] sm:$0xff]
    %v591 = vld [vmem:[#allocation2 + $0x98] sm:$0xff]
    %v592 = vld [vmem:[#allocation2 + $0xa0] sm:$0xff]
    %v593 = vld [vmem:[#allocation2 + $0xa8] sm:$0xff]
    %v594 = vld [vmem:[#allocation2 + $0xb0] sm:$0xff]
    %v595 = vld [vmem:[#allocation2 + $0xb8] sm:$0xff]
    %v596 = vld [vmem:[#allocation2 + $0xc0] sm:$0xff]
    %v597 = vld [vmem:[#allocation2 + $0xc8] sm:$0xff]
    %v598 = vld [vmem:[#allocation2 + $0xd0] sm:$0xff]
    %v599 = vld [vmem:[#allocation2 + $0xd8] sm:$0xff]
    %v600 = vld [vmem:[#allocation2 + $0xe0] sm:$0xff]
    %v601 = vld [vmem:[#allocation2 + $0xe8] sm:$0xff]
    %v602 = vld [vmem:[#allocation2 + $0xf0] sm:$0xff]
    %v603 = vld [vmem:[#allocation2 + $0xf8] sm:$0xff]
    %v604 = vld [vmem:[#allocation2 + $0x100] sm:$0xff]
    %v605 = vld [vmem:[#allocation2 + $0x108] sm:$0xff]
    %v606 = vld [vmem:[#allocation2 + $0x110] sm:$0xff]
    %v607 = vld [vmem:[#allocation2 + $0x118] sm:$0xff]
    %v608 = vld [vmem:[#allocation2 + $0x120] sm:$0xff]
    %v609 = vld [vmem:[#allocation2 + $0x128] sm:$0xff]
    %v610 = vld [vmem:[#allocation2 + $0x130] sm:$0xff]
    %v611 = vld [vmem:[#allocation2 + $0x138] sm:$0xff]
    %v612 = vld [vmem:[#allocation2 + $0x140] sm:$0xff]
    %v613 = vld [vmem:[#allocation2 + $0x148] sm:$0xff]
    %v614 = vld [vmem:[#allocation2 + $0x150] sm:$0xff]
    %v615 = vld [vmem:[#allocation2 + $0x158] sm:$0xff]
    %v616 = vld [vmem:[#allocation2 + $0x160] sm:$0xff]
    %v617 = vld [vmem:[#allocation2 + $0x168] sm:$0xff]
    %v618 = vld [vmem:[#allocation2 + $0x170] sm:$0xff]
    %v619 = vld [vmem:[#allocation2 + $0x178] sm:$0xff]
    %v620 = vld [vmem:[#allocation2 + $0x180] sm:$0xff]
    %v621 = vld [vmem:[#allocation2 + $0x188] sm:$0xff]
    %v622 = vld [vmem:[#allocation2 + $0x190] sm:$0xff]
    %v623 = vld [vmem:[#allocation2 + $0x198] sm:$0xff]
    %v624 = vld [vmem:[#allocation2 + $0x1a0] sm:$0xff]
    %v625 = vld [vmem:[#allocation2 + $0x1a8] sm:$0xff]
    %v626 = vld [vmem:[#allocation2 + $0x1b0] sm:$0xff]
    %v627 = vld [vmem:[#allocation2 + $0x1b8] sm:$0xff]
    %v628 = vld [vmem:[#allocation2 + $0x1c0] sm:$0xff]
    %v629 = vld [vmem:[#allocation2 + $0x1c8] sm:$0xff]
    %v630 = vld [vmem:[#allocation2 + $0x1d0] sm:$0xff]
    %v631 = vld [vmem:[#allocation2 + $0x1d8] sm:$0xff]
    %v632 = vld [vmem:[#allocation2 + $0x1e0] sm:$0xff]
    %v633 = vld [vmem:[#allocation2 + $0x1e8] sm:$0xff]
    %v634 = vld [vmem:[#allocation2 + $0x1f0] sm:$0xff]
    %v635 = vld [vmem:[#allocation2 + $0x1f8] sm:$0xff]
    %v636 = vld [vmem:[#allocation2 + $0x200] sm:$0xff]
    %v637 = vld [vmem:[#allocation2 + $0x208] sm:$0xff]
    %v638 = vld [vmem:[#allocation2 + $0x210] sm:$0xff]
    %v639 = vld [vmem:[#allocation2 + $0x218] sm:$0xff]
    %v640 = vld [vmem:[#allocation2 + $0x220] sm:$0xff]
    %v641 = vld [vmem:[#allocation2 + $0x228] sm:$0xff]
    %v642 = vld [vmem:[#allocation2 + $0x230] sm:$0xff]
    %v643 = vld [vmem:[#allocation2 + $0x238] sm:$0xff]
    %v644 = vld [vmem:[#allocation2 + $0x240] sm:$0xff]
    %v645 = vld [vmem:[#allocation2 + $0x248] sm:$0xff]
    %v646 = vld [vmem:[#allocation2 + $0x250] sm:$0xff]
    %v647 = vld [vmem:[#allocation2 + $0x258] sm:$0xff]
    %v648 = vld [vmem:[#allocation2 + $0x260] sm:$0xff]
    %v649 = vld [vmem:[#allocation2 + $0x268] sm:$0xff]
    %v650 = vld [vmem:[#allocation2 + $0x270] sm:$0xff]
    %v651 = vld [vmem:[#allocation2 + $0x278] sm:$0xff]
    %v652 = vld [vmem:[#allocation2 + $0x280] sm:$0xff]
    %v653 = vld [vmem:[#allocation2 + $0x288] sm:$0xff]
    %v654 = vld [vmem:[#allocation2 + $0x290] sm:$0xff]
    %v655 = vld [vmem:[#allocation2 + $0x298] sm:$0xff]
    %v656 = vld [vmem:[#allocation2 + $0x2a0] sm:$0xff]
    %v657 = vld [vmem:[#allocation2 + $0x2a8] sm:$0xff]
    %v658 = vld [vmem:[#allocation2 + $0x2b0] sm:$0xff]
    %v659 = vld [vmem:[#allocation2 + $0x2b8] sm:$0xff]
    %661 = vset.pattern.permute.xlu0 0
    %662 = vperm.xlu0 %661, %v148
    %v663 = vpop.permute.xlu0 %662
    %666 = vset.pattern.permute.xlu0 0
    %667 = vperm.xlu0 %666, %v149
    %v668 = vpop.permute.xlu0 %667
    %671 = vset.pattern.permute.xlu0 0
    %672 = vperm.xlu0 %671, %v150
    %v673 = vpop.permute.xlu0 %672
    %676 = vset.pattern.permute.xlu0 0
    %677 = vperm.xlu0 %676, %v151
    %v678 = vpop.permute.xlu0 %677
    %vm680 = vcmask 785408
    %v682 = vsel %vm680, %v138, 0
    %v685 = vsel %vm680, %v141, 0
    %v688 = vsel %vm680, %v144, 0
    %v691 = vsel %vm680, %v147, 0
    %693 = vmatprep.subr.mxu0 %v573
    %694 = vmatpush1.msra.mxu0 %v572
    %695 = vmatprep.subr.mxu0 %v575
    %696 = vmatpush1.msra.mxu0 %v574
    %697 = vmatprep.subr.mxu0 %v577
    %698 = vmatpush1.msra.mxu0 %v576
    %699 = vmatprep.subr.mxu0 %v579
    %700 = vmatpush1.msra.mxu0 %v578
    %701 = vmatprep.subr.mxu0 %v581
    %702 = vmatpush1.msra.mxu0 %v580
    %703 = vmatprep.subr.mxu0 %v583
    %704 = vmatpush1.msra.mxu0 %v582
    %705 = vmatprep.subr.mxu0 %v585
    %706 = vmatpush1.msra.mxu0 %v584
    %707 = vmatprep.subr.mxu0 %v587
    %708 = vmatpush1.msra.mxu0 %v586
    %709 = vmatprep.subr.mxu0 %v589
    %710 = vmatpush1.msra.mxu0 %v588
    %711 = vmatprep.subr.mxu0 %v591
    %712 = vmatpush1.msra.mxu0 %v590
    %713 = vmatprep.subr.mxu0 %v593
    %714 = vmatpush1.msra.mxu0 %v592
    %715 = vmatprep.subr.mxu0 %v595
    %716 = vmatpush1.msra.mxu0 %v594
    %717 = vmatprep.subr.mxu0 %v597
    %718 = vmatpush1.msra.mxu0 %v596
    %719 = vmatprep.subr.mxu0 %v599
    %720 = vmatpush1.msra.mxu0 %v598
    %721 = vmatprep.subr.mxu0 %v601
    %722 = vmatpush1.msra.mxu0 %v600
    %723 = vmatprep.subr.mxu0 %v603
    %724 = vmatpush1.msra.mxu0 %v602
    %725 = vmatprep.subr.mxu0 %v605
    %726 = vmatpush1.msra.mxu0 %v604
    %727 = vmatprep.subr.mxu0 %v607
    %728 = vmatpush1.msra.mxu0 %v606
    %729 = vmatprep.subr.mxu0 %v609
    %730 = vmatpush1.msra.mxu0 %v608
    %731 = vmatprep.subr.mxu0 %v611
    %732 = vmatpush1.msra.mxu0 %v610
    %733 = vmatprep.subr.mxu0 %v613
    %734 = vmatpush1.msra.mxu0 %v612
    %735 = vmatprep.subr.mxu0 %v615
    %736 = vmatpush1.msra.mxu0 %v614
    %737 = vmatprep.subr.mxu0 %v617
    %738 = vmatpush1.msra.mxu0 %v616
    %739 = vmatprep.subr.mxu0 %v619
    %740 = vmatpush1.msra.mxu0 %v618
    %741 = vmatprep.subr.mxu0 %v621
    %742 = vmatpush1.msra.mxu0 %v620
    %743 = vmatprep.subr.mxu0 %v623
    %744 = vmatpush1.msra.mxu0 %v622
    %745 = vmatprep.subr.mxu0 %v625
    %746 = vmatpush1.msra.mxu0 %v624
    %747 = vmatprep.subr.mxu0 %v627
    %748 = vmatpush1.msra.mxu0 %v626
    %749 = vmatprep.subr.mxu0 %v629
    %750 = vmatpush1.msra.mxu0 %v628
    %751 = vmatprep.subr.mxu0 %v631
    %752 = vmatpush1.msra.mxu0 %v630
    %753 = vmatprep.subr.mxu0 %v633
    %754 = vmatpush1.msra.mxu0 %v632
    %755 = vmatprep.subr.mxu0 %v635
    %756 = vmatpush1.msra.mxu0 %v634
    %757 = vmatprep.mubr.f32.mxu0 %v137
    %758 = vmatmul.mubr.f32.gmra.mrb[0].mxu0 %v136
    %v759 = vpop.f32.mrb[0].mxu0
    %v760 = vadd.f32 %v663, %v759
    %v761 = vpop.f32.mrb[0].mxu0
    %v762 = vadd.f32 %v663, %v761
    %763 = vmatprep.mubr.f32.mxu0 %v140
    %764 = vmatmul.mubr.f32.gmra.mrb[0].mxu0 %v139
    %v765 = vpop.f32.mrb[0].mxu0
    %v766 = vadd.f32 %v668, %v765
    %v767 = vpop.f32.mrb[0].mxu0
    %v768 = vadd.f32 %v668, %v767
    %769 = vmatprep.mubr.f32.mxu0 %v143
    %770 = vmatmul.mubr.f32.gmra.mrb[0].mxu0 %v142
    %v771 = vpop.f32.mrb[0].mxu0
    %v772 = vadd.f32 %v673, %v771
    %v773 = vpop.f32.mrb[0].mxu0
    %v774 = vadd.f32 %v673, %v773
    %775 = vmatprep.mubr.f32.mxu0 %v146
    %776 = vmatmul.mubr.f32.gmra.mrb[0].mxu0 %v145
    %v777 = vpop.f32.mrb[0].mxu0
    %v778 = vadd.f32 %v678, %v777
    %v779 = vpop.f32.mrb[0].mxu0
    %v780 = vadd.f32 %v678, %v779
    %781 = vdwg.mxu0
    %782 = vmatprep.subr.mxu0 %v637
    %783 = vmatpush1.msra.mxu0 %v636
    %784 = vmatprep.subr.mxu0 %v639
    %785 = vmatpush1.msra.mxu0 %v638
    %786 = vmatprep.subr.mxu0 %v641
    %787 = vmatpush1.msra.mxu0 %v640
    %788 = vmatprep.subr.mxu0 %v643
    %789 = vmatpush1.msra.mxu0 %v642
    %790 = vmatprep.subr.mxu0 %v645
    %791 = vmatpush1.msra.mxu0 %v644
    %792 = vmatprep.subr.mxu0 %v647
    %793 = vmatpush1.msra.mxu0 %v646
    %794 = vmatprep.subr.mxu0 %v649
    %795 = vmatpush1.msra.mxu0 %v648
    %796 = vmatprep.subr.mxu0 %v651
    %797 = vmatpush1.msra.mxu0 %v650
    %798 = vmatprep.subr.mxu0 %v653
    %799 = vmatpush1.msra.mxu0 %v652
    %800 = vmatprep.subr.mxu0 %v655
    %801 = vmatpush1.msra.mxu0 %v654
    %802 = vmatprep.subr.mxu0 %v657
    %803 = vmatpush1.msra.mxu0 %v656
    %804 = vmatprep.subr.mxu0 %v659
    %805 = vmatpush1.msra.mxu0 %v658
    %806 = vmatprep.subr.mxu0 0.0
    %807 = vmatpush1.msra.mxu0 0.0
    %808 = vmatprep.subr.mxu0 0.0
    %809 = vmatpush1.msra.mxu0 0.0
    %810 = vmatprep.subr.mxu0 0.0
    %811 = vmatpush1.msra.mxu0 0.0
    %812 = vmatprep.subr.mxu0 0.0
    %813 = vmatpush1.msra.mxu0 0.0
    %814 = vmatprep.subr.mxu0 0.0
    %815 = vmatpush1.msra.mxu0 0.0
    %816 = vmatprep.subr.mxu0 0.0
    %817 = vmatpush1.msra.mxu0 0.0
    %818 = vmatprep.subr.mxu0 0.0
    %819 = vmatpush1.msra.mxu0 0.0
    %820 = vmatprep.subr.mxu0 0.0
    %821 = vmatpush1.msra.mxu0 0.0
    %822 = vmatprep.subr.mxu0 0.0
    %823 = vmatpush1.msra.mxu0 0.0
    %824 = vmatprep.subr.mxu0 0.0
    %825 = vmatpush1.msra.mxu0 0.0
    %826 = vmatprep.subr.mxu0 0.0
    %827 = vmatpush1.msra.mxu0 0.0
    %828 = vmatprep.subr.mxu0 0.0
    %829 = vmatpush1.msra.mxu0 0.0
    %830 = vmatprep.subr.mxu0 0.0
    %831 = vmatpush1.msra.mxu0 0.0
    %832 = vmatprep.subr.mxu0 0.0
    %833 = vmatpush1.msra.mxu0 0.0
    %834 = vmatprep.subr.mxu0 0.0
    %835 = vmatpush1.msra.mxu0 0.0
    %836 = vmatprep.subr.mxu0 0.0
    %837 = vmatpush1.msra.mxu0 0.0
    %838 = vmatprep.subr.mxu0 0.0
    %839 = vmatpush1.msra.mxu0 0.0
    %840 = vmatprep.subr.mxu0 0.0
    %841 = vmatpush1.msra.mxu0 0.0
    %842 = vmatprep.subr.mxu0 0.0
    %843 = vmatpush1.msra.mxu0 0.0
    %844 = vmatprep.subr.mxu0 0.0
    %845 = vmatpush1.msra.mxu0 0.0
    %846 = vmatprep.mubr.f32.mxu0 0.0
    %847 = vmatmul.mubr.f32.gmra.mrb[0].mxu0 %v682
    %v848 = vpop.f32.mrb[0].mxu0
    %v849 = vadd.f32 %v760, %v848
    %v850 = vpop.f32.mrb[0].mxu0
    %v851 = vadd.f32 %v762, %v850
    %852 = vmatprep.mubr.f32.mxu0 0.0
    %853 = vmatmul.mubr.f32.gmra.mrb[0].mxu0 %v685
    %v854 = vpop.f32.mrb[0].mxu0
    %v855 = vadd.f32 %v766, %v854
    %v856 = vpop.f32.mrb[0].mxu0
    %v857 = vadd.f32 %v768, %v856
    %858 = vmatprep.mubr.f32.mxu0 0.0
    %859 = vmatmul.mubr.f32.gmra.mrb[0].mxu0 %v688
    %v860 = vpop.f32.mrb[0].mxu0
    %v861 = vadd.f32 %v772, %v860
    %v862 = vpop.f32.mrb[0].mxu0
    %v863 = vadd.f32 %v774, %v862
    %864 = vmatprep.mubr.f32.mxu0 0.0
    %865 = vmatmul.mubr.f32.gmra.mrb[0].mxu0 %v691
    %v866 = vpop.f32.mrb[0].mxu0
    %v867 = vadd.f32 %v778, %v866
    %v868 = vpop.f32.mrb[0].mxu0
    %v869 = vadd.f32 %v780, %v868
    %870 = vdwg.mxu0
    %v871 = vmax.f32 %v849, 0.0
    %v872 = vmax.f32 %v851, 0.0
    %v873 = vmax.f32 %v855, 0.0
    %v874 = vmax.f32 %v857, 0.0
    %v875 = vmax.f32 %v861, 0.0
    %v876 = vmax.f32 %v863, 0.0
    %v877 = vmax.f32 %v867, 0.0
    %v878 = vmax.f32 %v869, 0.0
    %s879 = scalar_lea.vmem [#allocation4], 96
    %v880 = vld [vmem:[%s879] sm:$0xff]
    %v881 = vld [vmem:[%s879 + $0x8] sm:$0xff]
    %v882 = vld [vmem:[%s879 + $0x10] sm:$0xff]
    %v883 = vld [vmem:[%s879 + $0x18] sm:$0xff]
    %v884 = vld [vmem:[%s879 + $0x20] sm:$0xff]
    %v885 = vld [vmem:[%s879 + $0x28] sm:$0xff]
    %v886 = vld [vmem:[%s879 + $0x30] sm:$0xff]
    %v887 = vld [vmem:[%s879 + $0x38] sm:$0xff]
    %v888 = vld [vmem:[%s879 + $0x40] sm:$0xff]
    %v889 = vld [vmem:[%s879 + $0x48] sm:$0xff]
    %v890 = vld [vmem:[%s879 + $0x50] sm:$0xff]
    %v891 = vld [vmem:[%s879 + $0x58] sm:$0xff]
    %s892 = scalar_lea.vmem %s3, 32
    %v893 = vld [vmem:[%s892] sm:$0xff]
    %v894 = vld [vmem:[%s892 + $0x8] sm:$0xff]
    %v895 = vld [vmem:[%s892 + $0x10] sm:$0xff]
    %v896 = vld [vmem:[%s892 + $0x18] sm:$0xff]
    %897 = vrot.lane.b32.xlu0 %v871, 5
    %v898 = vpop.permute.xlu0 %897
    %899 = vrot.lane.b32.xlu0 %v873, 5
    %v900 = vpop.permute.xlu0 %899
    %901 = vrot.lane.b32.xlu0 %v875, 5
    %v902 = vpop.permute.xlu0 %901
    %903 = vrot.lane.b32.xlu0 %v877, 5
    %v904 = vpop.permute.xlu0 %903
    %905 = vrot.lane.b32.xlu0 %v872, 5
    %v906 = vpop.permute.xlu0 %905
    %907 = vrot.lane.b32.xlu0 %v874, 5
    %v908 = vpop.permute.xlu0 %907
    %909 = vrot.lane.b32.xlu0 %v876, 5
    %v910 = vpop.permute.xlu0 %909
    %911 = vrot.lane.b32.xlu0 %v878, 5
    %v912 = vpop.permute.xlu0 %911
    %v913 = vsel %vm170, %v898, %v906
    %v914 = vsel %vm170, %v900, %v908
    %v915 = vsel %vm170, %v902, %v910
    %v916 = vsel %vm170, %v904, %v912
    %v917 = vsel %vm170, %v906, %v898
    %v918 = vsel %vm170, %v908, %v900
    %v919 = vsel %vm170, %v910, %v902
    %v920 = vsel %vm170, %v912, %v904
    %v921 = vsel %vm48, %v917, 0.0
    %v922 = vsel %vm49, %v913, 0.0
    %v923 = vsel %vm50, %v918, 0.0
    %v924 = vsel %vm51, %v914, 0.0
    %v925 = vsel %vm52, %v919, 0.0
    %v926 = vsel %vm53, %v915, 0.0
    %v927 = vsel %vm54, %v920, 0.0
    %v928 = vsel %vm55, %v916, 0.0
    %929 = vst [vmem:[#allocation2] sm:$0xff] %v921
    %930 = vst [vmem:[#allocation2 + $0x8] sm:$0xff] %v922
    %931 = vst [vmem:[#allocation2 + $0x10] sm:$0xff] %v923
    %932 = vst [vmem:[#allocation2 + $0x18] sm:$0xff] %v924
    %933 = vst [vmem:[#allocation2 + $0x20] sm:$0xff] %v925
    %934 = vst [vmem:[#allocation2 + $0x28] sm:$0xff] %v926
    %935 = vst [vmem:[#allocation2 + $0x30] sm:$0xff] %v927
    %936 = vst [vmem:[#allocation2 + $0x38] sm:$0xff] %v928
    %937 = vrot.lane.b32.xlu0 %v871, 4
    %v938 = vpop.permute.xlu0 %937
    %939 = vrot.lane.b32.xlu0 %v873, 4
    %v940 = vpop.permute.xlu0 %939
    %941 = vrot.lane.b32.xlu0 %v875, 4
    %v942 = vpop.permute.xlu0 %941
    %943 = vrot.lane.b32.xlu0 %v877, 4
    %v944 = vpop.permute.xlu0 %943
    %945 = vrot.lane.b32.xlu0 %v872, 4
    %v946 = vpop.permute.xlu0 %945
    %947 = vrot.lane.b32.xlu0 %v874, 4
    %v948 = vpop.permute.xlu0 %947
    %949 = vrot.lane.b32.xlu0 %v876, 4
    %v950 = vpop.permute.xlu0 %949
    %951 = vrot.lane.b32.xlu0 %v878, 4
    %v952 = vpop.permute.xlu0 %951
    %v953 = vsel %vm211, %v938, %v946
    %v954 = vsel %vm211, %v940, %v948
    %v955 = vsel %vm211, %v942, %v950
    %v956 = vsel %vm211, %v944, %v952
    %v957 = vsel %vm211, %v946, %v938
    %v958 = vsel %vm211, %v948, %v940
    %v959 = vsel %vm211, %v950, %v942
    %v960 = vsel %vm211, %v952, %v944
    %v961 = vsel %vm56, %v957, 0.0
    %v962 = vsel %vm57, %v953, 0.0
    %v963 = vsel %vm58, %v958, 0.0
    %v964 = vsel %vm59, %v954, 0.0
    %v965 = vsel %vm60, %v959, 0.0
    %v966 = vsel %vm61, %v955, 0.0
    %v967 = vsel %vm62, %v960, 0.0
    %v968 = vsel %vm63, %v956, 0.0
    %969 = vst [vmem:[#allocation2 + $0x40] sm:$0xff] %v961
    %970 = vst [vmem:[#allocation2 + $0x48] sm:$0xff] %v962
    %971 = vst [vmem:[#allocation2 + $0x50] sm:$0xff] %v963
    %972 = vst [vmem:[#allocation2 + $0x58] sm:$0xff] %v964
    %973 = vst [vmem:[#allocation2 + $0x60] sm:$0xff] %v965
    %974 = vst [vmem:[#allocation2 + $0x68] sm:$0xff] %v966
    %975 = vst [vmem:[#allocation2 + $0x70] sm:$0xff] %v967
    %976 = vst [vmem:[#allocation2 + $0x78] sm:$0xff] %v968
    %977 = vrot.lane.b32.xlu0 %v871, 3
    %v978 = vpop.permute.xlu0 %977
    %979 = vrot.lane.b32.xlu0 %v873, 3
    %v980 = vpop.permute.xlu0 %979
    %981 = vrot.lane.b32.xlu0 %v875, 3
    %v982 = vpop.permute.xlu0 %981
    %983 = vrot.lane.b32.xlu0 %v877, 3
    %v984 = vpop.permute.xlu0 %983
    %985 = vrot.lane.b32.xlu0 %v872, 3
    %v986 = vpop.permute.xlu0 %985
    %987 = vrot.lane.b32.xlu0 %v874, 3
    %v988 = vpop.permute.xlu0 %987
    %989 = vrot.lane.b32.xlu0 %v876, 3
    %v990 = vpop.permute.xlu0 %989
    %991 = vrot.lane.b32.xlu0 %v878, 3
    %v992 = vpop.permute.xlu0 %991
    %v993 = vsel %vm252, %v978, %v986
    %v994 = vsel %vm252, %v980, %v988
    %v995 = vsel %vm252, %v982, %v990
    %v996 = vsel %vm252, %v984, %v992
    %v997 = vsel %vm252, %v986, %v978
    %v998 = vsel %vm252, %v988, %v980
    %v999 = vsel %vm252, %v990, %v982
    %v1000 = vsel %vm252, %v992, %v984
    %v1001 = vsel %vm64, %v997, 0.0
    %v1002 = vsel %vm65, %v993, 0.0
    %v1003 = vsel %vm66, %v998, 0.0
    %v1004 = vsel %vm67, %v994, 0.0
    %v1005 = vsel %vm68, %v999, 0.0
    %v1006 = vsel %vm69, %v995, 0.0
    %v1007 = vsel %vm70, %v1000, 0.0
    %v1008 = vsel %vm71, %v996, 0.0
    %1009 = vst [vmem:[#allocation2 + $0x80] sm:$0xff] %v1001
    %1010 = vst [vmem:[#allocation2 + $0x88] sm:$0xff] %v1002
    %1011 = vst [vmem:[#allocation2 + $0x90] sm:$0xff] %v1003
    %1012 = vst [vmem:[#allocation2 + $0x98] sm:$0xff] %v1004
    %1013 = vst [vmem:[#allocation2 + $0xa0] sm:$0xff] %v1005
    %1014 = vst [vmem:[#allocation2 + $0xa8] sm:$0xff] %v1006
    %1015 = vst [vmem:[#allocation2 + $0xb0] sm:$0xff] %v1007
    %1016 = vst [vmem:[#allocation2 + $0xb8] sm:$0xff] %v1008
    %1017 = vrot.lane.b32.xlu0 %v871, 2
    %v1018 = vpop.permute.xlu0 %1017
    %1019 = vrot.lane.b32.xlu0 %v873, 2
    %v1020 = vpop.permute.xlu0 %1019
    %1021 = vrot.lane.b32.xlu0 %v875, 2
    %v1022 = vpop.permute.xlu0 %1021
    %1023 = vrot.lane.b32.xlu0 %v877, 2
    %v1024 = vpop.permute.xlu0 %1023
    %1025 = vrot.lane.b32.xlu0 %v872, 2
    %v1026 = vpop.permute.xlu0 %1025
    %1027 = vrot.lane.b32.xlu0 %v874, 2
    %v1028 = vpop.permute.xlu0 %1027
    %1029 = vrot.lane.b32.xlu0 %v876, 2
    %v1030 = vpop.permute.xlu0 %1029
    %1031 = vrot.lane.b32.xlu0 %v878, 2
    %v1032 = vpop.permute.xlu0 %1031
    %v1033 = vsel %vm293, %v1018, %v1026
    %v1034 = vsel %vm293, %v1020, %v1028
    %v1035 = vsel %vm293, %v1022, %v1030
    %v1036 = vsel %vm293, %v1024, %v1032
    %v1037 = vsel %vm293, %v1026, %v1018
    %v1038 = vsel %vm293, %v1028, %v1020
    %v1039 = vsel %vm293, %v1030, %v1022
    %v1040 = vsel %vm293, %v1032, %v1024
    %v1041 = vsel %vm72, %v1037, 0.0
    %v1042 = vsel %vm73, %v1033, 0.0
    %v1043 = vsel %vm74, %v1038, 0.0
    %v1044 = vsel %vm75, %v1034, 0.0
    %v1045 = vsel %vm76, %v1039, 0.0
    %v1046 = vsel %vm77, %v1035, 0.0
    %v1047 = vsel %vm78, %v1040, 0.0
    %v1048 = vsel %vm79, %v1036, 0.0
    %1049 = vst [vmem:[#allocation2 + $0xc0] sm:$0xff] %v1041
    %1050 = vst [vmem:[#allocation2 + $0xc8] sm:$0xff] %v1042
    %1051 = vst [vmem:[#allocation2 + $0xd0] sm:$0xff] %v1043
    %1052 = vst [vmem:[#allocation2 + $0xd8] sm:$0xff] %v1044
    %1053 = vst [vmem:[#allocation2 + $0xe0] sm:$0xff] %v1045
    %1054 = vst [vmem:[#allocation2 + $0xe8] sm:$0xff] %v1046
    %1055 = vst [vmem:[#allocation2 + $0xf0] sm:$0xff] %v1047
    %1056 = vst [vmem:[#allocation2 + $0xf8] sm:$0xff] %v1048
    %1057 = vrot.lane.b32.xlu0 %v871, 1
    %v1058 = vpop.permute.xlu0 %1057
    %1059 = vrot.lane.b32.xlu0 %v873, 1
    %v1060 = vpop.permute.xlu0 %1059
    %1061 = vrot.lane.b32.xlu0 %v875, 1
    %v1062 = vpop.permute.xlu0 %1061
    %1063 = vrot.lane.b32.xlu0 %v877, 1
    %v1064 = vpop.permute.xlu0 %1063
    %1065 = vrot.lane.b32.xlu0 %v872, 1
    %v1066 = vpop.permute.xlu0 %1065
    %1067 = vrot.lane.b32.xlu0 %v874, 1
    %v1068 = vpop.permute.xlu0 %1067
    %1069 = vrot.lane.b32.xlu0 %v876, 1
    %v1070 = vpop.permute.xlu0 %1069
    %1071 = vrot.lane.b32.xlu0 %v878, 1
    %v1072 = vpop.permute.xlu0 %1071
    %v1073 = vsel %vm334, %v1058, %v1066
    %v1074 = vsel %vm334, %v1060, %v1068
    %v1075 = vsel %vm334, %v1062, %v1070
    %v1076 = vsel %vm334, %v1064, %v1072
    %v1077 = vsel %vm334, %v1066, %v1058
    %v1078 = vsel %vm334, %v1068, %v1060
    %v1079 = vsel %vm334, %v1070, %v1062
    %v1080 = vsel %vm334, %v1072, %v1064
    %v1081 = vsel %vm80, %v1077, 0.0
    %v1082 = vsel %vm81, %v1073, 0.0
    %v1083 = vsel %vm82, %v1078, 0.0
    %v1084 = vsel %vm83, %v1074, 0.0
    %v1085 = vsel %vm84, %v1079, 0.0
    %v1086 = vsel %vm85, %v1075, 0.0
    %v1087 = vsel %vm86, %v1080, 0.0
    %v1088 = vsel %vm87, %v1076, 0.0
    %1089 = vst [vmem:[#allocation2 + $0x100] sm:$0xff] %v1081
    %1090 = vst [vmem:[#allocation2 + $0x108] sm:$0xff] %v1082
    %1091 = vst [vmem:[#allocation2 + $0x110] sm:$0xff] %v1083
    %1092 = vst [vmem:[#allocation2 + $0x118] sm:$0xff] %v1084
    %1093 = vst [vmem:[#allocation2 + $0x120] sm:$0xff] %v1085
    %1094 = vst [vmem:[#allocation2 + $0x128] sm:$0xff] %v1086
    %1095 = vst [vmem:[#allocation2 + $0x130] sm:$0xff] %v1087
    %1096 = vst [vmem:[#allocation2 + $0x138] sm:$0xff] %v1088
    %1097 = vst [vmem:[#allocation2 + $0x140] sm:$0xff] %v871
    %1098 = vst [vmem:[#allocation2 + $0x148] sm:$0xff] %v872
    %1099 = vst [vmem:[#allocation2 + $0x150] sm:$0xff] %v873
    %1100 = vst [vmem:[#allocation2 + $0x158] sm:$0xff] %v874
    %1101 = vst [vmem:[#allocation2 + $0x160] sm:$0xff] %v875
    %1102 = vst [vmem:[#allocation2 + $0x168] sm:$0xff] %v876
    %1103 = vst [vmem:[#allocation2 + $0x170] sm:$0xff] %v877
    %1104 = vst [vmem:[#allocation2 + $0x178] sm:$0xff] %v878
    %1105 = vrot.lane.b32.xlu0 %v871, 127
    %v1106 = vpop.permute.xlu0 %1105
    %1107 = vrot.lane.b32.xlu0 %v873, 127
    %v1108 = vpop.permute.xlu0 %1107
    %1109 = vrot.lane.b32.xlu0 %v875, 127
    %v1110 = vpop.permute.xlu0 %1109
    %1111 = vrot.lane.b32.xlu0 %v877, 127
    %v1112 = vpop.permute.xlu0 %1111
    %1113 = vrot.lane.b32.xlu0 %v872, 127
    %v1114 = vpop.permute.xlu0 %1113
    %1115 = vrot.lane.b32.xlu0 %v874, 127
    %v1116 = vpop.permute.xlu0 %1115
    %1117 = vrot.lane.b32.xlu0 %v876, 127
    %v1118 = vpop.permute.xlu0 %1117
    %1119 = vrot.lane.b32.xlu0 %v878, 127
    %v1120 = vpop.permute.xlu0 %1119
    %v1121 = vsel %vm383, %v1106, %v1114
    %v1122 = vsel %vm383, %v1108, %v1116
    %v1123 = vsel %vm383, %v1110, %v1118
    %v1124 = vsel %vm383, %v1112, %v1120
    %v1125 = vsel %vm383, %v1114, %v1106
    %v1126 = vsel %vm383, %v1116, %v1108
    %v1127 = vsel %vm383, %v1118, %v1110
    %v1128 = vsel %vm383, %v1120, %v1112
    %v1129 = vsel %vm88, %v1121, 0.0
    %v1130 = vsel %vm89, %v1125, 0.0
    %v1131 = vsel %vm90, %v1122, 0.0
    %v1132 = vsel %vm91, %v1126, 0.0
    %v1133 = vsel %vm92, %v1123, 0.0
    %v1134 = vsel %vm93, %v1127, 0.0
    %v1135 = vsel %vm94, %v1124, 0.0
    %v1136 = vsel %vm95, %v1128, 0.0
    %1137 = vst [vmem:[#allocation2 + $0x180] sm:$0xff] %v1129
    %1138 = vst [vmem:[#allocation2 + $0x188] sm:$0xff] %v1130
    %1139 = vst [vmem:[#allocation2 + $0x190] sm:$0xff] %v1131
    %1140 = vst [vmem:[#allocation2 + $0x198] sm:$0xff] %v1132
    %1141 = vst [vmem:[#allocation2 + $0x1a0] sm:$0xff] %v1133
    %1142 = vst [vmem:[#allocation2 + $0x1a8] sm:$0xff] %v1134
    %1143 = vst [vmem:[#allocation2 + $0x1b0] sm:$0xff] %v1135
    %1144 = vst [vmem:[#allocation2 + $0x1b8] sm:$0xff] %v1136
    %1145 = vrot.lane.b32.xlu0 %v871, 126
    %v1146 = vpop.permute.xlu0 %1145
    %1147 = vrot.lane.b32.xlu0 %v873, 126
    %v1148 = vpop.permute.xlu0 %1147
    %1149 = vrot.lane.b32.xlu0 %v875, 126
    %v1150 = vpop.permute.xlu0 %1149
    %1151 = vrot.lane.b32.xlu0 %v877, 126
    %v1152 = vpop.permute.xlu0 %1151
    %1153 = vrot.lane.b32.xlu0 %v872, 126
    %v1154 = vpop.permute.xlu0 %1153
    %1155 = vrot.lane.b32.xlu0 %v874, 126
    %v1156 = vpop.permute.xlu0 %1155
    %1157 = vrot.lane.b32.xlu0 %v876, 126
    %v1158 = vpop.permute.xlu0 %1157
    %1159 = vrot.lane.b32.xlu0 %v878, 126
    %v1160 = vpop.permute.xlu0 %1159
    %v1161 = vsel %vm424, %v1146, %v1154
    %v1162 = vsel %vm424, %v1148, %v1156
    %v1163 = vsel %vm424, %v1150, %v1158
    %v1164 = vsel %vm424, %v1152, %v1160
    %v1165 = vsel %vm424, %v1154, %v1146
    %v1166 = vsel %vm424, %v1156, %v1148
    %v1167 = vsel %vm424, %v1158, %v1150
    %v1168 = vsel %vm424, %v1160, %v1152
    %v1169 = vsel %vm96, %v1161, 0.0
    %v1170 = vsel %vm97, %v1165, 0.0
    %v1171 = vsel %vm98, %v1162, 0.0
    %v1172 = vsel %vm99, %v1166, 0.0
    %v1173 = vsel %vm100, %v1163, 0.0
    %v1174 = vsel %vm101, %v1167, 0.0
    %v1175 = vsel %vm102, %v1164, 0.0
    %v1176 = vsel %vm103, %v1168, 0.0
    %1177 = vst [vmem:[#allocation2 + $0x1c0] sm:$0xff] %v1169
    %1178 = vst [vmem:[#allocation2 + $0x1c8] sm:$0xff] %v1170
    %1179 = vst [vmem:[#allocation2 + $0x1d0] sm:$0xff] %v1171
    %1180 = vst [vmem:[#allocation2 + $0x1d8] sm:$0xff] %v1172
    %1181 = vst [vmem:[#allocation2 + $0x1e0] sm:$0xff] %v1173
    %1182 = vst [vmem:[#allocation2 + $0x1e8] sm:$0xff] %v1174
    %1183 = vst [vmem:[#allocation2 + $0x1f0] sm:$0xff] %v1175
    %1184 = vst [vmem:[#allocation2 + $0x1f8] sm:$0xff] %v1176
    %1185 = vrot.lane.b32.xlu0 %v871, 125
    %v1186 = vpop.permute.xlu0 %1185
    %1187 = vrot.lane.b32.xlu0 %v873, 125
    %v1188 = vpop.permute.xlu0 %1187
    %1189 = vrot.lane.b32.xlu0 %v875, 125
    %v1190 = vpop.permute.xlu0 %1189
    %1191 = vrot.lane.b32.xlu0 %v877, 125
    %v1192 = vpop.permute.xlu0 %1191
    %1193 = vrot.lane.b32.xlu0 %v872, 125
    %v1194 = vpop.permute.xlu0 %1193
    %1195 = vrot.lane.b32.xlu0 %v874, 125
    %v1196 = vpop.permute.xlu0 %1195
    %1197 = vrot.lane.b32.xlu0 %v876, 125
    %v1198 = vpop.permute.xlu0 %1197
    %1199 = vrot.lane.b32.xlu0 %v878, 125
    %v1200 = vpop.permute.xlu0 %1199
    %v1201 = vsel %vm465, %v1186, %v1194
    %v1202 = vsel %vm465, %v1188, %v1196
    %v1203 = vsel %vm465, %v1190, %v1198
    %v1204 = vsel %vm465, %v1192, %v1200
    %v1205 = vsel %vm465, %v1194, %v1186
    %v1206 = vsel %vm465, %v1196, %v1188
    %v1207 = vsel %vm465, %v1198, %v1190
    %v1208 = vsel %vm465, %v1200, %v1192
    %v1209 = vsel %vm104, %v1201, 0.0
    %v1210 = vsel %vm105, %v1205, 0.0
    %v1211 = vsel %vm106, %v1202, 0.0
    %v1212 = vsel %vm107, %v1206, 0.0
    %v1213 = vsel %vm108, %v1203, 0.0
    %v1214 = vsel %vm109, %v1207, 0.0
    %v1215 = vsel %vm110, %v1204, 0.0
    %v1216 = vsel %vm111, %v1208, 0.0
    %1217 = vst [vmem:[#allocation2 + $0x200] sm:$0xff] %v1209
    %1218 = vst [vmem:[#allocation2 + $0x208] sm:$0xff] %v1210
    %1219 = vst [vmem:[#allocation2 + $0x210] sm:$0xff] %v1211
    %1220 = vst [vmem:[#allocation2 + $0x218] sm:$0xff] %v1212
    %1221 = vst [vmem:[#allocation2 + $0x220] sm:$0xff] %v1213
    %1222 = vst [vmem:[#allocation2 + $0x228] sm:$0xff] %v1214
    %1223 = vst [vmem:[#allocation2 + $0x230] sm:$0xff] %v1215
    %1224 = vst [vmem:[#allocation2 + $0x238] sm:$0xff] %v1216
    %1225 = vrot.lane.b32.xlu0 %v871, 124
    %v1226 = vpop.permute.xlu0 %1225
    %1227 = vrot.lane.b32.xlu0 %v873, 124
    %v1228 = vpop.permute.xlu0 %1227
    %1229 = vrot.lane.b32.xlu0 %v875, 124
    %v1230 = vpop.permute.xlu0 %1229
    %1231 = vrot.lane.b32.xlu0 %v877, 124
    %v1232 = vpop.permute.xlu0 %1231
    %1233 = vrot.lane.b32.xlu0 %v872, 124
    %v1234 = vpop.permute.xlu0 %1233
    %1235 = vrot.lane.b32.xlu0 %v874, 124
    %v1236 = vpop.permute.xlu0 %1235
    %1237 = vrot.lane.b32.xlu0 %v876, 124
    %v1238 = vpop.permute.xlu0 %1237
    %1239 = vrot.lane.b32.xlu0 %v878, 124
    %v1240 = vpop.permute.xlu0 %1239
    %v1241 = vsel %vm506, %v1226, %v1234
    %v1242 = vsel %vm506, %v1228, %v1236
    %v1243 = vsel %vm506, %v1230, %v1238
    %v1244 = vsel %vm506, %v1232, %v1240
    %v1245 = vsel %vm506, %v1234, %v1226
    %v1246 = vsel %vm506, %v1236, %v1228
    %v1247 = vsel %vm506, %v1238, %v1230
    %v1248 = vsel %vm506, %v1240, %v1232
    %v1249 = vsel %vm112, %v1241, 0.0
    %v1250 = vsel %vm113, %v1245, 0.0
    %v1251 = vsel %vm114, %v1242, 0.0
    %v1252 = vsel %vm115, %v1246, 0.0
    %v1253 = vsel %vm116, %v1243, 0.0
    %v1254 = vsel %vm117, %v1247, 0.0
    %v1255 = vsel %vm118, %v1244, 0.0
    %v1256 = vsel %vm119, %v1248, 0.0
    %1257 = vst [vmem:[#allocation2 + $0x240] sm:$0xff] %v1249
    %1258 = vst [vmem:[#allocation2 + $0x248] sm:$0xff] %v1250
    %1259 = vst [vmem:[#allocation2 + $0x250] sm:$0xff] %v1251
    %1260 = vst [vmem:[#allocation2 + $0x258] sm:$0xff] %v1252
    %1261 = vst [vmem:[#allocation2 + $0x260] sm:$0xff] %v1253
    %1262 = vst [vmem:[#allocation2 + $0x268] sm:$0xff] %v1254
    %1263 = vst [vmem:[#allocation2 + $0x270] sm:$0xff] %v1255
    %1264 = vst [vmem:[#allocation2 + $0x278] sm:$0xff] %v1256
    %1265 = vrot.lane.b32.xlu0 %v871, 123
    %v1266 = vpop.permute.xlu0 %1265
    %1267 = vrot.lane.b32.xlu0 %v873, 123
    %v1268 = vpop.permute.xlu0 %1267
    %1269 = vrot.lane.b32.xlu0 %v875, 123
    %v1270 = vpop.permute.xlu0 %1269
    %1271 = vrot.lane.b32.xlu0 %v877, 123
    %v1272 = vpop.permute.xlu0 %1271
    %1273 = vrot.lane.b32.xlu0 %v872, 123
    %v1274 = vpop.permute.xlu0 %1273
    %1275 = vrot.lane.b32.xlu0 %v874, 123
    %v1276 = vpop.permute.xlu0 %1275
    %1277 = vrot.lane.b32.xlu0 %v876, 123
    %v1278 = vpop.permute.xlu0 %1277
    %1279 = vrot.lane.b32.xlu0 %v878, 123
    %v1280 = vpop.permute.xlu0 %1279
    %v1281 = vsel %vm547, %v1266, %v1274
    %v1282 = vsel %vm547, %v1268, %v1276
    %v1283 = vsel %vm547, %v1270, %v1278
    %v1284 = vsel %vm547, %v1272, %v1280
    %v1285 = vsel %vm547, %v1274, %v1266
    %v1286 = vsel %vm547, %v1276, %v1268
    %v1287 = vsel %vm547, %v1278, %v1270
    %v1288 = vsel %vm547, %v1280, %v1272
    %v1289 = vsel %vm120, %v1281, 0.0
    %v1290 = vsel %vm121, %v1285, 0.0
    %v1291 = vsel %vm122, %v1282, 0.0
    %v1292 = vsel %vm123, %v1286, 0.0
    %v1293 = vsel %vm124, %v1283, 0.0
    %v1294 = vsel %vm125, %v1287, 0.0
    %v1295 = vsel %vm126, %v1284, 0.0
    %v1296 = vsel %vm127, %v1288, 0.0
    %1297 = vst [vmem:[#allocation2 + $0x280] sm:$0xff] %v1289
    %1298 = vst [vmem:[#allocation2 + $0x288] sm:$0xff] %v1290
    %1299 = vst [vmem:[#allocation2 + $0x290] sm:$0xff] %v1291
    %1300 = vst [vmem:[#allocation2 + $0x298] sm:$0xff] %v1292
    %1301 = vst [vmem:[#allocation2 + $0x2a0] sm:$0xff] %v1293
    %1302 = vst [vmem:[#allocation2 + $0x2a8] sm:$0xff] %v1294
    %1303 = vst [vmem:[#allocation2 + $0x2b0] sm:$0xff] %v1295
    %1304 = vst [vmem:[#allocation2 + $0x2b8] sm:$0xff] %v1296
    %v1305 = vld [vmem:[#allocation2] sm:$0xff]
    %v1306 = vld [vmem:[#allocation2 + $0x8] sm:$0xff]
    %v1307 = vld [vmem:[#allocation2 + $0x10] sm:$0xff]
    %v1308 = vld [vmem:[#allocation2 + $0x18] sm:$0xff]
    %v1309 = vld [vmem:[#allocation2 + $0x20] sm:$0xff]
    %v1310 = vld [vmem:[#allocation2 + $0x28] sm:$0xff]
    %v1311 = vld [vmem:[#allocation2 + $0x30] sm:$0xff]
    %v1312 = vld [vmem:[#allocation2 + $0x38] sm:$0xff]
    %v1313 = vld [vmem:[#allocation2 + $0x40] sm:$0xff]
    %v1314 = vld [vmem:[#allocation2 + $0x48] sm:$0xff]
    %v1315 = vld [vmem:[#allocation2 + $0x50] sm:$0xff]
    %v1316 = vld [vmem:[#allocation2 + $0x58] sm:$0xff]
    %v1317 = vld [vmem:[#allocation2 + $0x60] sm:$0xff]
    %v1318 = vld [vmem:[#allocation2 + $0x68] sm:$0xff]
    %v1319 = vld [vmem:[#allocation2 + $0x70] sm:$0xff]
    %v1320 = vld [vmem:[#allocation2 + $0x78] sm:$0xff]
    %v1321 = vld [vmem:[#allocation2 + $0x80] sm:$0xff]
    %v1322 = vld [vmem:[#allocation2 + $0x88] sm:$0xff]
    %v1323 = vld [vmem:[#allocation2 + $0x90] sm:$0xff]
    %v1324 = vld [vmem:[#allocation2 + $0x98] sm:$0xff]
    %v1325 = vld [vmem:[#allocation2 + $0xa0] sm:$0xff]
    %v1326 = vld [vmem:[#allocation2 + $0xa8] sm:$0xff]
    %v1327 = vld [vmem:[#allocation2 + $0xb0] sm:$0xff]
    %v1328 = vld [vmem:[#allocation2 + $0xb8] sm:$0xff]
    %v1329 = vld [vmem:[#allocation2 + $0xc0] sm:$0xff]
    %v1330 = vld [vmem:[#allocation2 + $0xc8] sm:$0xff]
    %v1331 = vld [vmem:[#allocation2 + $0xd0] sm:$0xff]
    %v1332 = vld [vmem:[#allocation2 + $0xd8] sm:$0xff]
    %v1333 = vld [vmem:[#allocation2 + $0xe0] sm:$0xff]
    %v1334 = vld [vmem:[#allocation2 + $0xe8] sm:$0xff]
    %v1335 = vld [vmem:[#allocation2 + $0xf0] sm:$0xff]
    %v1336 = vld [vmem:[#allocation2 + $0xf8] sm:$0xff]
    %v1337 = vld [vmem:[#allocation2 + $0x100] sm:$0xff]
    %v1338 = vld [vmem:[#allocation2 + $0x108] sm:$0xff]
    %v1339 = vld [vmem:[#allocation2 + $0x110] sm:$0xff]
    %v1340 = vld [vmem:[#allocation2 + $0x118] sm:$0xff]
    %v1341 = vld [vmem:[#allocation2 + $0x120] sm:$0xff]
    %v1342 = vld [vmem:[#allocation2 + $0x128] sm:$0xff]
    %v1343 = vld [vmem:[#allocation2 + $0x130] sm:$0xff]
    %v1344 = vld [vmem:[#allocation2 + $0x138] sm:$0xff]
    %v1345 = vld [vmem:[#allocation2 + $0x140] sm:$0xff]
    %v1346 = vld [vmem:[#allocation2 + $0x148] sm:$0xff]
    %v1347 = vld [vmem:[#allocation2 + $0x150] sm:$0xff]
    %v1348 = vld [vmem:[#allocation2 + $0x158] sm:$0xff]
    %v1349 = vld [vmem:[#allocation2 + $0x160] sm:$0xff]
    %v1350 = vld [vmem:[#allocation2 + $0x168] sm:$0xff]
    %v1351 = vld [vmem:[#allocation2 + $0x170] sm:$0xff]
    %v1352 = vld [vmem:[#allocation2 + $0x178] sm:$0xff]
    %v1353 = vld [vmem:[#allocation2 + $0x180] sm:$0xff]
    %v1354 = vld [vmem:[#allocation2 + $0x188] sm:$0xff]
    %v1355 = vld [vmem:[#allocation2 + $0x190] sm:$0xff]
    %v1356 = vld [vmem:[#allocation2 + $0x198] sm:$0xff]
    %v1357 = vld [vmem:[#allocation2 + $0x1a0] sm:$0xff]
    %v1358 = vld [vmem:[#allocation2 + $0x1a8] sm:$0xff]
    %v1359 = vld [vmem:[#allocation2 + $0x1b0] sm:$0xff]
    %v1360 = vld [vmem:[#allocation2 + $0x1b8] sm:$0xff]
    %v1361 = vld [vmem:[#allocation2 + $0x1c0] sm:$0xff]
    %v1362 = vld [vmem:[#allocation2 + $0x1c8] sm:$0xff]
    %v1363 = vld [vmem:[#allocation2 + $0x1d0] sm:$0xff]
    %v1364 = vld [vmem:[#allocation2 + $0x1d8] sm:$0xff]
    %v1365 = vld [vmem:[#allocation2 + $0x1e0] sm:$0xff]
    %v1366 = vld [vmem:[#allocation2 + $0x1e8] sm:$0xff]
    %v1367 = vld [vmem:[#allocation2 + $0x1f0] sm:$0xff]
    %v1368 = vld [vmem:[#allocation2 + $0x1f8] sm:$0xff]
    %v1369 = vld [vmem:[#allocation2 + $0x200] sm:$0xff]
    %v1370 = vld [vmem:[#allocation2 + $0x208] sm:$0xff]
    %v1371 = vld [vmem:[#allocation2 + $0x210] sm:$0xff]
    %v1372 = vld [vmem:[#allocation2 + $0x218] sm:$0xff]
    %v1373 = vld [vmem:[#allocation2 + $0x220] sm:$0xff]
    %v1374 = vld [vmem:[#allocation2 + $0x228] sm:$0xff]
    %v1375 = vld [vmem:[#allocation2 + $0x230] sm:$0xff]
    %v1376 = vld [vmem:[#allocation2 + $0x238] sm:$0xff]
    %v1377 = vld [vmem:[#allocation2 + $0x240] sm:$0xff]
    %v1378 = vld [vmem:[#allocation2 + $0x248] sm:$0xff]
    %v1379 = vld [vmem:[#allocation2 + $0x250] sm:$0xff]
    %v1380 = vld [vmem:[#allocation2 + $0x258] sm:$0xff]
    %v1381 = vld [vmem:[#allocation2 + $0x260] sm:$0xff]
    %v1382 = vld [vmem:[#allocation2 + $0x268] sm:$0xff]
    %v1383 = vld [vmem:[#allocation2 + $0x270] sm:$0xff]
    %v1384 = vld [vmem:[#allocation2 + $0x278] sm:$0xff]
    %v1385 = vld [vmem:[#allocation2 + $0x280] sm:$0xff]
    %v1386 = vld [vmem:[#allocation2 + $0x288] sm:$0xff]
    %v1387 = vld [vmem:[#allocation2 + $0x290] sm:$0xff]
    %v1388 = vld [vmem:[#allocation2 + $0x298] sm:$0xff]
    %v1389 = vld [vmem:[#allocation2 + $0x2a0] sm:$0xff]
    %v1390 = vld [vmem:[#allocation2 + $0x2a8] sm:$0xff]
    %v1391 = vld [vmem:[#allocation2 + $0x2b0] sm:$0xff]
    %v1392 = vld [vmem:[#allocation2 + $0x2b8] sm:$0xff]
    %1394 = vset.pattern.permute.xlu0 0
    %1395 = vperm.xlu0 %1394, %v893
    %v1396 = vpop.permute.xlu0 %1395
    %1399 = vset.pattern.permute.xlu0 0
    %1400 = vperm.xlu0 %1399, %v894
    %v1401 = vpop.permute.xlu0 %1400
    %1404 = vset.pattern.permute.xlu0 0
    %1405 = vperm.xlu0 %1404, %v895
    %v1406 = vpop.permute.xlu0 %1405
    %1409 = vset.pattern.permute.xlu0 0
    %1410 = vperm.xlu0 %1409, %v896
    %v1411 = vpop.permute.xlu0 %1410
    %v1414 = vsel %vm680, %v882, 0
    %v1417 = vsel %vm680, %v885, 0
    %v1420 = vsel %vm680, %v888, 0
    %v1423 = vsel %vm680, %v891, 0
    %1425 = vmatprep.subr.mxu0 %v1306
    %1426 = vmatpush1.msra.mxu0 %v1305
    %1427 = vmatprep.subr.mxu0 %v1308
    %1428 = vmatpush1.msra.mxu0 %v1307
    %1429 = vmatprep.subr.mxu0 %v1310
    %1430 = vmatpush1.msra.mxu0 %v1309
    %1431 = vmatprep.subr.mxu0 %v1312
    %1432 = vmatpush1.msra.mxu0 %v1311
    %1433 = vmatprep.subr.mxu0 %v1314
    %1434 = vmatpush1.msra.mxu0 %v1313
    %1435 = vmatprep.subr.mxu0 %v1316
    %1436 = vmatpush1.msra.mxu0 %v1315
    %1437 = vmatprep.subr.mxu0 %v1318
    %1438 = vmatpush1.msra.mxu0 %v1317
    %1439 = vmatprep.subr.mxu0 %v1320
    %1440 = vmatpush1.msra.mxu0 %v1319
    %1441 = vmatprep.subr.mxu0 %v1322
    %1442 = vmatpush1.msra.mxu0 %v1321
    %1443 = vmatprep.subr.mxu0 %v1324
    %1444 = vmatpush1.msra.mxu0 %v1323
    %1445 = vmatprep.subr.mxu0 %v1326
    %1446 = vmatpush1.msra.mxu0 %v1325
    %1447 = vmatprep.subr.mxu0 %v1328
    %1448 = vmatpush1.msra.mxu0 %v1327
    %1449 = vmatprep.subr.mxu0 %v1330
    %1450 = vmatpush1.msra.mxu0 %v1329
    %1451 = vmatprep.subr.mxu0 %v1332
    %1452 = vmatpush1.msra.mxu0 %v1331
    %1453 = vmatprep.subr.mxu0 %v1334
    %1454 = vmatpush1.msra.mxu0 %v1333
    %1455 = vmatprep.subr.mxu0 %v1336
    %1456 = vmatpush1.msra.mxu0 %v1335
    %1457 = vmatprep.subr.mxu0 %v1338
    %1458 = vmatpush1.msra.mxu0 %v1337
    %1459 = vmatprep.subr.mxu0 %v1340
    %1460 = vmatpush1.msra.mxu0 %v1339
    %1461 = vmatprep.subr.mxu0 %v1342
    %1462 = vmatpush1.msra.mxu0 %v1341
    %1463 = vmatprep.subr.mxu0 %v1344
    %1464 = vmatpush1.msra.mxu0 %v1343
    %1465 = vmatprep.subr.mxu0 %v1346
    %1466 = vmatpush1.msra.mxu0 %v1345
    %1467 = vmatprep.subr.mxu0 %v1348
    %1468 = vmatpush1.msra.mxu0 %v1347
    %1469 = vmatprep.subr.mxu0 %v1350
    %1470 = vmatpush1.msra.mxu0 %v1349
    %1471 = vmatprep.subr.mxu0 %v1352
    %1472 = vmatpush1.msra.mxu0 %v1351
    %1473 = vmatprep.subr.mxu0 %v1354
    %1474 = vmatpush1.msra.mxu0 %v1353
    %1475 = vmatprep.subr.mxu0 %v1356
    %1476 = vmatpush1.msra.mxu0 %v1355
    %1477 = vmatprep.subr.mxu0 %v1358
    %1478 = vmatpush1.msra.mxu0 %v1357
    %1479 = vmatprep.subr.mxu0 %v1360
    %1480 = vmatpush1.msra.mxu0 %v1359
    %1481 = vmatprep.subr.mxu0 %v1362
    %1482 = vmatpush1.msra.mxu0 %v1361
    %1483 = vmatprep.subr.mxu0 %v1364
    %1484 = vmatpush1.msra.mxu0 %v1363
    %1485 = vmatprep.subr.mxu0 %v1366
    %1486 = vmatpush1.msra.mxu0 %v1365
    %1487 = vmatprep.subr.mxu0 %v1368
    %1488 = vmatpush1.msra.mxu0 %v1367
    %1489 = vmatprep.mubr.f32.mxu0 %v881
    %1490 = vmatmul.mubr.f32.gmra.mrb[0].mxu0 %v880
    %v1491 = vpop.f32.mrb[0].mxu0
    %v1492 = vadd.f32 %v1396, %v1491
    %v1493 = vpop.f32.mrb[0].mxu0
    %v1494 = vadd.f32 %v1396, %v1493
    %1495 = vmatprep.mubr.f32.mxu0 %v884
    %1496 = vmatmul.mubr.f32.gmra.mrb[0].mxu0 %v883
    %v1497 = vpop.f32.mrb[0].mxu0
    %v1498 = vadd.f32 %v1401, %v1497
    %v1499 = vpop.f32.mrb[0].mxu0
    %v1500 = vadd.f32 %v1401, %v1499
    %1501 = vmatprep.mubr.f32.mxu0 %v887
    %1502 = vmatmul.mubr.f32.gmra.mrb[0].mxu0 %v886
    %v1503 = vpop.f32.mrb[0].mxu0
    %v1504 = vadd.f32 %v1406, %v1503
    %v1505 = vpop.f32.mrb[0].mxu0
    %v1506 = vadd.f32 %v1406, %v1505
    %1507 = vmatprep.mubr.f32.mxu0 %v890
    %1508 = vmatmul.mubr.f32.gmra.mrb[0].mxu0 %v889
    %v1509 = vpop.f32.mrb[0].mxu0
    %v1510 = vadd.f32 %v1411, %v1509
    %v1511 = vpop.f32.mrb[0].mxu0
    %v1512 = vadd.f32 %v1411, %v1511
    %1513 = vdwg.mxu0
    %1514 = vmatprep.subr.mxu0 %v1370
    %1515 = vmatpush1.msra.mxu0 %v1369
    %1516 = vmatprep.subr.mxu0 %v1372
    %1517 = vmatpush1.msra.mxu0 %v1371
    %1518 = vmatprep.subr.mxu0 %v1374
    %1519 = vmatpush1.msra.mxu0 %v1373
    %1520 = vmatprep.subr.mxu0 %v1376
    %1521 = vmatpush1.msra.mxu0 %v1375
    %1522 = vmatprep.subr.mxu0 %v1378
    %1523 = vmatpush1.msra.mxu0 %v1377
    %1524 = vmatprep.subr.mxu0 %v1380
    %1525 = vmatpush1.msra.mxu0 %v1379
    %1526 = vmatprep.subr.mxu0 %v1382
    %1527 = vmatpush1.msra.mxu0 %v1381
    %1528 = vmatprep.subr.mxu0 %v1384
    %1529 = vmatpush1.msra.mxu0 %v1383
    %1530 = vmatprep.subr.mxu0 %v1386
    %1531 = vmatpush1.msra.mxu0 %v1385
    %1532 = vmatprep.subr.mxu0 %v1388
    %1533 = vmatpush1.msra.mxu0 %v1387
    %1534 = vmatprep.subr.mxu0 %v1390
    %1535 = vmatpush1.msra.mxu0 %v1389
    %1536 = vmatprep.subr.mxu0 %v1392
    %1537 = vmatpush1.msra.mxu0 %v1391
    %1538 = vmatprep.subr.mxu0 0.0
    %1539 = vmatpush1.msra.mxu0 0.0
    %1540 = vmatprep.subr.mxu0 0.0
    %1541 = vmatpush1.msra.mxu0 0.0
    %1542 = vmatprep.subr.mxu0 0.0
    %1543 = vmatpush1.msra.mxu0 0.0
    %1544 = vmatprep.subr.mxu0 0.0
    %1545 = vmatpush1.msra.mxu0 0.0
    %1546 = vmatprep.subr.mxu0 0.0
    %1547 = vmatpush1.msra.mxu0 0.0
    %1548 = vmatprep.subr.mxu0 0.0
    %1549 = vmatpush1.msra.mxu0 0.0
    %1550 = vmatprep.subr.mxu0 0.0
    %1551 = vmatpush1.msra.mxu0 0.0
    %1552 = vmatprep.subr.mxu0 0.0
    %1553 = vmatpush1.msra.mxu0 0.0
    %1554 = vmatprep.subr.mxu0 0.0
    %1555 = vmatpush1.msra.mxu0 0.0
    %1556 = vmatprep.subr.mxu0 0.0
    %1557 = vmatpush1.msra.mxu0 0.0
    %1558 = vmatprep.subr.mxu0 0.0
    %1559 = vmatpush1.msra.mxu0 0.0
    %1560 = vmatprep.subr.mxu0 0.0
    %1561 = vmatpush1.msra.mxu0 0.0
    %1562 = vmatprep.subr.mxu0 0.0
    %1563 = vmatpush1.msra.mxu0 0.0
    %1564 = vmatprep.subr.mxu0 0.0
    %1565 = vmatpush1.msra.mxu0 0.0
    %1566 = vmatprep.subr.mxu0 0.0
    %1567 = vmatpush1.msra.mxu0 0.0
    %1568 = vmatprep.subr.mxu0 0.0
    %1569 = vmatpush1.msra.mxu0 0.0
    %1570 = vmatprep.subr.mxu0 0.0
    %1571 = vmatpush1.msra.mxu0 0.0
    %1572 = vmatprep.subr.mxu0 0.0
    %1573 = vmatpush1.msra.mxu0 0.0
    %1574 = vmatprep.subr.mxu0 0.0
    %1575 = vmatpush1.msra.mxu0 0.0
    %1576 = vmatprep.subr.mxu0 0.0
    %1577 = vmatpush1.msra.mxu0 0.0
    %1578 = vmatprep.mubr.f32.mxu0 0.0
    %1579 = vmatmul.mubr.f32.gmra.mrb[0].mxu0 %v1414
    %v1580 = vpop.f32.mrb[0].mxu0
    %v1581 = vadd.f32 %v1492, %v1580
    %v1582 = vpop.f32.mrb[0].mxu0
    %v1583 = vadd.f32 %v1494, %v1582
    %1584 = vmatprep.mubr.f32.mxu0 0.0
    %1585 = vmatmul.mubr.f32.gmra.mrb[0].mxu0 %v1417
    %v1586 = vpop.f32.mrb[0].mxu0
    %v1587 = vadd.f32 %v1498, %v1586
    %v1588 = vpop.f32.mrb[0].mxu0
    %v1589 = vadd.f32 %v1500, %v1588
    %1590 = vmatprep.mubr.f32.mxu0 0.0
    %1591 = vmatmul.mubr.f32.gmra.mrb[0].mxu0 %v1420
    %v1592 = vpop.f32.mrb[0].mxu0
    %v1593 = vadd.f32 %v1504, %v1592
    %v1594 = vpop.f32.mrb[0].mxu0
    %v1595 = vadd.f32 %v1506, %v1594
    %1596 = vmatprep.mubr.f32.mxu0 0.0
    %1597 = vmatmul.mubr.f32.gmra.mrb[0].mxu0 %v1423
    %v1598 = vpop.f32.mrb[0].mxu0
    %v1599 = vadd.f32 %v1510, %v1598
    %v1600 = vpop.f32.mrb[0].mxu0
    %v1601 = vadd.f32 %v1512, %v1600
    %1602 = vdwg.mxu0
    %v1603 = vmax.f32 %v1581, 0.0
    %v1604 = vmax.f32 %v1583, 0.0
    %v1605 = vmax.f32 %v1587, 0.0
    %v1606 = vmax.f32 %v1589, 0.0
    %v1607 = vmax.f32 %v1593, 0.0
    %v1608 = vmax.f32 %v1595, 0.0
    %v1609 = vmax.f32 %v1599, 0.0
    %v1610 = vmax.f32 %v1601, 0.0
    %v1611 = vadd.f32 %v128, %v1603
    %v1612 = vadd.f32 %v129, %v1604
    %v1613 = vadd.f32 %v130, %v1605
    %v1614 = vadd.f32 %v131, %v1606
    %v1615 = vadd.f32 %v132, %v1607
    %v1616 = vadd.f32 %v133, %v1608
    %v1617 = vadd.f32 %v134, %v1609
    %v1618 = vadd.f32 %v135, %v1610
    %s1619 = scalar_lea.vmem [#allocation4], 192
    %v1620 = vld [vmem:[%s1619] sm:$0xff]
    %v1621 = vld [vmem:[%s1619 + $0x8] sm:$0xff]
    %v1622 = vld [vmem:[%s1619 + $0x10] sm:$0xff]
    %v1623 = vld [vmem:[%s1619 + $0x18] sm:$0xff]
    %v1624 = vld [vmem:[%s1619 + $0x20] sm:$0xff]
    %v1625 = vld [vmem:[%s1619 + $0x28] sm:$0xff]
    %v1626 = vld [vmem:[%s1619 + $0x30] sm:$0xff]
    %v1627 = vld [vmem:[%s1619 + $0x38] sm:$0xff]
    %v1628 = vld [vmem:[%s1619 + $0x40] sm:$0xff]
    %v1629 = vld [vmem:[%s1619 + $0x48] sm:$0xff]
    %v1630 = vld [vmem:[%s1619 + $0x50] sm:$0xff]
    %v1631 = vld [vmem:[%s1619 + $0x58] sm:$0xff]
    %s1632 = scalar_lea.vmem %s3, 64
    %v1633 = vld [vmem:[%s1632] sm:$0xff]
    %v1634 = vld [vmem:[%s1632 + $0x8] sm:$0xff]
    %v1635 = vld [vmem:[%s1632 + $0x10] sm:$0xff]
    %v1636 = vld [vmem:[%s1632 + $0x18] sm:$0xff]
    %1637 = vrot.lane.b32.xlu0 %v1611, 5
    %v1638 = vpop.permute.xlu0 %1637
    %1639 = vrot.lane.b32.xlu0 %v1613, 5
    %v1640 = vpop.permute.xlu0 %1639
    %1641 = vrot.lane.b32.xlu0 %v1615, 5
    %v1642 = vpop.permute.xlu0 %1641
    %1643 = vrot.lane.b32.xlu0 %v1617, 5
    %v1644 = vpop.permute.xlu0 %1643
    %1645 = vrot.lane.b32.xlu0 %v1612, 5
    %v1646 = vpop.permute.xlu0 %1645
    %1647 = vrot.lane.b32.xlu0 %v1614, 5
    %v1648 = vpop.permute.xlu0 %1647
    %1649 = vrot.lane.b32.xlu0 %v1616, 5
    %v1650 = vpop.permute.xlu0 %1649
    %1651 = vrot.lane.b32.xlu0 %v1618, 5
    %v1652 = vpop.permute.xlu0 %1651
    %v1653 = vsel %vm170, %v1638, %v1646
    %v1654 = vsel %vm170, %v1640, %v1648
    %v1655 = vsel %vm170, %v1642, %v1650
    %v1656 = vsel %vm170, %v1644, %v1652
    %v1657 = vsel %vm170, %v1646, %v1638
    %v1658 = vsel %vm170, %v1648, %v1640
    %v1659 = vsel %vm170, %v1650, %v1642
    %v1660 = vsel %vm170, %v1652, %v1644
    %v1661 = vsel %vm48, %v1657, 0.0
    %v1662 = vsel %vm49, %v1653, 0.0
    %v1663 = vsel %vm50, %v1658, 0.0
    %v1664 = vsel %vm51, %v1654, 0.0
    %v1665 = vsel %vm52, %v1659, 0.0
    %v1666 = vsel %vm53, %v1655, 0.0
    %v1667 = vsel %vm54, %v1660, 0.0
    %v1668 = vsel %vm55, %v1656, 0.0
    %1669 = vst [vmem:[#allocation2] sm:$0xff] %v1661
    %1670 = vst [vmem:[#allocation2 + $0x8] sm:$0xff] %v1662
    %1671 = vst [vmem:[#allocation2 + $0x10] sm:$0xff] %v1663
    %1672 = vst [vmem:[#allocation2 + $0x18] sm:$0xff] %v1664
    %1673 = vst [vmem:[#allocation2 + $0x20] sm:$0xff] %v1665
    %1674 = vst [vmem:[#allocation2 + $0x28] sm:$0xff] %v1666
    %1675 = vst [vmem:[#allocation2 + $0x30] sm:$0xff] %v1667
    %1676 = vst [vmem:[#allocation2 + $0x38] sm:$0xff] %v1668
    %1677 = vrot.lane.b32.xlu0 %v1611, 4
    %v1678 = vpop.permute.xlu0 %1677
    %1679 = vrot.lane.b32.xlu0 %v1613, 4
    %v1680 = vpop.permute.xlu0 %1679
    %1681 = vrot.lane.b32.xlu0 %v1615, 4
    %v1682 = vpop.permute.xlu0 %1681
    %1683 = vrot.lane.b32.xlu0 %v1617, 4
    %v1684 = vpop.permute.xlu0 %1683
    %1685 = vrot.lane.b32.xlu0 %v1612, 4
    %v1686 = vpop.permute.xlu0 %1685
    %1687 = vrot.lane.b32.xlu0 %v1614, 4
    %v1688 = vpop.permute.xlu0 %1687
    %1689 = vrot.lane.b32.xlu0 %v1616, 4
    %v1690 = vpop.permute.xlu0 %1689
    %1691 = vrot.lane.b32.xlu0 %v1618, 4
    %v1692 = vpop.permute.xlu0 %1691
    %v1693 = vsel %vm211, %v1678, %v1686
    %v1694 = vsel %vm211, %v1680, %v1688
    %v1695 = vsel %vm211, %v1682, %v1690
    %v1696 = vsel %vm211, %v1684, %v1692
    %v1697 = vsel %vm211, %v1686, %v1678
    %v1698 = vsel %vm211, %v1688, %v1680
    %v1699 = vsel %vm211, %v1690, %v1682
    %v1700 = vsel %vm211, %v1692, %v1684
    %v1701 = vsel %vm56, %v1697, 0.0
    %v1702 = vsel %vm57, %v1693, 0.0
    %v1703 = vsel %vm58, %v1698, 0.0
    %v1704 = vsel %vm59, %v1694, 0.0
    %v1705 = vsel %vm60, %v1699, 0.0
    %v1706 = vsel %vm61, %v1695, 0.0
    %v1707 = vsel %vm62, %v1700, 0.0
    %v1708 = vsel %vm63, %v1696, 0.0
    %1709 = vst [vmem:[#allocation2 + $0x40] sm:$0xff] %v1701
    %1710 = vst [vmem:[#allocation2 + $0x48] sm:$0xff] %v1702
    %1711 = vst [vmem:[#allocation2 + $0x50] sm:$0xff] %v1703
    %1712 = vst [vmem:[#allocation2 + $0x58] sm:$0xff] %v1704
    %1713 = vst [vmem:[#allocation2 + $0x60] sm:$0xff] %v1705
    %1714 = vst [vmem:[#allocation2 + $0x68] sm:$0xff] %v1706
    %1715 = vst [vmem:[#allocation2 + $0x70] sm:$0xff] %v1707
    %1716 = vst [vmem:[#allocation2 + $0x78] sm:$0xff] %v1708
    %1717 = vrot.lane.b32.xlu0 %v1611, 3
    %v1718 = vpop.permute.xlu0 %1717
    %1719 = vrot.lane.b32.xlu0 %v1613, 3
    %v1720 = vpop.permute.xlu0 %1719
    %1721 = vrot.lane.b32.xlu0 %v1615, 3
    %v1722 = vpop.permute.xlu0 %1721
    %1723 = vrot.lane.b32.xlu0 %v1617, 3
    %v1724 = vpop.permute.xlu0 %1723
    %1725 = vrot.lane.b32.xlu0 %v1612, 3
    %v1726 = vpop.permute.xlu0 %1725
    %1727 = vrot.lane.b32.xlu0 %v1614, 3
    %v1728 = vpop.permute.xlu0 %1727
    %1729 = vrot.lane.b32.xlu0 %v1616, 3
    %v1730 = vpop.permute.xlu0 %1729
    %1731 = vrot.lane.b32.xlu0 %v1618, 3
    %v1732 = vpop.permute.xlu0 %1731
    %v1733 = vsel %vm252, %v1718, %v1726
    %v1734 = vsel %vm252, %v1720, %v1728
    %v1735 = vsel %vm252, %v1722, %v1730
    %v1736 = vsel %vm252, %v1724, %v1732
    %v1737 = vsel %vm252, %v1726, %v1718
    %v1738 = vsel %vm252, %v1728, %v1720
    %v1739 = vsel %vm252, %v1730, %v1722
    %v1740 = vsel %vm252, %v1732, %v1724
    %v1741 = vsel %vm64, %v1737, 0.0
    %v1742 = vsel %vm65, %v1733, 0.0
    %v1743 = vsel %vm66, %v1738, 0.0
    %v1744 = vsel %vm67, %v1734, 0.0
    %v1745 = vsel %vm68, %v1739, 0.0
    %v1746 = vsel %vm69, %v1735, 0.0
    %v1747 = vsel %vm70, %v1740, 0.0
    %v1748 = vsel %vm71, %v1736, 0.0
    %1749 = vst [vmem:[#allocation2 + $0x80] sm:$0xff] %v1741
    %1750 = vst [vmem:[#allocation2 + $0x88] sm:$0xff] %v1742
    %1751 = vst [vmem:[#allocation2 + $0x90] sm:$0xff] %v1743
    %1752 = vst [vmem:[#allocation2 + $0x98] sm:$0xff] %v1744
    %1753 = vst [vmem:[#allocation2 + $0xa0] sm:$0xff] %v1745
    %1754 = vst [vmem:[#allocation2 + $0xa8] sm:$0xff] %v1746
    %1755 = vst [vmem:[#allocation2 + $0xb0] sm:$0xff] %v1747
    %1756 = vst [vmem:[#allocation2 + $0xb8] sm:$0xff] %v1748
    %1757 = vrot.lane.b32.xlu0 %v1611, 2
    %v1758 = vpop.permute.xlu0 %1757
    %1759 = vrot.lane.b32.xlu0 %v1613, 2
    %v1760 = vpop.permute.xlu0 %1759
    %1761 = vrot.lane.b32.xlu0 %v1615, 2
    %v1762 = vpop.permute.xlu0 %1761
    %1763 = vrot.lane.b32.xlu0 %v1617, 2
    %v1764 = vpop.permute.xlu0 %1763
    %1765 = vrot.lane.b32.xlu0 %v1612, 2
    %v1766 = vpop.permute.xlu0 %1765
    %1767 = vrot.lane.b32.xlu0 %v1614, 2
    %v1768 = vpop.permute.xlu0 %1767
    %1769 = vrot.lane.b32.xlu0 %v1616, 2
    %v1770 = vpop.permute.xlu0 %1769
    %1771 = vrot.lane.b32.xlu0 %v1618, 2
    %v1772 = vpop.permute.xlu0 %1771
    %v1773 = vsel %vm293, %v1758, %v1766
    %v1774 = vsel %vm293, %v1760, %v1768
    %v1775 = vsel %vm293, %v1762, %v1770
    %v1776 = vsel %vm293, %v1764, %v1772
    %v1777 = vsel %vm293, %v1766, %v1758
    %v1778 = vsel %vm293, %v1768, %v1760
    %v1779 = vsel %vm293, %v1770, %v1762
    %v1780 = vsel %vm293, %v1772, %v1764
    %v1781 = vsel %vm72, %v1777, 0.0
    %v1782 = vsel %vm73, %v1773, 0.0
    %v1783 = vsel %vm74, %v1778, 0.0
    %v1784 = vsel %vm75, %v1774, 0.0
    %v1785 = vsel %vm76, %v1779, 0.0
    %v1786 = vsel %vm77, %v1775, 0.0
    %v1787 = vsel %vm78, %v1780, 0.0
    %v1788 = vsel %vm79, %v1776, 0.0
    %1789 = vst [vmem:[#allocation2 + $0xc0] sm:$0xff] %v1781
    %1790 = vst [vmem:[#allocation2 + $0xc8] sm:$0xff] %v1782
    %1791 = vst [vmem:[#allocation2 + $0xd0] sm:$0xff] %v1783
    %1792 = vst [vmem:[#allocation2 + $0xd8] sm:$0xff] %v1784
    %1793 = vst [vmem:[#allocation2 + $0xe0] sm:$0xff] %v1785
    %1794 = vst [vmem:[#allocation2 + $0xe8] sm:$0xff] %v1786
    %1795 = vst [vmem:[#allocation2 + $0xf0] sm:$0xff] %v1787
    %1796 = vst [vmem:[#allocation2 + $0xf8] sm:$0xff] %v1788
    %1797 = vrot.lane.b32.xlu0 %v1611, 1
    %v1798 = vpop.permute.xlu0 %1797
    %1799 = vrot.lane.b32.xlu0 %v1613, 1
    %v1800 = vpop.permute.xlu0 %1799
    %1801 = vrot.lane.b32.xlu0 %v1615, 1
    %v1802 = vpop.permute.xlu0 %1801
    %1803 = vrot.lane.b32.xlu0 %v1617, 1
    %v1804 = vpop.permute.xlu0 %1803
    %1805 = vrot.lane.b32.xlu0 %v1612, 1
    %v1806 = vpop.permute.xlu0 %1805
    %1807 = vrot.lane.b32.xlu0 %v1614, 1
    %v1808 = vpop.permute.xlu0 %1807
    %1809 = vrot.lane.b32.xlu0 %v1616, 1
    %v1810 = vpop.permute.xlu0 %1809
    %1811 = vrot.lane.b32.xlu0 %v1618, 1
    %v1812 = vpop.permute.xlu0 %1811
    %v1813 = vsel %vm334, %v1798, %v1806
    %v1814 = vsel %vm334, %v1800, %v1808
    %v1815 = vsel %vm334, %v1802, %v1810
    %v1816 = vsel %vm334, %v1804, %v1812
    %v1817 = vsel %vm334, %v1806, %v1798
    %v1818 = vsel %vm334, %v1808, %v1800
    %v1819 = vsel %vm334, %v1810, %v1802
    %v1820 = vsel %vm334, %v1812, %v1804
    %v1821 = vsel %vm80, %v1817, 0.0
    %v1822 = vsel %vm81, %v1813, 0.0
    %v1823 = vsel %vm82, %v1818, 0.0
    %v1824 = vsel %vm83, %v1814, 0.0
    %v1825 = vsel %vm84, %v1819, 0.0
    %v1826 = vsel %vm85, %v1815, 0.0
    %v1827 = vsel %vm86, %v1820, 0.0
    %v1828 = vsel %vm87, %v1816, 0.0
    %1829 = vst [vmem:[#allocation2 + $0x100] sm:$0xff] %v1821
    %1830 = vst [vmem:[#allocation2 + $0x108] sm:$0xff] %v1822
    %1831 = vst [vmem:[#allocation2 + $0x110] sm:$0xff] %v1823
    %1832 = vst [vmem:[#allocation2 + $0x118] sm:$0xff] %v1824
    %1833 = vst [vmem:[#allocation2 + $0x120] sm:$0xff] %v1825
    %1834 = vst [vmem:[#allocation2 + $0x128] sm:$0xff] %v1826
    %1835 = vst [vmem:[#allocation2 + $0x130] sm:$0xff] %v1827
    %1836 = vst [vmem:[#allocation2 + $0x138] sm:$0xff] %v1828
    %1837 = vst [vmem:[#allocation2 + $0x140] sm:$0xff] %v1611
    %1838 = vst [vmem:[#allocation2 + $0x148] sm:$0xff] %v1612
    %1839 = vst [vmem:[#allocation2 + $0x150] sm:$0xff] %v1613
    %1840 = vst [vmem:[#allocation2 + $0x158] sm:$0xff] %v1614
    %1841 = vst [vmem:[#allocation2 + $0x160] sm:$0xff] %v1615
    %1842 = vst [vmem:[#allocation2 + $0x168] sm:$0xff] %v1616
    %1843 = vst [vmem:[#allocation2 + $0x170] sm:$0xff] %v1617
    %1844 = vst [vmem:[#allocation2 + $0x178] sm:$0xff] %v1618
    %1845 = vrot.lane.b32.xlu0 %v1611, 127
    %v1846 = vpop.permute.xlu0 %1845
    %1847 = vrot.lane.b32.xlu0 %v1613, 127
    %v1848 = vpop.permute.xlu0 %1847
    %1849 = vrot.lane.b32.xlu0 %v1615, 127
    %v1850 = vpop.permute.xlu0 %1849
    %1851 = vrot.lane.b32.xlu0 %v1617, 127
    %v1852 = vpop.permute.xlu0 %1851
    %1853 = vrot.lane.b32.xlu0 %v1612, 127
    %v1854 = vpop.permute.xlu0 %1853
    %1855 = vrot.lane.b32.xlu0 %v1614, 127
    %v1856 = vpop.permute.xlu0 %1855
    %1857 = vrot.lane.b32.xlu0 %v1616, 127
    %v1858 = vpop.permute.xlu0 %1857
    %1859 = vrot.lane.b32.xlu0 %v1618, 127
    %v1860 = vpop.permute.xlu0 %1859
    %v1861 = vsel %vm383, %v1846, %v1854
    %v1862 = vsel %vm383, %v1848, %v1856
    %v1863 = vsel %vm383, %v1850, %v1858
    %v1864 = vsel %vm383, %v1852, %v1860
    %v1865 = vsel %vm383, %v1854, %v1846
    %v1866 = vsel %vm383, %v1856, %v1848
    %v1867 = vsel %vm383, %v1858, %v1850
    %v1868 = vsel %vm383, %v1860, %v1852
    %v1869 = vsel %vm88, %v1861, 0.0
    %v1870 = vsel %vm89, %v1865, 0.0
    %v1871 = vsel %vm90, %v1862, 0.0
    %v1872 = vsel %vm91, %v1866, 0.0
    %v1873 = vsel %vm92, %v1863, 0.0
    %v1874 = vsel %vm93, %v1867, 0.0
    %v1875 = vsel %vm94, %v1864, 0.0
    %v1876 = vsel %vm95, %v1868, 0.0
    %1877 = vst [vmem:[#allocation2 + $0x180] sm:$0xff] %v1869
    %1878 = vst [vmem:[#allocation2 + $0x188] sm:$0xff] %v1870
    %1879 = vst [vmem:[#allocation2 + $0x190] sm:$0xff] %v1871
    %1880 = vst [vmem:[#allocation2 + $0x198] sm:$0xff] %v1872
    %1881 = vst [vmem:[#allocation2 + $0x1a0] sm:$0xff] %v1873
    %1882 = vst [vmem:[#allocation2 + $0x1a8] sm:$0xff] %v1874
    %1883 = vst [vmem:[#allocation2 + $0x1b0] sm:$0xff] %v1875
    %1884 = vst [vmem:[#allocation2 + $0x1b8] sm:$0xff] %v1876
    %1885 = vrot.lane.b32.xlu0 %v1611, 126
    %v1886 = vpop.permute.xlu0 %1885
    %1887 = vrot.lane.b32.xlu0 %v1613, 126
    %v1888 = vpop.permute.xlu0 %1887
    %1889 = vrot.lane.b32.xlu0 %v1615, 126
    %v1890 = vpop.permute.xlu0 %1889
    %1891 = vrot.lane.b32.xlu0 %v1617, 126
    %v1892 = vpop.permute.xlu0 %1891
    %1893 = vrot.lane.b32.xlu0 %v1612, 126
    %v1894 = vpop.permute.xlu0 %1893
    %1895 = vrot.lane.b32.xlu0 %v1614, 126
    %v1896 = vpop.permute.xlu0 %1895
    %1897 = vrot.lane.b32.xlu0 %v1616, 126
    %v1898 = vpop.permute.xlu0 %1897
    %1899 = vrot.lane.b32.xlu0 %v1618, 126
    %v1900 = vpop.permute.xlu0 %1899
    %v1901 = vsel %vm424, %v1886, %v1894
    %v1902 = vsel %vm424, %v1888, %v1896
    %v1903 = vsel %vm424, %v1890, %v1898
    %v1904 = vsel %vm424, %v1892, %v1900
    %v1905 = vsel %vm424, %v1894, %v1886
    %v1906 = vsel %vm424, %v1896, %v1888
    %v1907 = vsel %vm424, %v1898, %v1890
    %v1908 = vsel %vm424, %v1900, %v1892
    %v1909 = vsel %vm96, %v1901, 0.0
    %v1910 = vsel %vm97, %v1905, 0.0
    %v1911 = vsel %vm98, %v1902, 0.0
    %v1912 = vsel %vm99, %v1906, 0.0
    %v1913 = vsel %vm100, %v1903, 0.0
    %v1914 = vsel %vm101, %v1907, 0.0
    %v1915 = vsel %vm102, %v1904, 0.0
    %v1916 = vsel %vm103, %v1908, 0.0
    %1917 = vst [vmem:[#allocation2 + $0x1c0] sm:$0xff] %v1909
    %1918 = vst [vmem:[#allocation2 + $0x1c8] sm:$0xff] %v1910
    %1919 = vst [vmem:[#allocation2 + $0x1d0] sm:$0xff] %v1911
    %1920 = vst [vmem:[#allocation2 + $0x1d8] sm:$0xff] %v1912
    %1921 = vst [vmem:[#allocation2 + $0x1e0] sm:$0xff] %v1913
    %1922 = vst [vmem:[#allocation2 + $0x1e8] sm:$0xff] %v1914
    %1923 = vst [vmem:[#allocation2 + $0x1f0] sm:$0xff] %v1915
    %1924 = vst [vmem:[#allocation2 + $0x1f8] sm:$0xff] %v1916
    %1925 = vrot.lane.b32.xlu0 %v1611, 125
    %v1926 = vpop.permute.xlu0 %1925
    %1927 = vrot.lane.b32.xlu0 %v1613, 125
    %v1928 = vpop.permute.xlu0 %1927
    %1929 = vrot.lane.b32.xlu0 %v1615, 125
    %v1930 = vpop.permute.xlu0 %1929
    %1931 = vrot.lane.b32.xlu0 %v1617, 125
    %v1932 = vpop.permute.xlu0 %1931
    %1933 = vrot.lane.b32.xlu0 %v1612, 125
    %v1934 = vpop.permute.xlu0 %1933
    %1935 = vrot.lane.b32.xlu0 %v1614, 125
    %v1936 = vpop.permute.xlu0 %1935
    %1937 = vrot.lane.b32.xlu0 %v1616, 125
    %v1938 = vpop.permute.xlu0 %1937
    %1939 = vrot.lane.b32.xlu0 %v1618, 125
    %v1940 = vpop.permute.xlu0 %1939
    %v1941 = vsel %vm465, %v1926, %v1934
    %v1942 = vsel %vm465, %v1928, %v1936
    %v1943 = vsel %vm465, %v1930, %v1938
    %v1944 = vsel %vm465, %v1932, %v1940
    %v1945 = vsel %vm465, %v1934, %v1926
    %v1946 = vsel %vm465, %v1936, %v1928
    %v1947 = vsel %vm465, %v1938, %v1930
    %v1948 = vsel %vm465, %v1940, %v1932
    %v1949 = vsel %vm104, %v1941, 0.0
    %v1950 = vsel %vm105, %v1945, 0.0
    %v1951 = vsel %vm106, %v1942, 0.0
    %v1952 = vsel %vm107, %v1946, 0.0
    %v1953 = vsel %vm108, %v1943, 0.0
    %v1954 = vsel %vm109, %v1947, 0.0
    %v1955 = vsel %vm110, %v1944, 0.0
    %v1956 = vsel %vm111, %v1948, 0.0
    %1957 = vst [vmem:[#allocation2 + $0x200] sm:$0xff] %v1949
    %1958 = vst [vmem:[#allocation2 + $0x208] sm:$0xff] %v1950
    %1959 = vst [vmem:[#allocation2 + $0x210] sm:$0xff] %v1951
    %1960 = vst [vmem:[#allocation2 + $0x218] sm:$0xff] %v1952
    %1961 = vst [vmem:[#allocation2 + $0x220] sm:$0xff] %v1953
    %1962 = vst [vmem:[#allocation2 + $0x228] sm:$0xff] %v1954
    %1963 = vst [vmem:[#allocation2 + $0x230] sm:$0xff] %v1955
    %1964 = vst [vmem:[#allocation2 + $0x238] sm:$0xff] %v1956
    %1965 = vrot.lane.b32.xlu0 %v1611, 124
    %v1966 = vpop.permute.xlu0 %1965
    %1967 = vrot.lane.b32.xlu0 %v1613, 124
    %v1968 = vpop.permute.xlu0 %1967
    %1969 = vrot.lane.b32.xlu0 %v1615, 124
    %v1970 = vpop.permute.xlu0 %1969
    %1971 = vrot.lane.b32.xlu0 %v1617, 124
    %v1972 = vpop.permute.xlu0 %1971
    %1973 = vrot.lane.b32.xlu0 %v1612, 124
    %v1974 = vpop.permute.xlu0 %1973
    %1975 = vrot.lane.b32.xlu0 %v1614, 124
    %v1976 = vpop.permute.xlu0 %1975
    %1977 = vrot.lane.b32.xlu0 %v1616, 124
    %v1978 = vpop.permute.xlu0 %1977
    %1979 = vrot.lane.b32.xlu0 %v1618, 124
    %v1980 = vpop.permute.xlu0 %1979
    %v1981 = vsel %vm506, %v1966, %v1974
    %v1982 = vsel %vm506, %v1968, %v1976
    %v1983 = vsel %vm506, %v1970, %v1978
    %v1984 = vsel %vm506, %v1972, %v1980
    %v1985 = vsel %vm506, %v1974, %v1966
    %v1986 = vsel %vm506, %v1976, %v1968
    %v1987 = vsel %vm506, %v1978, %v1970
    %v1988 = vsel %vm506, %v1980, %v1972
    %v1989 = vsel %vm112, %v1981, 0.0
    %v1990 = vsel %vm113, %v1985, 0.0
    %v1991 = vsel %vm114, %v1982, 0.0
    %v1992 = vsel %vm115, %v1986, 0.0
    %v1993 = vsel %vm116, %v1983, 0.0
    %v1994 = vsel %vm117, %v1987, 0.0
    %v1995 = vsel %vm118, %v1984, 0.0
    %v1996 = vsel %vm119, %v1988, 0.0
    %1997 = vst [vmem:[#allocation2 + $0x240] sm:$0xff] %v1989
    %1998 = vst [vmem:[#allocation2 + $0x248] sm:$0xff] %v1990
    %1999 = vst [vmem:[#allocation2 + $0x250] sm:$0xff] %v1991
    %2000 = vst [vmem:[#allocation2 + $0x258] sm:$0xff] %v1992
    %2001 = vst [vmem:[#allocation2 + $0x260] sm:$0xff] %v1993
    %2002 = vst [vmem:[#allocation2 + $0x268] sm:$0xff] %v1994
    %2003 = vst [vmem:[#allocation2 + $0x270] sm:$0xff] %v1995
    %2004 = vst [vmem:[#allocation2 + $0x278] sm:$0xff] %v1996
    %2005 = vrot.lane.b32.xlu0 %v1611, 123
    %v2006 = vpop.permute.xlu0 %2005
    %2007 = vrot.lane.b32.xlu0 %v1613, 123
    %v2008 = vpop.permute.xlu0 %2007
    %2009 = vrot.lane.b32.xlu0 %v1615, 123
    %v2010 = vpop.permute.xlu0 %2009
    %2011 = vrot.lane.b32.xlu0 %v1617, 123
    %v2012 = vpop.permute.xlu0 %2011
    %2013 = vrot.lane.b32.xlu0 %v1612, 123
    %v2014 = vpop.permute.xlu0 %2013
    %2015 = vrot.lane.b32.xlu0 %v1614, 123
    %v2016 = vpop.permute.xlu0 %2015
    %2017 = vrot.lane.b32.xlu0 %v1616, 123
    %v2018 = vpop.permute.xlu0 %2017
    %2019 = vrot.lane.b32.xlu0 %v1618, 123
    %v2020 = vpop.permute.xlu0 %2019
    %v2021 = vsel %vm547, %v2006, %v2014
    %v2022 = vsel %vm547, %v2008, %v2016
    %v2023 = vsel %vm547, %v2010, %v2018
    %v2024 = vsel %vm547, %v2012, %v2020
    %v2025 = vsel %vm547, %v2014, %v2006
    %v2026 = vsel %vm547, %v2016, %v2008
    %v2027 = vsel %vm547, %v2018, %v2010
    %v2028 = vsel %vm547, %v2020, %v2012
    %v2029 = vsel %vm120, %v2021, 0.0
    %v2030 = vsel %vm121, %v2025, 0.0
    %v2031 = vsel %vm122, %v2022, 0.0
    %v2032 = vsel %vm123, %v2026, 0.0
    %v2033 = vsel %vm124, %v2023, 0.0
    %v2034 = vsel %vm125, %v2027, 0.0
    %v2035 = vsel %vm126, %v2024, 0.0
    %v2036 = vsel %vm127, %v2028, 0.0
    %2037 = vst [vmem:[#allocation2 + $0x280] sm:$0xff] %v2029
    %2038 = vst [vmem:[#allocation2 + $0x288] sm:$0xff] %v2030
    %2039 = vst [vmem:[#allocation2 + $0x290] sm:$0xff] %v2031
    %2040 = vst [vmem:[#allocation2 + $0x298] sm:$0xff] %v2032
    %2041 = vst [vmem:[#allocation2 + $0x2a0] sm:$0xff] %v2033
    %2042 = vst [vmem:[#allocation2 + $0x2a8] sm:$0xff] %v2034
    %2043 = vst [vmem:[#allocation2 + $0x2b0] sm:$0xff] %v2035
    %2044 = vst [vmem:[#allocation2 + $0x2b8] sm:$0xff] %v2036
    %v2045 = vld [vmem:[#allocation2] sm:$0xff]
    %v2046 = vld [vmem:[#allocation2 + $0x8] sm:$0xff]
    %v2047 = vld [vmem:[#allocation2 + $0x10] sm:$0xff]
    %v2048 = vld [vmem:[#allocation2 + $0x18] sm:$0xff]
    %v2049 = vld [vmem:[#allocation2 + $0x20] sm:$0xff]
    %v2050 = vld [vmem:[#allocation2 + $0x28] sm:$0xff]
    %v2051 = vld [vmem:[#allocation2 + $0x30] sm:$0xff]
    %v2052 = vld [vmem:[#allocation2 + $0x38] sm:$0xff]
    %v2053 = vld [vmem:[#allocation2 + $0x40] sm:$0xff]
    %v2054 = vld [vmem:[#allocation2 + $0x48] sm:$0xff]
    %v2055 = vld [vmem:[#allocation2 + $0x50] sm:$0xff]
    %v2056 = vld [vmem:[#allocation2 + $0x58] sm:$0xff]
    %v2057 = vld [vmem:[#allocation2 + $0x60] sm:$0xff]
    %v2058 = vld [vmem:[#allocation2 + $0x68] sm:$0xff]
    %v2059 = vld [vmem:[#allocation2 + $0x70] sm:$0xff]
    %v2060 = vld [vmem:[#allocation2 + $0x78] sm:$0xff]
    %v2061 = vld [vmem:[#allocation2 + $0x80] sm:$0xff]
    %v2062 = vld [vmem:[#allocation2 + $0x88] sm:$0xff]
    %v2063 = vld [vmem:[#allocation2 + $0x90] sm:$0xff]
    %v2064 = vld [vmem:[#allocation2 + $0x98] sm:$0xff]
    %v2065 = vld [vmem:[#allocation2 + $0xa0] sm:$0xff]
    %v2066 = vld [vmem:[#allocation2 + $0xa8] sm:$0xff]
    %v2067 = vld [vmem:[#allocation2 + $0xb0] sm:$0xff]
    %v2068 = vld [vmem:[#allocation2 + $0xb8] sm:$0xff]
    %v2069 = vld [vmem:[#allocation2 + $0xc0] sm:$0xff]
    %v2070 = vld [vmem:[#allocation2 + $0xc8] sm:$0xff]
    %v2071 = vld [vmem:[#allocation2 + $0xd0] sm:$0xff]
    %v2072 = vld [vmem:[#allocation2 + $0xd8] sm:$0xff]
    %v2073 = vld [vmem:[#allocation2 + $0xe0] sm:$0xff]
    %v2074 = vld [vmem:[#allocation2 + $0xe8] sm:$0xff]
    %v2075 = vld [vmem:[#allocation2 + $0xf0] sm:$0xff]
    %v2076 = vld [vmem:[#allocation2 + $0xf8] sm:$0xff]
    %v2077 = vld [vmem:[#allocation2 + $0x100] sm:$0xff]
    %v2078 = vld [vmem:[#allocation2 + $0x108] sm:$0xff]
    %v2079 = vld [vmem:[#allocation2 + $0x110] sm:$0xff]
    %v2080 = vld [vmem:[#allocation2 + $0x118] sm:$0xff]
    %v2081 = vld [vmem:[#allocation2 + $0x120] sm:$0xff]
    %v2082 = vld [vmem:[#allocation2 + $0x128] sm:$0xff]
    %v2083 = vld [vmem:[#allocation2 + $0x130] sm:$0xff]
    %v2084 = vld [vmem:[#allocation2 + $0x138] sm:$0xff]
    %v2085 = vld [vmem:[#allocation2 + $0x140] sm:$0xff]
    %v2086 = vld [vmem:[#allocation2 + $0x148] sm:$0xff]
    %v2087 = vld [vmem:[#allocation2 + $0x150] sm:$0xff]
    %v2088 = vld [vmem:[#allocation2 + $0x158] sm:$0xff]
    %v2089 = vld [vmem:[#allocation2 + $0x160] sm:$0xff]
    %v2090 = vld [vmem:[#allocation2 + $0x168] sm:$0xff]
    %v2091 = vld [vmem:[#allocation2 + $0x170] sm:$0xff]
    %v2092 = vld [vmem:[#allocation2 + $0x178] sm:$0xff]
    %v2093 = vld [vmem:[#allocation2 + $0x180] sm:$0xff]
    %v2094 = vld [vmem:[#allocation2 + $0x188] sm:$0xff]
    %v2095 = vld [vmem:[#allocation2 + $0x190] sm:$0xff]
    %v2096 = vld [vmem:[#allocation2 + $0x198] sm:$0xff]
    %v2097 = vld [vmem:[#allocation2 + $0x1a0] sm:$0xff]
    %v2098 = vld [vmem:[#allocation2 + $0x1a8] sm:$0xff]
    %v2099 = vld [vmem:[#allocation2 + $0x1b0] sm:$0xff]
    %v2100 = vld [vmem:[#allocation2 + $0x1b8] sm:$0xff]
    %v2101 = vld [vmem:[#allocation2 + $0x1c0] sm:$0xff]
    %v2102 = vld [vmem:[#allocation2 + $0x1c8] sm:$0xff]
    %v2103 = vld [vmem:[#allocation2 + $0x1d0] sm:$0xff]
    %v2104 = vld [vmem:[#allocation2 + $0x1d8] sm:$0xff]
    %v2105 = vld [vmem:[#allocation2 + $0x1e0] sm:$0xff]
    %v2106 = vld [vmem:[#allocation2 + $0x1e8] sm:$0xff]
    %v2107 = vld [vmem:[#allocation2 + $0x1f0] sm:$0xff]
    %v2108 = vld [vmem:[#allocation2 + $0x1f8] sm:$0xff]
    %v2109 = vld [vmem:[#allocation2 + $0x200] sm:$0xff]
    %v2110 = vld [vmem:[#allocation2 + $0x208] sm:$0xff]
    %v2111 = vld [vmem:[#allocation2 + $0x210] sm:$0xff]
    %v2112 = vld [vmem:[#allocation2 + $0x218] sm:$0xff]
    %v2113 = vld [vmem:[#allocation2 + $0x220] sm:$0xff]
    %v2114 = vld [vmem:[#allocation2 + $0x228] sm:$0xff]
    %v2115 = vld [vmem:[#allocation2 + $0x230] sm:$0xff]
    %v2116 = vld [vmem:[#allocation2 + $0x238] sm:$0xff]
    %v2117 = vld [vmem:[#allocation2 + $0x240] sm:$0xff]
    %v2118 = vld [vmem:[#allocation2 + $0x248] sm:$0xff]
    %v2119 = vld [vmem:[#allocation2 + $0x250] sm:$0xff]
    %v2120 = vld [vmem:[#allocation2 + $0x258] sm:$0xff]
    %v2121 = vld [vmem:[#allocation2 + $0x260] sm:$0xff]
    %v2122 = vld [vmem:[#allocation2 + $0x268] sm:$0xff]
    %v2123 = vld [vmem:[#allocation2 + $0x270] sm:$0xff]
    %v2124 = vld [vmem:[#allocation2 + $0x278] sm:$0xff]
    %v2125 = vld [vmem:[#allocation2 + $0x280] sm:$0xff]
    %v2126 = vld [vmem:[#allocation2 + $0x288] sm:$0xff]
    %v2127 = vld [vmem:[#allocation2 + $0x290] sm:$0xff]
    %v2128 = vld [vmem:[#allocation2 + $0x298] sm:$0xff]
    %v2129 = vld [vmem:[#allocation2 + $0x2a0] sm:$0xff]
    %v2130 = vld [vmem:[#allocation2 + $0x2a8] sm:$0xff]
    %v2131 = vld [vmem:[#allocation2 + $0x2b0] sm:$0xff]
    %v2132 = vld [vmem:[#allocation2 + $0x2b8] sm:$0xff]
    %2134 = vset.pattern.permute.xlu0 0
    %2135 = vperm.xlu0 %2134, %v1633
    %v2136 = vpop.permute.xlu0 %2135
    %2139 = vset.pattern.permute.xlu0 0
    %2140 = vperm.xlu0 %2139, %v1634
    %v2141 = vpop.permute.xlu0 %2140
    %2144 = vset.pattern.permute.xlu0 0
    %2145 = vperm.xlu0 %2144, %v1635
    %v2146 = vpop.permute.xlu0 %2145
    %2149 = vset.pattern.permute.xlu0 0
    %2150 = vperm.xlu0 %2149, %v1636
    %v2151 = vpop.permute.xlu0 %2150
    %v2154 = vsel %vm680, %v1622, 0
    %v2157 = vsel %vm680, %v1625, 0
    %v2160 = vsel %vm680, %v1628, 0
    %v2163 = vsel %vm680, %v1631, 0
    %2165 = vmatprep.subr.mxu0 %v2046
    %2166 = vmatpush1.msra.mxu0 %v2045
    %2167 = vmatprep.subr.mxu0 %v2048
    %2168 = vmatpush1.msra.mxu0 %v2047
    %2169 = vmatprep.subr.mxu0 %v2050
    %2170 = vmatpush1.msra.mxu0 %v2049
    %2171 = vmatprep.subr.mxu0 %v2052
    %2172 = vmatpush1.msra.mxu0 %v2051
    %2173 = vmatprep.subr.mxu0 %v2054
    %2174 = vmatpush1.msra.mxu0 %v2053
    %2175 = vmatprep.subr.mxu0 %v2056
    %2176 = vmatpush1.msra.mxu0 %v2055
    %2177 = vmatprep.subr.mxu0 %v2058
    %2178 = vmatpush1.msra.mxu0 %v2057
    %2179 = vmatprep.subr.mxu0 %v2060
    %2180 = vmatpush1.msra.mxu0 %v2059
    %2181 = vmatprep.subr.mxu0 %v2062
    %2182 = vmatpush1.msra.mxu0 %v2061
    %2183 = vmatprep.subr.mxu0 %v2064
    %2184 = vmatpush1.msra.mxu0 %v2063
    %2185 = vmatprep.subr.mxu0 %v2066
    %2186 = vmatpush1.msra.mxu0 %v2065
    %2187 = vmatprep.subr.mxu0 %v2068
    %2188 = vmatpush1.msra.mxu0 %v2067
    %2189 = vmatprep.subr.mxu0 %v2070
    %2190 = vmatpush1.msra.mxu0 %v2069
    %2191 = vmatprep.subr.mxu0 %v2072
    %2192 = vmatpush1.msra.mxu0 %v2071
    %2193 = vmatprep.subr.mxu0 %v2074
    %2194 = vmatpush1.msra.mxu0 %v2073
    %2195 = vmatprep.subr.mxu0 %v2076
    %2196 = vmatpush1.msra.mxu0 %v2075
    %2197 = vmatprep.subr.mxu0 %v2078
    %2198 = vmatpush1.msra.mxu0 %v2077
    %2199 = vmatprep.subr.mxu0 %v2080
    %2200 = vmatpush1.msra.mxu0 %v2079
    %2201 = vmatprep.subr.mxu0 %v2082
    %2202 = vmatpush1.msra.mxu0 %v2081
    %2203 = vmatprep.subr.mxu0 %v2084
    %2204 = vmatpush1.msra.mxu0 %v2083
    %2205 = vmatprep.subr.mxu0 %v2086
    %2206 = vmatpush1.msra.mxu0 %v2085
    %2207 = vmatprep.subr.mxu0 %v2088
    %2208 = vmatpush1.msra.mxu0 %v2087
    %2209 = vmatprep.subr.mxu0 %v2090
    %2210 = vmatpush1.msra.mxu0 %v2089
    %2211 = vmatprep.subr.mxu0 %v2092
    %2212 = vmatpush1.msra.mxu0 %v2091
    %2213 = vmatprep.subr.mxu0 %v2094
    %2214 = vmatpush1.msra.mxu0 %v2093
    %2215 = vmatprep.subr.mxu0 %v2096
    %2216 = vmatpush1.msra.mxu0 %v2095
    %2217 = vmatprep.subr.mxu0 %v2098
    %2218 = vmatpush1.msra.mxu0 %v2097
    %2219 = vmatprep.subr.mxu0 %v2100
    %2220 = vmatpush1.msra.mxu0 %v2099
    %2221 = vmatprep.subr.mxu0 %v2102
    %2222 = vmatpush1.msra.mxu0 %v2101
    %2223 = vmatprep.subr.mxu0 %v2104
    %2224 = vmatpush1.msra.mxu0 %v2103
    %2225 = vmatprep.subr.mxu0 %v2106
    %2226 = vmatpush1.msra.mxu0 %v2105
    %2227 = vmatprep.subr.mxu0 %v2108
    %2228 = vmatpush1.msra.mxu0 %v2107
    %2229 = vmatprep.mubr.f32.mxu0 %v1621
    %2230 = vmatmul.mubr.f32.gmra.mrb[0].mxu0 %v1620
    %v2231 = vpop.f32.mrb[0].mxu0
    %v2232 = vadd.f32 %v2136, %v2231
    %v2233 = vpop.f32.mrb[0].mxu0
    %v2234 = vadd.f32 %v2136, %v2233
    %2235 = vmatprep.mubr.f32.mxu0 %v1624
    %2236 = vmatmul.mubr.f32.gmra.mrb[0].mxu0 %v1623
    %v2237 = vpop.f32.mrb[0].mxu0
    %v2238 = vadd.f32 %v2141, %v2237
    %v2239 = vpop.f32.mrb[0].mxu0
    %v2240 = vadd.f32 %v2141, %v2239
    %2241 = vmatprep.mubr.f32.mxu0 %v1627
    %2242 = vmatmul.mubr.f32.gmra.mrb[0].mxu0 %v1626
    %v2243 = vpop.f32.mrb[0].mxu0
    %v2244 = vadd.f32 %v2146, %v2243
    %v2245 = vpop.f32.mrb[0].mxu0
    %v2246 = vadd.f32 %v2146, %v2245
    %2247 = vmatprep.mubr.f32.mxu0 %v1630
    %2248 = vmatmul.mubr.f32.gmra.mrb[0].mxu0 %v1629
    %v2249 = vpop.f32.mrb[0].mxu0
    %v2250 = vadd.f32 %v2151, %v2249
    %v2251 = vpop.f32.mrb[0].mxu0
    %v2252 = vadd.f32 %v2151, %v2251
    %2253 = vdwg.mxu0
    %2254 = vmatprep.subr.mxu0 %v2110
    %2255 = vmatpush1.msra.mxu0 %v2109
    %2256 = vmatprep.subr.mxu0 %v2112
    %2257 = vmatpush1.msra.mxu0 %v2111
    %2258 = vmatprep.subr.mxu0 %v2114
    %2259 = vmatpush1.msra.mxu0 %v2113
    %2260 = vmatprep.subr.mxu0 %v2116
    %2261 = vmatpush1.msra.mxu0 %v2115
    %2262 = vmatprep.subr.mxu0 %v2118
    %2263 = vmatpush1.msra.mxu0 %v2117
    %2264 = vmatprep.subr.mxu0 %v2120
    %2265 = vmatpush1.msra.mxu0 %v2119
    %2266 = vmatprep.subr.mxu0 %v2122
    %2267 = vmatpush1.msra.mxu0 %v2121
    %2268 = vmatprep.subr.mxu0 %v2124
    %2269 = vmatpush1.msra.mxu0 %v2123
    %2270 = vmatprep.subr.mxu0 %v2126
    %2271 = vmatpush1.msra.mxu0 %v2125
    %2272 = vmatprep.subr.mxu0 %v2128
    %2273 = vmatpush1.msra.mxu0 %v2127
    %2274 = vmatprep.subr.mxu0 %v2130
    %2275 = vmatpush1.msra.mxu0 %v2129
    %2276 = vmatprep.subr.mxu0 %v2132
    %2277 = vmatpush1.msra.mxu0 %v2131
    %2278 = vmatprep.subr.mxu0 0.0
    %2279 = vmatpush1.msra.mxu0 0.0
    %2280 = vmatprep.subr.mxu0 0.0
    %2281 = vmatpush1.msra.mxu0 0.0
    %2282 = vmatprep.subr.mxu0 0.0
    %2283 = vmatpush1.msra.mxu0 0.0
    %2284 = vmatprep.subr.mxu0 0.0
    %2285 = vmatpush1.msra.mxu0 0.0
    %2286 = vmatprep.subr.mxu0 0.0
    %2287 = vmatpush1.msra.mxu0 0.0
    %2288 = vmatprep.subr.mxu0 0.0
    %2289 = vmatpush1.msra.mxu0 0.0
    %2290 = vmatprep.subr.mxu0 0.0
    %2291 = vmatpush1.msra.mxu0 0.0
    %2292 = vmatprep.subr.mxu0 0.0
    %2293 = vmatpush1.msra.mxu0 0.0
    %2294 = vmatprep.subr.mxu0 0.0
    %2295 = vmatpush1.msra.mxu0 0.0
    %2296 = vmatprep.subr.mxu0 0.0
    %2297 = vmatpush1.msra.mxu0 0.0
    %2298 = vmatprep.subr.mxu0 0.0
    %2299 = vmatpush1.msra.mxu0 0.0
    %2300 = vmatprep.subr.mxu0 0.0
    %2301 = vmatpush1.msra.mxu0 0.0
    %2302 = vmatprep.subr.mxu0 0.0
    %2303 = vmatpush1.msra.mxu0 0.0
    %2304 = vmatprep.subr.mxu0 0.0
    %2305 = vmatpush1.msra.mxu0 0.0
    %2306 = vmatprep.subr.mxu0 0.0
    %2307 = vmatpush1.msra.mxu0 0.0
    %2308 = vmatprep.subr.mxu0 0.0
    %2309 = vmatpush1.msra.mxu0 0.0
    %2310 = vmatprep.subr.mxu0 0.0
    %2311 = vmatpush1.msra.mxu0 0.0
    %2312 = vmatprep.subr.mxu0 0.0
    %2313 = vmatpush1.msra.mxu0 0.0
    %2314 = vmatprep.subr.mxu0 0.0
    %2315 = vmatpush1.msra.mxu0 0.0
    %2316 = vmatprep.subr.mxu0 0.0
    %2317 = vmatpush1.msra.mxu0 0.0
    %2318 = vmatprep.mubr.f32.mxu0 0.0
    %2319 = vmatmul.mubr.f32.gmra.mrb[0].mxu0 %v2154
    %v2320 = vpop.f32.mrb[0].mxu0
    %v2321 = vadd.f32 %v2232, %v2320
    %v2322 = vpop.f32.mrb[0].mxu0
    %v2323 = vadd.f32 %v2234, %v2322
    %2324 = vmatprep.mubr.f32.mxu0 0.0
    %2325 = vmatmul.mubr.f32.gmra.mrb[0].mxu0 %v2157
    %v2326 = vpop.f32.mrb[0].mxu0
    %v2327 = vadd.f32 %v2238, %v2326
    %v2328 = vpop.f32.mrb[0].mxu0
    %v2329 = vadd.f32 %v2240, %v2328
    %2330 = vmatprep.mubr.f32.mxu0 0.0
    %2331 = vmatmul.mubr.f32.gmra.mrb[0].mxu0 %v2160
    %v2332 = vpop.f32.mrb[0].mxu0
    %v2333 = vadd.f32 %v2244, %v2332
    %v2334 = vpop.f32.mrb[0].mxu0
    %v2335 = vadd.f32 %v2246, %v2334
    %2336 = vmatprep.mubr.f32.mxu0 0.0
    %2337 = vmatmul.mubr.f32.gmra.mrb[0].mxu0 %v2163
    %v2338 = vpop.f32.mrb[0].mxu0
    %v2339 = vadd.f32 %v2250, %v2338
    %v2340 = vpop.f32.mrb[0].mxu0
    %v2341 = vadd.f32 %v2252, %v2340
    %2342 = vdwg.mxu0
    %v2343 = vmax.f32 %v2321, 0.0
    %v2344 = vmax.f32 %v2323, 0.0
    %v2345 = vmax.f32 %v2327, 0.0
    %v2346 = vmax.f32 %v2329, 0.0
    %v2347 = vmax.f32 %v2333, 0.0
    %v2348 = vmax.f32 %v2335, 0.0
    %v2349 = vmax.f32 %v2339, 0.0
    %v2350 = vmax.f32 %v2341, 0.0
    %s2351 = scalar_lea.vmem [#allocation4], 288
    %v2352 = vld [vmem:[%s2351] sm:$0xff]
    %v2353 = vld [vmem:[%s2351 + $0x8] sm:$0xff]
    %v2354 = vld [vmem:[%s2351 + $0x10] sm:$0xff]
    %v2355 = vld [vmem:[%s2351 + $0x18] sm:$0xff]
    %v2356 = vld [vmem:[%s2351 + $0x20] sm:$0xff]
    %v2357 = vld [vmem:[%s2351 + $0x28] sm:$0xff]
    %v2358 = vld [vmem:[%s2351 + $0x30] sm:$0xff]
    %v2359 = vld [vmem:[%s2351 + $0x38] sm:$0xff]
    %v2360 = vld [vmem:[%s2351 + $0x40] sm:$0xff]
    %v2361 = vld [vmem:[%s2351 + $0x48] sm:$0xff]
    %v2362 = vld [vmem:[%s2351 + $0x50] sm:$0xff]
    %v2363 = vld [vmem:[%s2351 + $0x58] sm:$0xff]
    %s2364 = scalar_lea.vmem %s3, 96
    %v2365 = vld [vmem:[%s2364] sm:$0xff]
    %v2366 = vld [vmem:[%s2364 + $0x8] sm:$0xff]
    %v2367 = vld [vmem:[%s2364 + $0x10] sm:$0xff]
    %v2368 = vld [vmem:[%s2364 + $0x18] sm:$0xff]
    %2369 = vrot.lane.b32.xlu0 %v2343, 5
    %v2370 = vpop.permute.xlu0 %2369
    %2371 = vrot.lane.b32.xlu0 %v2345, 5
    %v2372 = vpop.permute.xlu0 %2371
    %2373 = vrot.lane.b32.xlu0 %v2347, 5
    %v2374 = vpop.permute.xlu0 %2373
    %2375 = vrot.lane.b32.xlu0 %v2349, 5
    %v2376 = vpop.permute.xlu0 %2375
    %2377 = vrot.lane.b32.xlu0 %v2344, 5
    %v2378 = vpop.permute.xlu0 %2377
    %2379 = vrot.lane.b32.xlu0 %v2346, 5
    %v2380 = vpop.permute.xlu0 %2379
    %2381 = vrot.lane.b32.xlu0 %v2348, 5
    %v2382 = vpop.permute.xlu0 %2381
    %2383 = vrot.lane.b32.xlu0 %v2350, 5
    %v2384 = vpop.permute.xlu0 %2383
    %v2385 = vsel %vm170, %v2370, %v2378
    %v2386 = vsel %vm170, %v2372, %v2380
    %v2387 = vsel %vm170, %v2374, %v2382
    %v2388 = vsel %vm170, %v2376, %v2384
    %v2389 = vsel %vm170, %v2378, %v2370
    %v2390 = vsel %vm170, %v2380, %v2372
    %v2391 = vsel %vm170, %v2382, %v2374
    %v2392 = vsel %vm170, %v2384, %v2376
    %v2393 = vsel %vm48, %v2389, 0.0
    %v2394 = vsel %vm49, %v2385, 0.0
    %v2395 = vsel %vm50, %v2390, 0.0
    %v2396 = vsel %vm51, %v2386, 0.0
    %v2397 = vsel %vm52, %v2391, 0.0
    %v2398 = vsel %vm53, %v2387, 0.0
    %v2399 = vsel %vm54, %v2392, 0.0
    %v2400 = vsel %vm55, %v2388, 0.0
    %2401 = vst [vmem:[#allocation2] sm:$0xff] %v2393
    %2402 = vst [vmem:[#allocation2 + $0x8] sm:$0xff] %v2394
    %2403 = vst [vmem:[#allocation2 + $0x10] sm:$0xff] %v2395
    %2404 = vst [vmem:[#allocation2 + $0x18] sm:$0xff] %v2396
    %2405 = vst [vmem:[#allocation2 + $0x20] sm:$0xff] %v2397
    %2406 = vst [vmem:[#allocation2 + $0x28] sm:$0xff] %v2398
    %2407 = vst [vmem:[#allocation2 + $0x30] sm:$0xff] %v2399
    %2408 = vst [vmem:[#allocation2 + $0x38] sm:$0xff] %v2400
    %2409 = vrot.lane.b32.xlu0 %v2343, 4
    %v2410 = vpop.permute.xlu0 %2409
    %2411 = vrot.lane.b32.xlu0 %v2345, 4
    %v2412 = vpop.permute.xlu0 %2411
    %2413 = vrot.lane.b32.xlu0 %v2347, 4
    %v2414 = vpop.permute.xlu0 %2413
    %2415 = vrot.lane.b32.xlu0 %v2349, 4
    %v2416 = vpop.permute.xlu0 %2415
    %2417 = vrot.lane.b32.xlu0 %v2344, 4
    %v2418 = vpop.permute.xlu0 %2417
    %2419 = vrot.lane.b32.xlu0 %v2346, 4
    %v2420 = vpop.permute.xlu0 %2419
    %2421 = vrot.lane.b32.xlu0 %v2348, 4
    %v2422 = vpop.permute.xlu0 %2421
    %2423 = vrot.lane.b32.xlu0 %v2350, 4
    %v2424 = vpop.permute.xlu0 %2423
    %v2425 = vsel %vm211, %v2410, %v2418
    %v2426 = vsel %vm211, %v2412, %v2420
    %v2427 = vsel %vm211, %v2414, %v2422
    %v2428 = vsel %vm211, %v2416, %v2424
    %v2429 = vsel %vm211, %v2418, %v2410
    %v2430 = vsel %vm211, %v2420, %v2412
    %v2431 = vsel %vm211, %v2422, %v2414
    %v2432 = vsel %vm211, %v2424, %v2416
    %v2433 = vsel %vm56, %v2429, 0.0
    %v2434 = vsel %vm57, %v2425, 0.0
    %v2435 = vsel %vm58, %v2430, 0.0
    %v2436 = vsel %vm59, %v2426, 0.0
    %v2437 = vsel %vm60, %v2431, 0.0
    %v2438 = vsel %vm61, %v2427, 0.0
    %v2439 = vsel %vm62, %v2432, 0.0
    %v2440 = vsel %vm63, %v2428, 0.0
    %2441 = vst [vmem:[#allocation2 + $0x40] sm:$0xff] %v2433
    %2442 = vst [vmem:[#allocation2 + $0x48] sm:$0xff] %v2434
    %2443 = vst [vmem:[#allocation2 + $0x50] sm:$0xff] %v2435
    %2444 = vst [vmem:[#allocation2 + $0x58] sm:$0xff] %v2436
    %2445 = vst [vmem:[#allocation2 + $0x60] sm:$0xff] %v2437
    %2446 = vst [vmem:[#allocation2 + $0x68] sm:$0xff] %v2438
    %2447 = vst [vmem:[#allocation2 + $0x70] sm:$0xff] %v2439
    %2448 = vst [vmem:[#allocation2 + $0x78] sm:$0xff] %v2440
    %2449 = vrot.lane.b32.xlu0 %v2343, 3
    %v2450 = vpop.permute.xlu0 %2449
    %2451 = vrot.lane.b32.xlu0 %v2345, 3
    %v2452 = vpop.permute.xlu0 %2451
    %2453 = vrot.lane.b32.xlu0 %v2347, 3
    %v2454 = vpop.permute.xlu0 %2453
    %2455 = vrot.lane.b32.xlu0 %v2349, 3
    %v2456 = vpop.permute.xlu0 %2455
    %2457 = vrot.lane.b32.xlu0 %v2344, 3
    %v2458 = vpop.permute.xlu0 %2457
    %2459 = vrot.lane.b32.xlu0 %v2346, 3
    %v2460 = vpop.permute.xlu0 %2459
    %2461 = vrot.lane.b32.xlu0 %v2348, 3
    %v2462 = vpop.permute.xlu0 %2461
    %2463 = vrot.lane.b32.xlu0 %v2350, 3
    %v2464 = vpop.permute.xlu0 %2463
    %v2465 = vsel %vm252, %v2450, %v2458
    %v2466 = vsel %vm252, %v2452, %v2460
    %v2467 = vsel %vm252, %v2454, %v2462
    %v2468 = vsel %vm252, %v2456, %v2464
    %v2469 = vsel %vm252, %v2458, %v2450
    %v2470 = vsel %vm252, %v2460, %v2452
    %v2471 = vsel %vm252, %v2462, %v2454
    %v2472 = vsel %vm252, %v2464, %v2456
    %v2473 = vsel %vm64, %v2469, 0.0
    %v2474 = vsel %vm65, %v2465, 0.0
    %v2475 = vsel %vm66, %v2470, 0.0
    %v2476 = vsel %vm67, %v2466, 0.0
    %v2477 = vsel %vm68, %v2471, 0.0
    %v2478 = vsel %vm69, %v2467, 0.0
    %v2479 = vsel %vm70, %v2472, 0.0
    %v2480 = vsel %vm71, %v2468, 0.0
    %2481 = vst [vmem:[#allocation2 + $0x80] sm:$0xff] %v2473
    %2482 = vst [vmem:[#allocation2 + $0x88] sm:$0xff] %v2474
    %2483 = vst [vmem:[#allocation2 + $0x90] sm:$0xff] %v2475
    %2484 = vst [vmem:[#allocation2 + $0x98] sm:$0xff] %v2476
    %2485 = vst [vmem:[#allocation2 + $0xa0] sm:$0xff] %v2477
    %2486 = vst [vmem:[#allocation2 + $0xa8] sm:$0xff] %v2478
    %2487 = vst [vmem:[#allocation2 + $0xb0] sm:$0xff] %v2479
    %2488 = vst [vmem:[#allocation2 + $0xb8] sm:$0xff] %v2480
    %2489 = vrot.lane.b32.xlu0 %v2343, 2
    %v2490 = vpop.permute.xlu0 %2489
    %2491 = vrot.lane.b32.xlu0 %v2345, 2
    %v2492 = vpop.permute.xlu0 %2491
    %2493 = vrot.lane.b32.xlu0 %v2347, 2
    %v2494 = vpop.permute.xlu0 %2493
    %2495 = vrot.lane.b32.xlu0 %v2349, 2
    %v2496 = vpop.permute.xlu0 %2495
    %2497 = vrot.lane.b32.xlu0 %v2344, 2
    %v2498 = vpop.permute.xlu0 %2497
    %2499 = vrot.lane.b32.xlu0 %v2346, 2
    %v2500 = vpop.permute.xlu0 %2499
    %2501 = vrot.lane.b32.xlu0 %v2348, 2
    %v2502 = vpop.permute.xlu0 %2501
    %2503 = vrot.lane.b32.xlu0 %v2350, 2
    %v2504 = vpop.permute.xlu0 %2503
    %v2505 = vsel %vm293, %v2490, %v2498
    %v2506 = vsel %vm293, %v2492, %v2500
    %v2507 = vsel %vm293, %v2494, %v2502
    %v2508 = vsel %vm293, %v2496, %v2504
    %v2509 = vsel %vm293, %v2498, %v2490
    %v2510 = vsel %vm293, %v2500, %v2492
    %v2511 = vsel %vm293, %v2502, %v2494
    %v2512 = vsel %vm293, %v2504, %v2496
    %v2513 = vsel %vm72, %v2509, 0.0
    %v2514 = vsel %vm73, %v2505, 0.0
    %v2515 = vsel %vm74, %v2510, 0.0
    %v2516 = vsel %vm75, %v2506, 0.0
    %v2517 = vsel %vm76, %v2511, 0.0
    %v2518 = vsel %vm77, %v2507, 0.0
    %v2519 = vsel %vm78, %v2512, 0.0
    %v2520 = vsel %vm79, %v2508, 0.0
    %2521 = vst [vmem:[#allocation2 + $0xc0] sm:$0xff] %v2513
    %2522 = vst [vmem:[#allocation2 + $0xc8] sm:$0xff] %v2514
    %2523 = vst [vmem:[#allocation2 + $0xd0] sm:$0xff] %v2515
    %2524 = vst [vmem:[#allocation2 + $0xd8] sm:$0xff] %v2516
    %2525 = vst [vmem:[#allocation2 + $0xe0] sm:$0xff] %v2517
    %2526 = vst [vmem:[#allocation2 + $0xe8] sm:$0xff] %v2518
    %2527 = vst [vmem:[#allocation2 + $0xf0] sm:$0xff] %v2519
    %2528 = vst [vmem:[#allocation2 + $0xf8] sm:$0xff] %v2520
    %2529 = vrot.lane.b32.xlu0 %v2343, 1
    %v2530 = vpop.permute.xlu0 %2529
    %2531 = vrot.lane.b32.xlu0 %v2345, 1
    %v2532 = vpop.permute.xlu0 %2531
    %2533 = vrot.lane.b32.xlu0 %v2347, 1
    %v2534 = vpop.permute.xlu0 %2533
    %2535 = vrot.lane.b32.xlu0 %v2349, 1
    %v2536 = vpop.permute.xlu0 %2535
    %2537 = vrot.lane.b32.xlu0 %v2344, 1
    %v2538 = vpop.permute.xlu0 %2537
    %2539 = vrot.lane.b32.xlu0 %v2346, 1
    %v2540 = vpop.permute.xlu0 %2539
    %2541 = vrot.lane.b32.xlu0 %v2348, 1
    %v2542 = vpop.permute.xlu0 %2541
    %2543 = vrot.lane.b32.xlu0 %v2350, 1
    %v2544 = vpop.permute.xlu0 %2543
    %v2545 = vsel %vm334, %v2530, %v2538
    %v2546 = vsel %vm334, %v2532, %v2540
    %v2547 = vsel %vm334, %v2534, %v2542
    %v2548 = vsel %vm334, %v2536, %v2544
    %v2549 = vsel %vm334, %v2538, %v2530
    %v2550 = vsel %vm334, %v2540, %v2532
    %v2551 = vsel %vm334, %v2542, %v2534
    %v2552 = vsel %vm334, %v2544, %v2536
    %v2553 = vsel %vm80, %v2549, 0.0
    %v2554 = vsel %vm81, %v2545, 0.0
    %v2555 = vsel %vm82, %v2550, 0.0
    %v2556 = vsel %vm83, %v2546, 0.0
    %v2557 = vsel %vm84, %v2551, 0.0
    %v2558 = vsel %vm85, %v2547, 0.0
    %v2559 = vsel %vm86, %v2552, 0.0
    %v2560 = vsel %vm87, %v2548, 0.0
    %2561 = vst [vmem:[#allocation2 + $0x100] sm:$0xff] %v2553
    %2562 = vst [vmem:[#allocation2 + $0x108] sm:$0xff] %v2554
    %2563 = vst [vmem:[#allocation2 + $0x110] sm:$0xff] %v2555
    %2564 = vst [vmem:[#allocation2 + $0x118] sm:$0xff] %v2556
    %2565 = vst [vmem:[#allocation2 + $0x120] sm:$0xff] %v2557
    %2566 = vst [vmem:[#allocation2 + $0x128] sm:$0xff] %v2558
    %2567 = vst [vmem:[#allocation2 + $0x130] sm:$0xff] %v2559
    %2568 = vst [vmem:[#allocation2 + $0x138] sm:$0xff] %v2560
    %2569 = vst [vmem:[#allocation2 + $0x140] sm:$0xff] %v2343
    %2570 = vst [vmem:[#allocation2 + $0x148] sm:$0xff] %v2344
    %2571 = vst [vmem:[#allocation2 + $0x150] sm:$0xff] %v2345
    %2572 = vst [vmem:[#allocation2 + $0x158] sm:$0xff] %v2346
    %2573 = vst [vmem:[#allocation2 + $0x160] sm:$0xff] %v2347
    %2574 = vst [vmem:[#allocation2 + $0x168] sm:$0xff] %v2348
    %2575 = vst [vmem:[#allocation2 + $0x170] sm:$0xff] %v2349
    %2576 = vst [vmem:[#allocation2 + $0x178] sm:$0xff] %v2350
    %2577 = vrot.lane.b32.xlu0 %v2343, 127
    %v2578 = vpop.permute.xlu0 %2577
    %2579 = vrot.lane.b32.xlu0 %v2345, 127
    %v2580 = vpop.permute.xlu0 %2579
    %2581 = vrot.lane.b32.xlu0 %v2347, 127
    %v2582 = vpop.permute.xlu0 %2581
    %2583 = vrot.lane.b32.xlu0 %v2349, 127
    %v2584 = vpop.permute.xlu0 %2583
    %2585 = vrot.lane.b32.xlu0 %v2344, 127
    %v2586 = vpop.permute.xlu0 %2585
    %2587 = vrot.lane.b32.xlu0 %v2346, 127
    %v2588 = vpop.permute.xlu0 %2587
    %2589 = vrot.lane.b32.xlu0 %v2348, 127
    %v2590 = vpop.permute.xlu0 %2589
    %2591 = vrot.lane.b32.xlu0 %v2350, 127
    %v2592 = vpop.permute.xlu0 %2591
    %v2593 = vsel %vm383, %v2578, %v2586
    %v2594 = vsel %vm383, %v2580, %v2588
    %v2595 = vsel %vm383, %v2582, %v2590
    %v2596 = vsel %vm383, %v2584, %v2592
    %v2597 = vsel %vm383, %v2586, %v2578
    %v2598 = vsel %vm383, %v2588, %v2580
    %v2599 = vsel %vm383, %v2590, %v2582
    %v2600 = vsel %vm383, %v2592, %v2584
    %v2601 = vsel %vm88, %v2593, 0.0
    %v2602 = vsel %vm89, %v2597, 0.0
    %v2603 = vsel %vm90, %v2594, 0.0
    %v2604 = vsel %vm91, %v2598, 0.0
    %v2605 = vsel %vm92, %v2595, 0.0
    %v2606 = vsel %vm93, %v2599, 0.0
    %v2607 = vsel %vm94, %v2596, 0.0
    %v2608 = vsel %vm95, %v2600, 0.0
    %2609 = vst [vmem:[#allocation2 + $0x180] sm:$0xff] %v2601
    %2610 = vst [vmem:[#allocation2 + $0x188] sm:$0xff] %v2602
    %2611 = vst [vmem:[#allocation2 + $0x190] sm:$0xff] %v2603
    %2612 = vst [vmem:[#allocation2 + $0x198] sm:$0xff] %v2604
    %2613 = vst [vmem:[#allocation2 + $0x1a0] sm:$0xff] %v2605
    %2614 = vst [vmem:[#allocation2 + $0x1a8] sm:$0xff] %v2606
    %2615 = vst [vmem:[#allocation2 + $0x1b0] sm:$0xff] %v2607
    %2616 = vst [vmem:[#allocation2 + $0x1b8] sm:$0xff] %v2608
    %2617 = vrot.lane.b32.xlu0 %v2343, 126
    %v2618 = vpop.permute.xlu0 %2617
    %2619 = vrot.lane.b32.xlu0 %v2345, 126
    %v2620 = vpop.permute.xlu0 %2619
    %2621 = vrot.lane.b32.xlu0 %v2347, 126
    %v2622 = vpop.permute.xlu0 %2621
    %2623 = vrot.lane.b32.xlu0 %v2349, 126
    %v2624 = vpop.permute.xlu0 %2623
    %2625 = vrot.lane.b32.xlu0 %v2344, 126
    %v2626 = vpop.permute.xlu0 %2625
    %2627 = vrot.lane.b32.xlu0 %v2346, 126
    %v2628 = vpop.permute.xlu0 %2627
    %2629 = vrot.lane.b32.xlu0 %v2348, 126
    %v2630 = vpop.permute.xlu0 %2629
    %2631 = vrot.lane.b32.xlu0 %v2350, 126
    %v2632 = vpop.permute.xlu0 %2631
    %v2633 = vsel %vm424, %v2618, %v2626
    %v2634 = vsel %vm424, %v2620, %v2628
    %v2635 = vsel %vm424, %v2622, %v2630
    %v2636 = vsel %vm424, %v2624, %v2632
    %v2637 = vsel %vm424, %v2626, %v2618
    %v2638 = vsel %vm424, %v2628, %v2620
    %v2639 = vsel %vm424, %v2630, %v2622
    %v2640 = vsel %vm424, %v2632, %v2624
    %v2641 = vsel %vm96, %v2633, 0.0
    %v2642 = vsel %vm97, %v2637, 0.0
    %v2643 = vsel %vm98, %v2634, 0.0
    %v2644 = vsel %vm99, %v2638, 0.0
    %v2645 = vsel %vm100, %v2635, 0.0
    %v2646 = vsel %vm101, %v2639, 0.0
    %v2647 = vsel %vm102, %v2636, 0.0
    %v2648 = vsel %vm103, %v2640, 0.0
    %2649 = vst [vmem:[#allocation2 + $0x1c0] sm:$0xff] %v2641
    %2650 = vst [vmem:[#allocation2 + $0x1c8] sm:$0xff] %v2642
    %2651 = vst [vmem:[#allocation2 + $0x1d0] sm:$0xff] %v2643
    %2652 = vst [vmem:[#allocation2 + $0x1d8] sm:$0xff] %v2644
    %2653 = vst [vmem:[#allocation2 + $0x1e0] sm:$0xff] %v2645
    %2654 = vst [vmem:[#allocation2 + $0x1e8] sm:$0xff] %v2646
    %2655 = vst [vmem:[#allocation2 + $0x1f0] sm:$0xff] %v2647
    %2656 = vst [vmem:[#allocation2 + $0x1f8] sm:$0xff] %v2648
    %2657 = vrot.lane.b32.xlu0 %v2343, 125
    %v2658 = vpop.permute.xlu0 %2657
    %2659 = vrot.lane.b32.xlu0 %v2345, 125
    %v2660 = vpop.permute.xlu0 %2659
    %2661 = vrot.lane.b32.xlu0 %v2347, 125
    %v2662 = vpop.permute.xlu0 %2661
    %2663 = vrot.lane.b32.xlu0 %v2349, 125
    %v2664 = vpop.permute.xlu0 %2663
    %2665 = vrot.lane.b32.xlu0 %v2344, 125
    %v2666 = vpop.permute.xlu0 %2665
    %2667 = vrot.lane.b32.xlu0 %v2346, 125
    %v2668 = vpop.permute.xlu0 %2667
    %2669 = vrot.lane.b32.xlu0 %v2348, 125
    %v2670 = vpop.permute.xlu0 %2669
    %2671 = vrot.lane.b32.xlu0 %v2350, 125
    %v2672 = vpop.permute.xlu0 %2671
    %v2673 = vsel %vm465, %v2658, %v2666
    %v2674 = vsel %vm465, %v2660, %v2668
    %v2675 = vsel %vm465, %v2662, %v2670
    %v2676 = vsel %vm465, %v2664, %v2672
    %v2677 = vsel %vm465, %v2666, %v2658
    %v2678 = vsel %vm465, %v2668, %v2660
    %v2679 = vsel %vm465, %v2670, %v2662
    %v2680 = vsel %vm465, %v2672, %v2664
    %v2681 = vsel %vm104, %v2673, 0.0
    %v2682 = vsel %vm105, %v2677, 0.0
    %v2683 = vsel %vm106, %v2674, 0.0
    %v2684 = vsel %vm107, %v2678, 0.0
    %v2685 = vsel %vm108, %v2675, 0.0
    %v2686 = vsel %vm109, %v2679, 0.0
    %v2687 = vsel %vm110, %v2676, 0.0
    %v2688 = vsel %vm111, %v2680, 0.0
    %2689 = vst [vmem:[#allocation2 + $0x200] sm:$0xff] %v2681
    %2690 = vst [vmem:[#allocation2 + $0x208] sm:$0xff] %v2682
    %2691 = vst [vmem:[#allocation2 + $0x210] sm:$0xff] %v2683
    %2692 = vst [vmem:[#allocation2 + $0x218] sm:$0xff] %v2684
    %2693 = vst [vmem:[#allocation2 + $0x220] sm:$0xff] %v2685
    %2694 = vst [vmem:[#allocation2 + $0x228] sm:$0xff] %v2686
    %2695 = vst [vmem:[#allocation2 + $0x230] sm:$0xff] %v2687
    %2696 = vst [vmem:[#allocation2 + $0x238] sm:$0xff] %v2688
    %2697 = vrot.lane.b32.xlu0 %v2343, 124
    %v2698 = vpop.permute.xlu0 %2697
    %2699 = vrot.lane.b32.xlu0 %v2345, 124
    %v2700 = vpop.permute.xlu0 %2699
    %2701 = vrot.lane.b32.xlu0 %v2347, 124
    %v2702 = vpop.permute.xlu0 %2701
    %2703 = vrot.lane.b32.xlu0 %v2349, 124
    %v2704 = vpop.permute.xlu0 %2703
    %2705 = vrot.lane.b32.xlu0 %v2344, 124
    %v2706 = vpop.permute.xlu0 %2705
    %2707 = vrot.lane.b32.xlu0 %v2346, 124
    %v2708 = vpop.permute.xlu0 %2707
    %2709 = vrot.lane.b32.xlu0 %v2348, 124
    %v2710 = vpop.permute.xlu0 %2709
    %2711 = vrot.lane.b32.xlu0 %v2350, 124
    %v2712 = vpop.permute.xlu0 %2711
    %v2713 = vsel %vm506, %v2698, %v2706
    %v2714 = vsel %vm506, %v2700, %v2708
    %v2715 = vsel %vm506, %v2702, %v2710
    %v2716 = vsel %vm506, %v2704, %v2712
    %v2717 = vsel %vm506, %v2706, %v2698
    %v2718 = vsel %vm506, %v2708, %v2700
    %v2719 = vsel %vm506, %v2710, %v2702
    %v2720 = vsel %vm506, %v2712, %v2704
    %v2721 = vsel %vm112, %v2713, 0.0
    %v2722 = vsel %vm113, %v2717, 0.0
    %v2723 = vsel %vm114, %v2714, 0.0
    %v2724 = vsel %vm115, %v2718, 0.0
    %v2725 = vsel %vm116, %v2715, 0.0
    %v2726 = vsel %vm117, %v2719, 0.0
    %v2727 = vsel %vm118, %v2716, 0.0
    %v2728 = vsel %vm119, %v2720, 0.0
    %2729 = vst [vmem:[#allocation2 + $0x240] sm:$0xff] %v2721
    %2730 = vst [vmem:[#allocation2 + $0x248] sm:$0xff] %v2722
    %2731 = vst [vmem:[#allocation2 + $0x250] sm:$0xff] %v2723
    %2732 = vst [vmem:[#allocation2 + $0x258] sm:$0xff] %v2724
    %2733 = vst [vmem:[#allocation2 + $0x260] sm:$0xff] %v2725
    %2734 = vst [vmem:[#allocation2 + $0x268] sm:$0xff] %v2726
    %2735 = vst [vmem:[#allocation2 + $0x270] sm:$0xff] %v2727
    %2736 = vst [vmem:[#allocation2 + $0x278] sm:$0xff] %v2728
    %2737 = vrot.lane.b32.xlu0 %v2343, 123
    %v2738 = vpop.permute.xlu0 %2737
    %2739 = vrot.lane.b32.xlu0 %v2345, 123
    %v2740 = vpop.permute.xlu0 %2739
    %2741 = vrot.lane.b32.xlu0 %v2347, 123
    %v2742 = vpop.permute.xlu0 %2741
    %2743 = vrot.lane.b32.xlu0 %v2349, 123
    %v2744 = vpop.permute.xlu0 %2743
    %2745 = vrot.lane.b32.xlu0 %v2344, 123
    %v2746 = vpop.permute.xlu0 %2745
    %2747 = vrot.lane.b32.xlu0 %v2346, 123
    %v2748 = vpop.permute.xlu0 %2747
    %2749 = vrot.lane.b32.xlu0 %v2348, 123
    %v2750 = vpop.permute.xlu0 %2749
    %2751 = vrot.lane.b32.xlu0 %v2350, 123
    %v2752 = vpop.permute.xlu0 %2751
    %v2753 = vsel %vm547, %v2738, %v2746
    %v2754 = vsel %vm547, %v2740, %v2748
    %v2755 = vsel %vm547, %v2742, %v2750
    %v2756 = vsel %vm547, %v2744, %v2752
    %v2757 = vsel %vm547, %v2746, %v2738
    %v2758 = vsel %vm547, %v2748, %v2740
    %v2759 = vsel %vm547, %v2750, %v2742
    %v2760 = vsel %vm547, %v2752, %v2744
    %v2761 = vsel %vm120, %v2753, 0.0
    %v2762 = vsel %vm121, %v2757, 0.0
    %v2763 = vsel %vm122, %v2754, 0.0
    %v2764 = vsel %vm123, %v2758, 0.0
    %v2765 = vsel %vm124, %v2755, 0.0
    %v2766 = vsel %vm125, %v2759, 0.0
    %v2767 = vsel %vm126, %v2756, 0.0
    %v2768 = vsel %vm127, %v2760, 0.0
    %2769 = vst [vmem:[#allocation2 + $0x280] sm:$0xff] %v2761
    %2770 = vst [vmem:[#allocation2 + $0x288] sm:$0xff] %v2762
    %2771 = vst [vmem:[#allocation2 + $0x290] sm:$0xff] %v2763
    %2772 = vst [vmem:[#allocation2 + $0x298] sm:$0xff] %v2764
    %2773 = vst [vmem:[#allocation2 + $0x2a0] sm:$0xff] %v2765
    %2774 = vst [vmem:[#allocation2 + $0x2a8] sm:$0xff] %v2766
    %2775 = vst [vmem:[#allocation2 + $0x2b0] sm:$0xff] %v2767
    %2776 = vst [vmem:[#allocation2 + $0x2b8] sm:$0xff] %v2768
    %v2777 = vld [vmem:[#allocation2] sm:$0xff]
    %v2778 = vld [vmem:[#allocation2 + $0x8] sm:$0xff]
    %v2779 = vld [vmem:[#allocation2 + $0x10] sm:$0xff]
    %v2780 = vld [vmem:[#allocation2 + $0x18] sm:$0xff]
    %v2781 = vld [vmem:[#allocation2 + $0x20] sm:$0xff]
    %v2782 = vld [vmem:[#allocation2 + $0x28] sm:$0xff]
    %v2783 = vld [vmem:[#allocation2 + $0x30] sm:$0xff]
    %v2784 = vld [vmem:[#allocation2 + $0x38] sm:$0xff]
    %v2785 = vld [vmem:[#allocation2 + $0x40] sm:$0xff]
    %v2786 = vld [vmem:[#allocation2 + $0x48] sm:$0xff]
    %v2787 = vld [vmem:[#allocation2 + $0x50] sm:$0xff]
    %v2788 = vld [vmem:[#allocation2 + $0x58] sm:$0xff]
    %v2789 = vld [vmem:[#allocation2 + $0x60] sm:$0xff]
    %v2790 = vld [vmem:[#allocation2 + $0x68] sm:$0xff]
    %v2791 = vld [vmem:[#allocation2 + $0x70] sm:$0xff]
    %v2792 = vld [vmem:[#allocation2 + $0x78] sm:$0xff]
    %v2793 = vld [vmem:[#allocation2 + $0x80] sm:$0xff]
    %v2794 = vld [vmem:[#allocation2 + $0x88] sm:$0xff]
    %v2795 = vld [vmem:[#allocation2 + $0x90] sm:$0xff]
    %v2796 = vld [vmem:[#allocation2 + $0x98] sm:$0xff]
    %v2797 = vld [vmem:[#allocation2 + $0xa0] sm:$0xff]
    %v2798 = vld [vmem:[#allocation2 + $0xa8] sm:$0xff]
    %v2799 = vld [vmem:[#allocation2 + $0xb0] sm:$0xff]
    %v2800 = vld [vmem:[#allocation2 + $0xb8] sm:$0xff]
    %v2801 = vld [vmem:[#allocation2 + $0xc0] sm:$0xff]
    %v2802 = vld [vmem:[#allocation2 + $0xc8] sm:$0xff]
    %v2803 = vld [vmem:[#allocation2 + $0xd0] sm:$0xff]
    %v2804 = vld [vmem:[#allocation2 + $0xd8] sm:$0xff]
    %v2805 = vld [vmem:[#allocation2 + $0xe0] sm:$0xff]
    %v2806 = vld [vmem:[#allocation2 + $0xe8] sm:$0xff]
    %v2807 = vld [vmem:[#allocation2 + $0xf0] sm:$0xff]
    %v2808 = vld [vmem:[#allocation2 + $0xf8] sm:$0xff]
    %v2809 = vld [vmem:[#allocation2 + $0x100] sm:$0xff]
    %v2810 = vld [vmem:[#allocation2 + $0x108] sm:$0xff]
    %v2811 = vld [vmem:[#allocation2 + $0x110] sm:$0xff]
    %v2812 = vld [vmem:[#allocation2 + $0x118] sm:$0xff]
    %v2813 = vld [vmem:[#allocation2 + $0x120] sm:$0xff]
    %v2814 = vld [vmem:[#allocation2 + $0x128] sm:$0xff]
    %v2815 = vld [vmem:[#allocation2 + $0x130] sm:$0xff]
    %v2816 = vld [vmem:[#allocation2 + $0x138] sm:$0xff]
    %v2817 = vld [vmem:[#allocation2 + $0x140] sm:$0xff]
    %v2818 = vld [vmem:[#allocation2 + $0x148] sm:$0xff]
    %v2819 = vld [vmem:[#allocation2 + $0x150] sm:$0xff]
    %v2820 = vld [vmem:[#allocation2 + $0x158] sm:$0xff]
    %v2821 = vld [vmem:[#allocation2 + $0x160] sm:$0xff]
    %v2822 = vld [vmem:[#allocation2 + $0x168] sm:$0xff]
    %v2823 = vld [vmem:[#allocation2 + $0x170] sm:$0xff]
    %v2824 = vld [vmem:[#allocation2 + $0x178] sm:$0xff]
    %v2825 = vld [vmem:[#allocation2 + $0x180] sm:$0xff]
    %v2826 = vld [vmem:[#allocation2 + $0x188] sm:$0xff]
    %v2827 = vld [vmem:[#allocation2 + $0x190] sm:$0xff]
    %v2828 = vld [vmem:[#allocation2 + $0x198] sm:$0xff]
    %v2829 = vld [vmem:[#allocation2 + $0x1a0] sm:$0xff]
    %v2830 = vld [vmem:[#allocation2 + $0x1a8] sm:$0xff]
    %v2831 = vld [vmem:[#allocation2 + $0x1b0] sm:$0xff]
    %v2832 = vld [vmem:[#allocation2 + $0x1b8] sm:$0xff]
    %v2833 = vld [vmem:[#allocation2 + $0x1c0] sm:$0xff]
    %v2834 = vld [vmem:[#allocation2 + $0x1c8] sm:$0xff]
    %v2835 = vld [vmem:[#allocation2 + $0x1d0] sm:$0xff]
    %v2836 = vld [vmem:[#allocation2 + $0x1d8] sm:$0xff]
    %v2837 = vld [vmem:[#allocation2 + $0x1e0] sm:$0xff]
    %v2838 = vld [vmem:[#allocation2 + $0x1e8] sm:$0xff]
    %v2839 = vld [vmem:[#allocation2 + $0x1f0] sm:$0xff]
    %v2840 = vld [vmem:[#allocation2 + $0x1f8] sm:$0xff]
    %v2841 = vld [vmem:[#allocation2 + $0x200] sm:$0xff]
    %v2842 = vld [vmem:[#allocation2 + $0x208] sm:$0xff]
    %v2843 = vld [vmem:[#allocation2 + $0x210] sm:$0xff]
    %v2844 = vld [vmem:[#allocation2 + $0x218] sm:$0xff]
    %v2845 = vld [vmem:[#allocation2 + $0x220] sm:$0xff]
    %v2846 = vld [vmem:[#allocation2 + $0x228] sm:$0xff]
    %v2847 = vld [vmem:[#allocation2 + $0x230] sm:$0xff]
    %v2848 = vld [vmem:[#allocation2 + $0x238] sm:$0xff]
    %v2849 = vld [vmem:[#allocation2 + $0x240] sm:$0xff]
    %v2850 = vld [vmem:[#allocation2 + $0x248] sm:$0xff]
    %v2851 = vld [vmem:[#allocation2 + $0x250] sm:$0xff]
    %v2852 = vld [vmem:[#allocation2 + $0x258] sm:$0xff]
    %v2853 = vld [vmem:[#allocation2 + $0x260] sm:$0xff]
    %v2854 = vld [vmem:[#allocation2 + $0x268] sm:$0xff]
    %v2855 = vld [vmem:[#allocation2 + $0x270] sm:$0xff]
    %v2856 = vld [vmem:[#allocation2 + $0x278] sm:$0xff]
    %v2857 = vld [vmem:[#allocation2 + $0x280] sm:$0xff]
    %v2858 = vld [vmem:[#allocation2 + $0x288] sm:$0xff]
    %v2859 = vld [vmem:[#allocation2 + $0x290] sm:$0xff]
    %v2860 = vld [vmem:[#allocation2 + $0x298] sm:$0xff]
    %v2861 = vld [vmem:[#allocation2 + $0x2a0] sm:$0xff]
    %v2862 = vld [vmem:[#allocation2 + $0x2a8] sm:$0xff]
    %v2863 = vld [vmem:[#allocation2 + $0x2b0] sm:$0xff]
    %v2864 = vld [vmem:[#allocation2 + $0x2b8] sm:$0xff]
    %2866 = vset.pattern.permute.xlu0 0
    %2867 = vperm.xlu0 %2866, %v2365
    %v2868 = vpop.permute.xlu0 %2867
    %2871 = vset.pattern.permute.xlu0 0
    %2872 = vperm.xlu0 %2871, %v2366
    %v2873 = vpop.permute.xlu0 %2872
    %2876 = vset.pattern.permute.xlu0 0
    %2877 = vperm.xlu0 %2876, %v2367
    %v2878 = vpop.permute.xlu0 %2877
    %2881 = vset.pattern.permute.xlu0 0
    %2882 = vperm.xlu0 %2881, %v2368
    %v2883 = vpop.permute.xlu0 %2882
    %v2886 = vsel %vm680, %v2354, 0
    %v2889 = vsel %vm680, %v2357, 0
    %v2892 = vsel %vm680, %v2360, 0
    %v2895 = vsel %vm680, %v2363, 0
    %2897 = vmatprep.subr.mxu0 %v2778
    %2898 = vmatpush1.msra.mxu0 %v2777
    %2899 = vmatprep.subr.mxu0 %v2780
    %2900 = vmatpush1.msra.mxu0 %v2779
    %2901 = vmatprep.subr.mxu0 %v2782
    %2902 = vmatpush1.msra.mxu0 %v2781
    %2903 = vmatprep.subr.mxu0 %v2784
    %2904 = vmatpush1.msra.mxu0 %v2783
    %2905 = vmatprep.subr.mxu0 %v2786
    %2906 = vmatpush1.msra.mxu0 %v2785
    %2907 = vmatprep.subr.mxu0 %v2788
    %2908 = vmatpush1.msra.mxu0 %v2787
    %2909 = vmatprep.subr.mxu0 %v2790
    %2910 = vmatpush1.msra.mxu0 %v2789
    %2911 = vmatprep.subr.mxu0 %v2792
    %2912 = vmatpush1.msra.mxu0 %v2791
    %2913 = vmatprep.subr.mxu0 %v2794
    %2914 = vmatpush1.msra.mxu0 %v2793
    %2915 = vmatprep.subr.mxu0 %v2796
    %2916 = vmatpush1.msra.mxu0 %v2795
    %2917 = vmatprep.subr.mxu0 %v2798
    %2918 = vmatpush1.msra.mxu0 %v2797
    %2919 = vmatprep.subr.mxu0 %v2800
    %2920 = vmatpush1.msra.mxu0 %v2799
    %2921 = vmatprep.subr.mxu0 %v2802
    %2922 = vmatpush1.msra.mxu0 %v2801
    %2923 = vmatprep.subr.mxu0 %v2804
    %2924 = vmatpush1.msra.mxu0 %v2803
    %2925 = vmatprep.subr.mxu0 %v2806
    %2926 = vmatpush1.msra.mxu0 %v2805
    %2927 = vmatprep.subr.mxu0 %v2808
    %2928 = vmatpush1.msra.mxu0 %v2807
    %2929 = vmatprep.subr.mxu0 %v2810
    %2930 = vmatpush1.msra.mxu0 %v2809
    %2931 = vmatprep.subr.mxu0 %v2812
    %2932 = vmatpush1.msra.mxu0 %v2811
    %2933 = vmatprep.subr.mxu0 %v2814
    %2934 = vmatpush1.msra.mxu0 %v2813
    %2935 = vmatprep.subr.mxu0 %v2816
    %2936 = vmatpush1.msra.mxu0 %v2815
    %2937 = vmatprep.subr.mxu0 %v2818
    %2938 = vmatpush1.msra.mxu0 %v2817
    %2939 = vmatprep.subr.mxu0 %v2820
    %2940 = vmatpush1.msra.mxu0 %v2819
    %2941 = vmatprep.subr.mxu0 %v2822
    %2942 = vmatpush1.msra.mxu0 %v2821
    %2943 = vmatprep.subr.mxu0 %v2824
    %2944 = vmatpush1.msra.mxu0 %v2823
    %2945 = vmatprep.subr.mxu0 %v2826
    %2946 = vmatpush1.msra.mxu0 %v2825
    %2947 = vmatprep.subr.mxu0 %v2828
    %2948 = vmatpush1.msra.mxu0 %v2827
    %2949 = vmatprep.subr.mxu0 %v2830
    %2950 = vmatpush1.msra.mxu0 %v2829
    %2951 = vmatprep.subr.mxu0 %v2832
    %2952 = vmatpush1.msra.mxu0 %v2831
    %2953 = vmatprep.subr.mxu0 %v2834
    %2954 = vmatpush1.msra.mxu0 %v2833
    %2955 = vmatprep.subr.mxu0 %v2836
    %2956 = vmatpush1.msra.mxu0 %v2835
    %2957 = vmatprep.subr.mxu0 %v2838
    %2958 = vmatpush1.msra.mxu0 %v2837
    %2959 = vmatprep.subr.mxu0 %v2840
    %2960 = vmatpush1.msra.mxu0 %v2839
    %2961 = vmatprep.mubr.f32.mxu0 %v2353
    %2962 = vmatmul.mubr.f32.gmra.mrb[0].mxu0 %v2352
    %v2963 = vpop.f32.mrb[0].mxu0
    %v2964 = vadd.f32 %v2868, %v2963
    %v2965 = vpop.f32.mrb[0].mxu0
    %v2966 = vadd.f32 %v2868, %v2965
    %2967 = vmatprep.mubr.f32.mxu0 %v2356
    %2968 = vmatmul.mubr.f32.gmra.mrb[0].mxu0 %v2355
    %v2969 = vpop.f32.mrb[0].mxu0
    %v2970 = vadd.f32 %v2873, %v2969
    %v2971 = vpop.f32.mrb[0].mxu0
    %v2972 = vadd.f32 %v2873, %v2971
    %2973 = vmatprep.mubr.f32.mxu0 %v2359
    %2974 = vmatmul.mubr.f32.gmra.mrb[0].mxu0 %v2358
    %v2975 = vpop.f32.mrb[0].mxu0
    %v2976 = vadd.f32 %v2878, %v2975
    %v2977 = vpop.f32.mrb[0].mxu0
    %v2978 = vadd.f32 %v2878, %v2977
    %2979 = vmatprep.mubr.f32.mxu0 %v2362
    %2980 = vmatmul.mubr.f32.gmra.mrb[0].mxu0 %v2361
    %v2981 = vpop.f32.mrb[0].mxu0
    %v2982 = vadd.f32 %v2883, %v2981
    %v2983 = vpop.f32.mrb[0].mxu0
    %v2984 = vadd.f32 %v2883, %v2983
    %2985 = vdwg.mxu0
    %2986 = vmatprep.subr.mxu0 %v2842
    %2987 = vmatpush1.msra.mxu0 %v2841
    %2988 = vmatprep.subr.mxu0 %v2844
    %2989 = vmatpush1.msra.mxu0 %v2843
    %2990 = vmatprep.subr.mxu0 %v2846
    %2991 = vmatpush1.msra.mxu0 %v2845
    %2992 = vmatprep.subr.mxu0 %v2848
    %2993 = vmatpush1.msra.mxu0 %v2847
    %2994 = vmatprep.subr.mxu0 %v2850
    %2995 = vmatpush1.msra.mxu0 %v2849
    %2996 = vmatprep.subr.mxu0 %v2852
    %2997 = vmatpush1.msra.mxu0 %v2851
    %2998 = vmatprep.subr.mxu0 %v2854
    %2999 = vmatpush1.msra.mxu0 %v2853
    %3000 = vmatprep.subr.mxu0 %v2856
    %3001 = vmatpush1.msra.mxu0 %v2855
    %3002 = vmatprep.subr.mxu0 %v2858
    %3003 = vmatpush1.msra.mxu0 %v2857
    %3004 = vmatprep.subr.mxu0 %v2860
    %3005 = vmatpush1.msra.mxu0 %v2859
    %3006 = vmatprep.subr.mxu0 %v2862
    %3007 = vmatpush1.msra.mxu0 %v2861
    %3008 = vmatprep.subr.mxu0 %v2864
    %3009 = vmatpush1.msra.mxu0 %v2863
    %3010 = vmatprep.subr.mxu0 0.0
    %3011 = vmatpush1.msra.mxu0 0.0
    %3012 = vmatprep.subr.mxu0 0.0
    %3013 = vmatpush1.msra.mxu0 0.0
    %3014 = vmatprep.subr.mxu0 0.0
    %3015 = vmatpush1.msra.mxu0 0.0
    %3016 = vmatprep.subr.mxu0 0.0
    %3017 = vmatpush1.msra.mxu0 0.0
    %3018 = vmatprep.subr.mxu0 0.0
    %3019 = vmatpush1.msra.mxu0 0.0
    %3020 = vmatprep.subr.mxu0 0.0
    %3021 = vmatpush1.msra.mxu0 0.0
    %3022 = vmatprep.subr.mxu0 0.0
    %3023 = vmatpush1.msra.mxu0 0.0
    %3024 = vmatprep.subr.mxu0 0.0
    %3025 = vmatpush1.msra.mxu0 0.0
    %3026 = vmatprep.subr.mxu0 0.0
    %3027 = vmatpush1.msra.mxu0 0.0
    %3028 = vmatprep.subr.mxu0 0.0
    %3029 = vmatpush1.msra.mxu0 0.0
    %3030 = vmatprep.subr.mxu0 0.0
    %3031 = vmatpush1.msra.mxu0 0.0
    %3032 = vmatprep.subr.mxu0 0.0
    %3033 = vmatpush1.msra.mxu0 0.0
    %3034 = vmatprep.subr.mxu0 0.0
    %3035 = vmatpush1.msra.mxu0 0.0
    %3036 = vmatprep.subr.mxu0 0.0
    %3037 = vmatpush1.msra.mxu0 0.0
    %3038 = vmatprep.subr.mxu0 0.0
    %3039 = vmatpush1.msra.mxu0 0.0
    %3040 = vmatprep.subr.mxu0 0.0
    %3041 = vmatpush1.msra.mxu0 0.0
    %3042 = vmatprep.subr.mxu0 0.0
    %3043 = vmatpush1.msra.mxu0 0.0
    %3044 = vmatprep.subr.mxu0 0.0
    %3045 = vmatpush1.msra.mxu0 0.0
    %3046 = vmatprep.subr.mxu0 0.0
    %3047 = vmatpush1.msra.mxu0 0.0
    %3048 = vmatprep.subr.mxu0 0.0
    %3049 = vmatpush1.msra.mxu0 0.0
    %3050 = vmatprep.mubr.f32.mxu0 0.0
    %3051 = vmatmul.mubr.f32.gmra.mrb[0].mxu0 %v2886
    %v3052 = vpop.f32.mrb[0].mxu0
    %v3053 = vadd.f32 %v2964, %v3052
    %v3054 = vpop.f32.mrb[0].mxu0
    %v3055 = vadd.f32 %v2966, %v3054
    %3056 = vmatprep.mubr.f32.mxu0 0.0
    %3057 = vmatmul.mubr.f32.gmra.mrb[0].mxu0 %v2889
    %v3058 = vpop.f32.mrb[0].mxu0
    %v3059 = vadd.f32 %v2970, %v3058
    %v3060 = vpop.f32.mrb[0].mxu0
    %v3061 = vadd.f32 %v2972, %v3060
    %3062 = vmatprep.mubr.f32.mxu0 0.0
    %3063 = vmatmul.mubr.f32.gmra.mrb[0].mxu0 %v2892
    %v3064 = vpop.f32.mrb[0].mxu0
    %v3065 = vadd.f32 %v2976, %v3064
    %v3066 = vpop.f32.mrb[0].mxu0
    %v3067 = vadd.f32 %v2978, %v3066
    %3068 = vmatprep.mubr.f32.mxu0 0.0
    %3069 = vmatmul.mubr.f32.gmra.mrb[0].mxu0 %v2895
    %v3070 = vpop.f32.mrb[0].mxu0
    %v3071 = vadd.f32 %v2982, %v3070
    %v3072 = vpop.f32.mrb[0].mxu0
    %v3073 = vadd.f32 %v2984, %v3072
    %3074 = vdwg.mxu0
    %v3075 = vmax.f32 %v3053, 0.0
    %v3076 = vmax.f32 %v3055, 0.0
    %v3077 = vmax.f32 %v3059, 0.0
    %v3078 = vmax.f32 %v3061, 0.0
    %v3079 = vmax.f32 %v3065, 0.0
    %v3080 = vmax.f32 %v3067, 0.0
    %v3081 = vmax.f32 %v3071, 0.0
    %v3082 = vmax.f32 %v3073, 0.0
    %v3083 = vadd.f32 %v1611, %v3075
    %v3084 = vadd.f32 %v1612, %v3076
    %v3085 = vadd.f32 %v1613, %v3077
    %v3086 = vadd.f32 %v1614, %v3078
    %v3087 = vadd.f32 %v1615, %v3079
    %v3088 = vadd.f32 %v1616, %v3080
    %v3089 = vadd.f32 %v1617, %v3081
    %v3090 = vadd.f32 %v1618, %v3082
    %v3091 = vld [vmem:[%s4] sm:$0x7]
    %v3092 = vld [vmem:[#allocation3] sm:$0x1]
    %3093 = vrot.lane.b32.xlu0 %v3083, 5
    %v3094 = vpop.permute.xlu0 %3093
    %3095 = vrot.lane.b32.xlu0 %v3085, 5
    %v3096 = vpop.permute.xlu0 %3095
    %3097 = vrot.lane.b32.xlu0 %v3087, 5
    %v3098 = vpop.permute.xlu0 %3097
    %3099 = vrot.lane.b32.xlu0 %v3089, 5
    %v3100 = vpop.permute.xlu0 %3099
    %3101 = vrot.lane.b32.xlu0 %v3084, 5
    %v3102 = vpop.permute.xlu0 %3101
    %3103 = vrot.lane.b32.xlu0 %v3086, 5
    %v3104 = vpop.permute.xlu0 %3103
    %3105 = vrot.lane.b32.xlu0 %v3088, 5
    %v3106 = vpop.permute.xlu0 %3105
    %3107 = vrot.lane.b32.xlu0 %v3090, 5
    %v3108 = vpop.permute.xlu0 %3107
    %v3109 = vsel %vm170, %v3094, %v3102
    %v3110 = vsel %vm170, %v3096, %v3104
    %v3111 = vsel %vm170, %v3098, %v3106
    %v3112 = vsel %vm170, %v3100, %v3108
    %v3113 = vsel %vm170, %v3102, %v3094
    %v3114 = vsel %vm170, %v3104, %v3096
    %v3115 = vsel %vm170, %v3106, %v3098
    %v3116 = vsel %vm170, %v3108, %v3100
    %v3117 = vsel %vm48, %v3113, 0.0
    %v3118 = vsel %vm49, %v3109, 0.0
    %v3119 = vsel %vm50, %v3114, 0.0
    %v3120 = vsel %vm51, %v3110, 0.0
    %v3121 = vsel %vm52, %v3115, 0.0
    %v3122 = vsel %vm53, %v3111, 0.0
    %v3123 = vsel %vm54, %v3116, 0.0
    %v3124 = vsel %vm55, %v3112, 0.0
    %3125 = vst [vmem:[#allocation2] sm:$0xff] %v3117
    %3126 = vst [vmem:[#allocation2 + $0x8] sm:$0xff] %v3118
    %3127 = vst [vmem:[#allocation2 + $0x10] sm:$0xff] %v3119
    %3128 = vst [vmem:[#allocation2 + $0x18] sm:$0xff] %v3120
    %3129 = vst [vmem:[#allocation2 + $0x20] sm:$0xff] %v3121
    %3130 = vst [vmem:[#allocation2 + $0x28] sm:$0xff] %v3122
    %3131 = vst [vmem:[#allocation2 + $0x30] sm:$0xff] %v3123
    %3132 = vst [vmem:[#allocation2 + $0x38] sm:$0xff] %v3124
    %3133 = vrot.lane.b32.xlu0 %v3083, 4
    %v3134 = vpop.permute.xlu0 %3133
    %3135 = vrot.lane.b32.xlu0 %v3085, 4
    %v3136 = vpop.permute.xlu0 %3135
    %3137 = vrot.lane.b32.xlu0 %v3087, 4
    %v3138 = vpop.permute.xlu0 %3137
    %3139 = vrot.lane.b32.xlu0 %v3089, 4
    %v3140 = vpop.permute.xlu0 %3139
    %3141 = vrot.lane.b32.xlu0 %v3084, 4
    %v3142 = vpop.permute.xlu0 %3141
    %3143 = vrot.lane.b32.xlu0 %v3086, 4
    %v3144 = vpop.permute.xlu0 %3143
    %3145 = vrot.lane.b32.xlu0 %v3088, 4
    %v3146 = vpop.permute.xlu0 %3145
    %3147 = vrot.lane.b32.xlu0 %v3090, 4
    %v3148 = vpop.permute.xlu0 %3147
    %v3149 = vsel %vm211, %v3134, %v3142
    %v3150 = vsel %vm211, %v3136, %v3144
    %v3151 = vsel %vm211, %v3138, %v3146
    %v3152 = vsel %vm211, %v3140, %v3148
    %v3153 = vsel %vm211, %v3142, %v3134
    %v3154 = vsel %vm211, %v3144, %v3136
    %v3155 = vsel %vm211, %v3146, %v3138
    %v3156 = vsel %vm211, %v3148, %v3140
    %v3157 = vsel %vm56, %v3153, 0.0
    %v3158 = vsel %vm57, %v3149, 0.0
    %v3159 = vsel %vm58, %v3154, 0.0
    %v3160 = vsel %vm59, %v3150, 0.0
    %v3161 = vsel %vm60, %v3155, 0.0
    %v3162 = vsel %vm61, %v3151, 0.0
    %v3163 = vsel %vm62, %v3156, 0.0
    %v3164 = vsel %vm63, %v3152, 0.0
    %3165 = vst [vmem:[#allocation2 + $0x40] sm:$0xff] %v3157
    %3166 = vst [vmem:[#allocation2 + $0x48] sm:$0xff] %v3158
    %3167 = vst [vmem:[#allocation2 + $0x50] sm:$0xff] %v3159
    %3168 = vst [vmem:[#allocation2 + $0x58] sm:$0xff] %v3160
    %3169 = vst [vmem:[#allocation2 + $0x60] sm:$0xff] %v3161
    %3170 = vst [vmem:[#allocation2 + $0x68] sm:$0xff] %v3162
    %3171 = vst [vmem:[#allocation2 + $0x70] sm:$0xff] %v3163
    %3172 = vst [vmem:[#allocation2 + $0x78] sm:$0xff] %v3164
    %3173 = vrot.lane.b32.xlu0 %v3083, 3
    %v3174 = vpop.permute.xlu0 %3173
    %3175 = vrot.lane.b32.xlu0 %v3085, 3
    %v3176 = vpop.permute.xlu0 %3175
    %3177 = vrot.lane.b32.xlu0 %v3087, 3
    %v3178 = vpop.permute.xlu0 %3177
    %3179 = vrot.lane.b32.xlu0 %v3089, 3
    %v3180 = vpop.permute.xlu0 %3179
    %3181 = vrot.lane.b32.xlu0 %v3084, 3
    %v3182 = vpop.permute.xlu0 %3181
    %3183 = vrot.lane.b32.xlu0 %v3086, 3
    %v3184 = vpop.permute.xlu0 %3183
    %3185 = vrot.lane.b32.xlu0 %v3088, 3
    %v3186 = vpop.permute.xlu0 %3185
    %3187 = vrot.lane.b32.xlu0 %v3090, 3
    %v3188 = vpop.permute.xlu0 %3187
    %v3189 = vsel %vm252, %v3174, %v3182
    %v3190 = vsel %vm252, %v3176, %v3184
    %v3191 = vsel %vm252, %v3178, %v3186
    %v3192 = vsel %vm252, %v3180, %v3188
    %v3193 = vsel %vm252, %v3182, %v3174
    %v3194 = vsel %vm252, %v3184, %v3176
    %v3195 = vsel %vm252, %v3186, %v3178
    %v3196 = vsel %vm252, %v3188, %v3180
    %v3197 = vsel %vm64, %v3193, 0.0
    %v3198 = vsel %vm65, %v3189, 0.0
    %v3199 = vsel %vm66, %v3194, 0.0
    %v3200 = vsel %vm67, %v3190, 0.0
    %v3201 = vsel %vm68, %v3195, 0.0
    %v3202 = vsel %vm69, %v3191, 0.0
    %v3203 = vsel %vm70, %v3196, 0.0
    %v3204 = vsel %vm71, %v3192, 0.0
    %3205 = vst [vmem:[#allocation2 + $0x80] sm:$0xff] %v3197
    %3206 = vst [vmem:[#allocation2 + $0x88] sm:$0xff] %v3198
    %3207 = vst [vmem:[#allocation2 + $0x90] sm:$0xff] %v3199
    %3208 = vst [vmem:[#allocation2 + $0x98] sm:$0xff] %v3200
    %3209 = vst [vmem:[#allocation2 + $0xa0] sm:$0xff] %v3201
    %3210 = vst [vmem:[#allocation2 + $0xa8] sm:$0xff] %v3202
    %3211 = vst [vmem:[#allocation2 + $0xb0] sm:$0xff] %v3203
    %3212 = vst [vmem:[#allocation2 + $0xb8] sm:$0xff] %v3204
    %3213 = vrot.lane.b32.xlu0 %v3083, 2
    %v3214 = vpop.permute.xlu0 %3213
    %3215 = vrot.lane.b32.xlu0 %v3085, 2
    %v3216 = vpop.permute.xlu0 %3215
    %3217 = vrot.lane.b32.xlu0 %v3087, 2
    %v3218 = vpop.permute.xlu0 %3217
    %3219 = vrot.lane.b32.xlu0 %v3089, 2
    %v3220 = vpop.permute.xlu0 %3219
    %3221 = vrot.lane.b32.xlu0 %v3084, 2
    %v3222 = vpop.permute.xlu0 %3221
    %3223 = vrot.lane.b32.xlu0 %v3086, 2
    %v3224 = vpop.permute.xlu0 %3223
    %3225 = vrot.lane.b32.xlu0 %v3088, 2
    %v3226 = vpop.permute.xlu0 %3225
    %3227 = vrot.lane.b32.xlu0 %v3090, 2
    %v3228 = vpop.permute.xlu0 %3227
    %v3229 = vsel %vm293, %v3214, %v3222
    %v3230 = vsel %vm293, %v3216, %v3224
    %v3231 = vsel %vm293, %v3218, %v3226
    %v3232 = vsel %vm293, %v3220, %v3228
    %v3233 = vsel %vm293, %v3222, %v3214
    %v3234 = vsel %vm293, %v3224, %v3216
    %v3235 = vsel %vm293, %v3226, %v3218
    %v3236 = vsel %vm293, %v3228, %v3220
    %v3237 = vsel %vm72, %v3233, 0.0
    %v3238 = vsel %vm73, %v3229, 0.0
    %v3239 = vsel %vm74, %v3234, 0.0
    %v3240 = vsel %vm75, %v3230, 0.0
    %v3241 = vsel %vm76, %v3235, 0.0
    %v3242 = vsel %vm77, %v3231, 0.0
    %v3243 = vsel %vm78, %v3236, 0.0
    %v3244 = vsel %vm79, %v3232, 0.0
    %3245 = vst [vmem:[#allocation2 + $0xc0] sm:$0xff] %v3237
    %3246 = vst [vmem:[#allocation2 + $0xc8] sm:$0xff] %v3238
    %3247 = vst [vmem:[#allocation2 + $0xd0] sm:$0xff] %v3239
    %3248 = vst [vmem:[#allocation2 + $0xd8] sm:$0xff] %v3240
    %3249 = vst [vmem:[#allocation2 + $0xe0] sm:$0xff] %v3241
    %3250 = vst [vmem:[#allocation2 + $0xe8] sm:$0xff] %v3242
    %3251 = vst [vmem:[#allocation2 + $0xf0] sm:$0xff] %v3243
    %3252 = vst [vmem:[#allocation2 + $0xf8] sm:$0xff] %v3244
    %3253 = vrot.lane.b32.xlu0 %v3083, 1
    %v3254 = vpop.permute.xlu0 %3253
    %3255 = vrot.lane.b32.xlu0 %v3085, 1
    %v3256 = vpop.permute.xlu0 %3255
    %3257 = vrot.lane.b32.xlu0 %v3087, 1
    %v3258 = vpop.permute.xlu0 %3257
    %3259 = vrot.lane.b32.xlu0 %v3089, 1
    %v3260 = vpop.permute.xlu0 %3259
    %3261 = vrot.lane.b32.xlu0 %v3084, 1
    %v3262 = vpop.permute.xlu0 %3261
    %3263 = vrot.lane.b32.xlu0 %v3086, 1
    %v3264 = vpop.permute.xlu0 %3263
    %3265 = vrot.lane.b32.xlu0 %v3088, 1
    %v3266 = vpop.permute.xlu0 %3265
    %3267 = vrot.lane.b32.xlu0 %v3090, 1
    %v3268 = vpop.permute.xlu0 %3267
    %v3269 = vsel %vm334, %v3254, %v3262
    %v3270 = vsel %vm334, %v3256, %v3264
    %v3271 = vsel %vm334, %v3258, %v3266
    %v3272 = vsel %vm334, %v3260, %v3268
    %v3273 = vsel %vm334, %v3262, %v3254
    %v3274 = vsel %vm334, %v3264, %v3256
    %v3275 = vsel %vm334, %v3266, %v3258
    %v3276 = vsel %vm334, %v3268, %v3260
    %v3277 = vsel %vm80, %v3273, 0.0
    %v3278 = vsel %vm81, %v3269, 0.0
    %v3279 = vsel %vm82, %v3274, 0.0
    %v3280 = vsel %vm83, %v3270, 0.0
    %v3281 = vsel %vm84, %v3275, 0.0
    %v3282 = vsel %vm85, %v3271, 0.0
    %v3283 = vsel %vm86, %v3276, 0.0
    %v3284 = vsel %vm87, %v3272, 0.0
    %3285 = vst [vmem:[#allocation2 + $0x100] sm:$0xff] %v3277
    %3286 = vst [vmem:[#allocation2 + $0x108] sm:$0xff] %v3278
    %3287 = vst [vmem:[#allocation2 + $0x110] sm:$0xff] %v3279
    %3288 = vst [vmem:[#allocation2 + $0x118] sm:$0xff] %v3280
    %3289 = vst [vmem:[#allocation2 + $0x120] sm:$0xff] %v3281
    %3290 = vst [vmem:[#allocation2 + $0x128] sm:$0xff] %v3282
    %3291 = vst [vmem:[#allocation2 + $0x130] sm:$0xff] %v3283
    %3292 = vst [vmem:[#allocation2 + $0x138] sm:$0xff] %v3284
    %3293 = vst [vmem:[#allocation2 + $0x140] sm:$0xff] %v3083
    %3294 = vst [vmem:[#allocation2 + $0x148] sm:$0xff] %v3084
    %3295 = vst [vmem:[#allocation2 + $0x150] sm:$0xff] %v3085
    %3296 = vst [vmem:[#allocation2 + $0x158] sm:$0xff] %v3086
    %3297 = vst [vmem:[#allocation2 + $0x160] sm:$0xff] %v3087
    %3298 = vst [vmem:[#allocation2 + $0x168] sm:$0xff] %v3088
    %3299 = vst [vmem:[#allocation2 + $0x170] sm:$0xff] %v3089
    %3300 = vst [vmem:[#allocation2 + $0x178] sm:$0xff] %v3090
    %3301 = vrot.lane.b32.xlu0 %v3083, 127
    %v3302 = vpop.permute.xlu0 %3301
    %3303 = vrot.lane.b32.xlu0 %v3085, 127
    %v3304 = vpop.permute.xlu0 %3303
    %3305 = vrot.lane.b32.xlu0 %v3087, 127
    %v3306 = vpop.permute.xlu0 %3305
    %3307 = vrot.lane.b32.xlu0 %v3089, 127
    %v3308 = vpop.permute.xlu0 %3307
    %3309 = vrot.lane.b32.xlu0 %v3084, 127
    %v3310 = vpop.permute.xlu0 %3309
    %3311 = vrot.lane.b32.xlu0 %v3086, 127
    %v3312 = vpop.permute.xlu0 %3311
    %3313 = vrot.lane.b32.xlu0 %v3088, 127
    %v3314 = vpop.permute.xlu0 %3313
    %3315 = vrot.lane.b32.xlu0 %v3090, 127
    %v3316 = vpop.permute.xlu0 %3315
    %v3317 = vsel %vm383, %v3302, %v3310
    %v3318 = vsel %vm383, %v3304, %v3312
    %v3319 = vsel %vm383, %v3306, %v3314
    %v3320 = vsel %vm383, %v3308, %v3316
    %v3321 = vsel %vm383, %v3310, %v3302
    %v3322 = vsel %vm383, %v3312, %v3304
    %v3323 = vsel %vm383, %v3314, %v3306
    %v3324 = vsel %vm383, %v3316, %v3308
    %v3325 = vsel %vm88, %v3317, 0.0
    %v3326 = vsel %vm89, %v3321, 0.0
    %v3327 = vsel %vm90, %v3318, 0.0
    %v3328 = vsel %vm91, %v3322, 0.0
    %v3329 = vsel %vm92, %v3319, 0.0
    %v3330 = vsel %vm93, %v3323, 0.0
    %v3331 = vsel %vm94, %v3320, 0.0
    %v3332 = vsel %vm95, %v3324, 0.0
    %3333 = vst [vmem:[#allocation2 + $0x180] sm:$0xff] %v3325
    %3334 = vst [vmem:[#allocation2 + $0x188] sm:$0xff] %v3326
    %3335 = vst [vmem:[#allocation2 + $0x190] sm:$0xff] %v3327
    %3336 = vst [vmem:[#allocation2 + $0x198] sm:$0xff] %v3328
    %3337 = vst [vmem:[#allocation2 + $0x1a0] sm:$0xff] %v3329
    %3338 = vst [vmem:[#allocation2 + $0x1a8] sm:$0xff] %v3330
    %3339 = vst [vmem:[#allocation2 + $0x1b0] sm:$0xff] %v3331
    %3340 = vst [vmem:[#allocation2 + $0x1b8] sm:$0xff] %v3332
    %3341 = vrot.lane.b32.xlu0 %v3083, 126
    %v3342 = vpop.permute.xlu0 %3341
    %3343 = vrot.lane.b32.xlu0 %v3085, 126
    %v3344 = vpop.permute.xlu0 %3343
    %3345 = vrot.lane.b32.xlu0 %v3087, 126
    %v3346 = vpop.permute.xlu0 %3345
    %3347 = vrot.lane.b32.xlu0 %v3089, 126
    %v3348 = vpop.permute.xlu0 %3347
    %3349 = vrot.lane.b32.xlu0 %v3084, 126
    %v3350 = vpop.permute.xlu0 %3349
    %3351 = vrot.lane.b32.xlu0 %v3086, 126
    %v3352 = vpop.permute.xlu0 %3351
    %3353 = vrot.lane.b32.xlu0 %v3088, 126
    %v3354 = vpop.permute.xlu0 %3353
    %3355 = vrot.lane.b32.xlu0 %v3090, 126
    %v3356 = vpop.permute.xlu0 %3355
    %v3357 = vsel %vm424, %v3342, %v3350
    %v3358 = vsel %vm424, %v3344, %v3352
    %v3359 = vsel %vm424, %v3346, %v3354
    %v3360 = vsel %vm424, %v3348, %v3356
    %v3361 = vsel %vm424, %v3350, %v3342
    %v3362 = vsel %vm424, %v3352, %v3344
    %v3363 = vsel %vm424, %v3354, %v3346
    %v3364 = vsel %vm424, %v3356, %v3348
    %v3365 = vsel %vm96, %v3357, 0.0
    %v3366 = vsel %vm97, %v3361, 0.0
    %v3367 = vsel %vm98, %v3358, 0.0
    %v3368 = vsel %vm99, %v3362, 0.0
    %v3369 = vsel %vm100, %v3359, 0.0
    %v3370 = vsel %vm101, %v3363, 0.0
    %v3371 = vsel %vm102, %v3360, 0.0
    %v3372 = vsel %vm103, %v3364, 0.0
    %3373 = vst [vmem:[#allocation2 + $0x1c0] sm:$0xff] %v3365
    %3374 = vst [vmem:[#allocation2 + $0x1c8] sm:$0xff] %v3366
    %3375 = vst [vmem:[#allocation2 + $0x1d0] sm:$0xff] %v3367
    %3376 = vst [vmem:[#allocation2 + $0x1d8] sm:$0xff] %v3368
    %3377 = vst [vmem:[#allocation2 + $0x1e0] sm:$0xff] %v3369
    %3378 = vst [vmem:[#allocation2 + $0x1e8] sm:$0xff] %v3370
    %3379 = vst [vmem:[#allocation2 + $0x1f0] sm:$0xff] %v3371
    %3380 = vst [vmem:[#allocation2 + $0x1f8] sm:$0xff] %v3372
    %3381 = vrot.lane.b32.xlu0 %v3083, 125
    %v3382 = vpop.permute.xlu0 %3381
    %3383 = vrot.lane.b32.xlu0 %v3085, 125
    %v3384 = vpop.permute.xlu0 %3383
    %3385 = vrot.lane.b32.xlu0 %v3087, 125
    %v3386 = vpop.permute.xlu0 %3385
    %3387 = vrot.lane.b32.xlu0 %v3089, 125
    %v3388 = vpop.permute.xlu0 %3387
    %3389 = vrot.lane.b32.xlu0 %v3084, 125
    %v3390 = vpop.permute.xlu0 %3389
    %3391 = vrot.lane.b32.xlu0 %v3086, 125
    %v3392 = vpop.permute.xlu0 %3391
    %3393 = vrot.lane.b32.xlu0 %v3088, 125
    %v3394 = vpop.permute.xlu0 %3393
    %3395 = vrot.lane.b32.xlu0 %v3090, 125
    %v3396 = vpop.permute.xlu0 %3395
    %v3397 = vsel %vm465, %v3382, %v3390
    %v3398 = vsel %vm465, %v3384, %v3392
    %v3399 = vsel %vm465, %v3386, %v3394
    %v3400 = vsel %vm465, %v3388, %v3396
    %v3401 = vsel %vm465, %v3390, %v3382
    %v3402 = vsel %vm465, %v3392, %v3384
    %v3403 = vsel %vm465, %v3394, %v3386
    %v3404 = vsel %vm465, %v3396, %v3388
    %v3405 = vsel %vm104, %v3397, 0.0
    %v3406 = vsel %vm105, %v3401, 0.0
    %v3407 = vsel %vm106, %v3398, 0.0
    %v3408 = vsel %vm107, %v3402, 0.0
    %v3409 = vsel %vm108, %v3399, 0.0
    %v3410 = vsel %vm109, %v3403, 0.0
    %v3411 = vsel %vm110, %v3400, 0.0
    %v3412 = vsel %vm111, %v3404, 0.0
    %3413 = vst [vmem:[#allocation2 + $0x200] sm:$0xff] %v3405
    %3414 = vst [vmem:[#allocation2 + $0x208] sm:$0xff] %v3406
    %3415 = vst [vmem:[#allocation2 + $0x210] sm:$0xff] %v3407
    %3416 = vst [vmem:[#allocation2 + $0x218] sm:$0xff] %v3408
    %3417 = vst [vmem:[#allocation2 + $0x220] sm:$0xff] %v3409
    %3418 = vst [vmem:[#allocation2 + $0x228] sm:$0xff] %v3410
    %3419 = vst [vmem:[#allocation2 + $0x230] sm:$0xff] %v3411
    %3420 = vst [vmem:[#allocation2 + $0x238] sm:$0xff] %v3412
    %3421 = vrot.lane.b32.xlu0 %v3083, 124
    %v3422 = vpop.permute.xlu0 %3421
    %3423 = vrot.lane.b32.xlu0 %v3085, 124
    %v3424 = vpop.permute.xlu0 %3423
    %3425 = vrot.lane.b32.xlu0 %v3087, 124
    %v3426 = vpop.permute.xlu0 %3425
    %3427 = vrot.lane.b32.xlu0 %v3089, 124
    %v3428 = vpop.permute.xlu0 %3427
    %3429 = vrot.lane.b32.xlu0 %v3084, 124
    %v3430 = vpop.permute.xlu0 %3429
    %3431 = vrot.lane.b32.xlu0 %v3086, 124
    %v3432 = vpop.permute.xlu0 %3431
    %3433 = vrot.lane.b32.xlu0 %v3088, 124
    %v3434 = vpop.permute.xlu0 %3433
    %3435 = vrot.lane.b32.xlu0 %v3090, 124
    %v3436 = vpop.permute.xlu0 %3435
    %v3437 = vsel %vm506, %v3422, %v3430
    %v3438 = vsel %vm506, %v3424, %v3432
    %v3439 = vsel %vm506, %v3426, %v3434
    %v3440 = vsel %vm506, %v3428, %v3436
    %v3441 = vsel %vm506, %v3430, %v3422
    %v3442 = vsel %vm506, %v3432, %v3424
    %v3443 = vsel %vm506, %v3434, %v3426
    %v3444 = vsel %vm506, %v3436, %v3428
    %v3445 = vsel %vm112, %v3437, 0.0
    %v3446 = vsel %vm113, %v3441, 0.0
    %v3447 = vsel %vm114, %v3438, 0.0
    %v3448 = vsel %vm115, %v3442, 0.0
    %v3449 = vsel %vm116, %v3439, 0.0
    %v3450 = vsel %vm117, %v3443, 0.0
    %v3451 = vsel %vm118, %v3440, 0.0
    %v3452 = vsel %vm119, %v3444, 0.0
    %3453 = vst [vmem:[#allocation2 + $0x240] sm:$0xff] %v3445
    %3454 = vst [vmem:[#allocation2 + $0x248] sm:$0xff] %v3446
    %3455 = vst [vmem:[#allocation2 + $0x250] sm:$0xff] %v3447
    %3456 = vst [vmem:[#allocation2 + $0x258] sm:$0xff] %v3448
    %3457 = vst [vmem:[#allocation2 + $0x260] sm:$0xff] %v3449
    %3458 = vst [vmem:[#allocation2 + $0x268] sm:$0xff] %v3450
    %3459 = vst [vmem:[#allocation2 + $0x270] sm:$0xff] %v3451
    %3460 = vst [vmem:[#allocation2 + $0x278] sm:$0xff] %v3452
    %3461 = vrot.lane.b32.xlu0 %v3083, 123
    %v3462 = vpop.permute.xlu0 %3461
    %3463 = vrot.lane.b32.xlu0 %v3085, 123
    %v3464 = vpop.permute.xlu0 %3463
    %3465 = vrot.lane.b32.xlu0 %v3087, 123
    %v3466 = vpop.permute.xlu0 %3465
    %3467 = vrot.lane.b32.xlu0 %v3089, 123
    %v3468 = vpop.permute.xlu0 %3467
    %3469 = vrot.lane.b32.xlu0 %v3084, 123
    %v3470 = vpop.permute.xlu0 %3469
    %3471 = vrot.lane.b32.xlu0 %v3086, 123
    %v3472 = vpop.permute.xlu0 %3471
    %3473 = vrot.lane.b32.xlu0 %v3088, 123
    %v3474 = vpop.permute.xlu0 %3473
    %3475 = vrot.lane.b32.xlu0 %v3090, 123
    %v3476 = vpop.permute.xlu0 %3475
    %v3477 = vsel %vm547, %v3462, %v3470
    %v3478 = vsel %vm547, %v3464, %v3472
    %v3479 = vsel %vm547, %v3466, %v3474
    %v3480 = vsel %vm547, %v3468, %v3476
    %v3481 = vsel %vm547, %v3470, %v3462
    %v3482 = vsel %vm547, %v3472, %v3464
    %v3483 = vsel %vm547, %v3474, %v3466
    %v3484 = vsel %vm547, %v3476, %v3468
    %v3485 = vsel %vm120, %v3477, 0.0
    %v3486 = vsel %vm121, %v3481, 0.0
    %v3487 = vsel %vm122, %v3478, 0.0
    %v3488 = vsel %vm123, %v3482, 0.0
    %v3489 = vsel %vm124, %v3479, 0.0
    %v3490 = vsel %vm125, %v3483, 0.0
    %v3491 = vsel %vm126, %v3480, 0.0
    %v3492 = vsel %vm127, %v3484, 0.0
    %3493 = vst [vmem:[#allocation2 + $0x280] sm:$0xff] %v3485
    %3494 = vst [vmem:[#allocation2 + $0x288] sm:$0xff] %v3486
    %3495 = vst [vmem:[#allocation2 + $0x290] sm:$0xff] %v3487
    %3496 = vst [vmem:[#allocation2 + $0x298] sm:$0xff] %v3488
    %3497 = vst [vmem:[#allocation2 + $0x2a0] sm:$0xff] %v3489
    %3498 = vst [vmem:[#allocation2 + $0x2a8] sm:$0xff] %v3490
    %3499 = vst [vmem:[#allocation2 + $0x2b0] sm:$0xff] %v3491
    %3500 = vst [vmem:[#allocation2 + $0x2b8] sm:$0xff] %v3492
    %v3501 = vld [vmem:[#allocation2] sm:$0xff]
    %v3502 = vld [vmem:[#allocation2 + $0x8] sm:$0xff]
    %v3503 = vld [vmem:[#allocation2 + $0x10] sm:$0xff]
    %v3504 = vld [vmem:[#allocation2 + $0x18] sm:$0xff]
    %v3505 = vld [vmem:[#allocation2 + $0x20] sm:$0xff]
    %v3506 = vld [vmem:[#allocation2 + $0x28] sm:$0xff]
    %v3507 = vld [vmem:[#allocation2 + $0x30] sm:$0xff]
    %v3508 = vld [vmem:[#allocation2 + $0x38] sm:$0xff]
    %v3509 = vld [vmem:[#allocation2 + $0x40] sm:$0xff]
    %v3510 = vld [vmem:[#allocation2 + $0x48] sm:$0xff]
    %v3511 = vld [vmem:[#allocation2 + $0x50] sm:$0xff]
    %v3512 = vld [vmem:[#allocation2 + $0x58] sm:$0xff]
    %v3513 = vld [vmem:[#allocation2 + $0x60] sm:$0xff]
    %v3514 = vld [vmem:[#allocation2 + $0x68] sm:$0xff]
    %v3515 = vld [vmem:[#allocation2 + $0x70] sm:$0xff]
    %v3516 = vld [vmem:[#allocation2 + $0x78] sm:$0xff]
    %v3517 = vld [vmem:[#allocation2 + $0x80] sm:$0xff]
    %v3518 = vld [vmem:[#allocation2 + $0x88] sm:$0xff]
    %v3519 = vld [vmem:[#allocation2 + $0x90] sm:$0xff]
    %v3520 = vld [vmem:[#allocation2 + $0x98] sm:$0xff]
    %v3521 = vld [vmem:[#allocation2 + $0xa0] sm:$0xff]
    %v3522 = vld [vmem:[#allocation2 + $0xa8] sm:$0xff]
    %v3523 = vld [vmem:[#allocation2 + $0xb0] sm:$0xff]
    %v3524 = vld [vmem:[#allocation2 + $0xb8] sm:$0xff]
    %v3525 = vld [vmem:[#allocation2 + $0xc0] sm:$0xff]
    %v3526 = vld [vmem:[#allocation2 + $0xc8] sm:$0xff]
    %v3527 = vld [vmem:[#allocation2 + $0xd0] sm:$0xff]
    %v3528 = vld [vmem:[#allocation2 + $0xd8] sm:$0xff]
    %v3529 = vld [vmem:[#allocation2 + $0xe0] sm:$0xff]
    %v3530 = vld [vmem:[#allocation2 + $0xe8] sm:$0xff]
    %v3531 = vld [vmem:[#allocation2 + $0xf0] sm:$0xff]
    %v3532 = vld [vmem:[#allocation2 + $0xf8] sm:$0xff]
    %v3533 = vld [vmem:[#allocation2 + $0x100] sm:$0xff]
    %v3534 = vld [vmem:[#allocation2 + $0x108] sm:$0xff]
    %v3535 = vld [vmem:[#allocation2 + $0x110] sm:$0xff]
    %v3536 = vld [vmem:[#allocation2 + $0x118] sm:$0xff]
    %v3537 = vld [vmem:[#allocation2 + $0x120] sm:$0xff]
    %v3538 = vld [vmem:[#allocation2 + $0x128] sm:$0xff]
    %v3539 = vld [vmem:[#allocation2 + $0x130] sm:$0xff]
    %v3540 = vld [vmem:[#allocation2 + $0x138] sm:$0xff]
    %v3541 = vld [vmem:[#allocation2 + $0x140] sm:$0xff]
    %v3542 = vld [vmem:[#allocation2 + $0x148] sm:$0xff]
    %v3543 = vld [vmem:[#allocation2 + $0x150] sm:$0xff]
    %v3544 = vld [vmem:[#allocation2 + $0x158] sm:$0xff]
    %v3545 = vld [vmem:[#allocation2 + $0x160] sm:$0xff]
    %v3546 = vld [vmem:[#allocation2 + $0x168] sm:$0xff]
    %v3547 = vld [vmem:[#allocation2 + $0x170] sm:$0xff]
    %v3548 = vld [vmem:[#allocation2 + $0x178] sm:$0xff]
    %v3549 = vld [vmem:[#allocation2 + $0x180] sm:$0xff]
    %v3550 = vld [vmem:[#allocation2 + $0x188] sm:$0xff]
    %v3551 = vld [vmem:[#allocation2 + $0x190] sm:$0xff]
    %v3552 = vld [vmem:[#allocation2 + $0x198] sm:$0xff]
    %v3553 = vld [vmem:[#allocation2 + $0x1a0] sm:$0xff]
    %v3554 = vld [vmem:[#allocation2 + $0x1a8] sm:$0xff]
    %v3555 = vld [vmem:[#allocation2 + $0x1b0] sm:$0xff]
    %v3556 = vld [vmem:[#allocation2 + $0x1b8] sm:$0xff]
    %v3557 = vld [vmem:[#allocation2 + $0x1c0] sm:$0xff]
    %v3558 = vld [vmem:[#allocation2 + $0x1c8] sm:$0xff]
    %v3559 = vld [vmem:[#allocation2 + $0x1d0] sm:$0xff]
    %v3560 = vld [vmem:[#allocation2 + $0x1d8] sm:$0xff]
    %v3561 = vld [vmem:[#allocation2 + $0x1e0] sm:$0xff]
    %v3562 = vld [vmem:[#allocation2 + $0x1e8] sm:$0xff]
    %v3563 = vld [vmem:[#allocation2 + $0x1f0] sm:$0xff]
    %v3564 = vld [vmem:[#allocation2 + $0x1f8] sm:$0xff]
    %v3565 = vld [vmem:[#allocation2 + $0x200] sm:$0xff]
    %v3566 = vld [vmem:[#allocation2 + $0x208] sm:$0xff]
    %v3567 = vld [vmem:[#allocation2 + $0x210] sm:$0xff]
    %v3568 = vld [vmem:[#allocation2 + $0x218] sm:$0xff]
    %v3569 = vld [vmem:[#allocation2 + $0x220] sm:$0xff]
    %v3570 = vld [vmem:[#allocation2 + $0x228] sm:$0xff]
    %v3571 = vld [vmem:[#allocation2 + $0x230] sm:$0xff]
    %v3572 = vld [vmem:[#allocation2 + $0x238] sm:$0xff]
    %v3573 = vld [vmem:[#allocation2 + $0x240] sm:$0xff]
    %v3574 = vld [vmem:[#allocation2 + $0x248] sm:$0xff]
    %v3575 = vld [vmem:[#allocation2 + $0x250] sm:$0xff]
    %v3576 = vld [vmem:[#allocation2 + $0x258] sm:$0xff]
    %v3577 = vld [vmem:[#allocation2 + $0x260] sm:$0xff]
    %v3578 = vld [vmem:[#allocation2 + $0x268] sm:$0xff]
    %v3579 = vld [vmem:[#allocation2 + $0x270] sm:$0xff]
    %v3580 = vld [vmem:[#allocation2 + $0x278] sm:$0xff]
    %v3581 = vld [vmem:[#allocation2 + $0x280] sm:$0xff]
    %v3582 = vld [vmem:[#allocation2 + $0x288] sm:$0xff]
    %v3583 = vld [vmem:[#allocation2 + $0x290] sm:$0xff]
    %v3584 = vld [vmem:[#allocation2 + $0x298] sm:$0xff]
    %v3585 = vld [vmem:[#allocation2 + $0x2a0] sm:$0xff]
    %v3586 = vld [vmem:[#allocation2 + $0x2a8] sm:$0xff]
    %v3587 = vld [vmem:[#allocation2 + $0x2b0] sm:$0xff]
    %v3588 = vld [vmem:[#allocation2 + $0x2b8] sm:$0xff]
    %3590 = vset.pattern.permute.xlu0 0
    %3591 = vperm.xlu0 %3590, %v3092
    %v3592 = vpop.permute.xlu0 %3591
    %v3594 = vlaneseq
    %v3595 = vshrl.u32 %v3594, 7
    %v3596 = vsub.s32 0, %v3595
    %v3597 = vrot.slane %v3592, %v3596
    %v3599 = vlaneseq
    %v3600 = vshrl.u32 %v3599, 7
    %v3601 = vsub.s32 0, %v3600
    %v3602 = vrot.slane %v3091, %v3601
    %v3603 = vlaneseq
    %v3604 = vshrl.u32 %v3603, 7
    %v3605 = vsub.s32 1, %v3604
    %v3606 = vrot.slane %v3091, %v3605
    %v3607 = vlaneseq
    %v3608 = vshrl.u32 %v3607, 7
    %v3609 = vsub.s32 2, %v3608
    %v3610 = vrot.slane %v3091, %v3609
    %v3613 = vsel %vm680, %v3610, 0
    %3615 = vmatprep.subr.mxu0 %v3502
    %3616 = vmatpush1.msra.mxu0 %v3501
    %3617 = vmatprep.subr.mxu0 %v3504
    %3618 = vmatpush1.msra.mxu0 %v3503
    %3619 = vmatprep.subr.mxu0 %v3506
    %3620 = vmatpush1.msra.mxu0 %v3505
    %3621 = vmatprep.subr.mxu0 %v3508
    %3622 = vmatpush1.msra.mxu0 %v3507
    %3623 = vmatprep.subr.mxu0 %v3510
    %3624 = vmatpush1.msra.mxu0 %v3509
    %3625 = vmatprep.subr.mxu0 %v3512
    %3626 = vmatpush1.msra.mxu0 %v3511
    %3627 = vmatprep.subr.mxu0 %v3514
    %3628 = vmatpush1.msra.mxu0 %v3513
    %3629 = vmatprep.subr.mxu0 %v3516
    %3630 = vmatpush1.msra.mxu0 %v3515
    %3631 = vmatprep.subr.mxu0 %v3518
    %3632 = vmatpush1.msra.mxu0 %v3517
    %3633 = vmatprep.subr.mxu0 %v3520
    %3634 = vmatpush1.msra.mxu0 %v3519
    %3635 = vmatprep.subr.mxu0 %v3522
    %3636 = vmatpush1.msra.mxu0 %v3521
    %3637 = vmatprep.subr.mxu0 %v3524
    %3638 = vmatpush1.msra.mxu0 %v3523
    %3639 = vmatprep.subr.mxu0 %v3526
    %3640 = vmatpush1.msra.mxu0 %v3525
    %3641 = vmatprep.subr.mxu0 %v3528
    %3642 = vmatpush1.msra.mxu0 %v3527
    %3643 = vmatprep.subr.mxu0 %v3530
    %3644 = vmatpush1.msra.mxu0 %v3529
    %3645 = vmatprep.subr.mxu0 %v3532
    %3646 = vmatpush1.msra.mxu0 %v3531
    %3647 = vmatprep.subr.mxu0 %v3534
    %3648 = vmatpush1.msra.mxu0 %v3533
    %3649 = vmatprep.subr.mxu0 %v3536
    %3650 = vmatpush1.msra.mxu0 %v3535
    %3651 = vmatprep.subr.mxu0 %v3538
    %3652 = vmatpush1.msra.mxu0 %v3537
    %3653 = vmatprep.subr.mxu0 %v3540
    %3654 = vmatpush1.msra.mxu0 %v3539
    %3655 = vmatprep.subr.mxu0 %v3542
    %3656 = vmatpush1.msra.mxu0 %v3541
    %3657 = vmatprep.subr.mxu0 %v3544
    %3658 = vmatpush1.msra.mxu0 %v3543
    %3659 = vmatprep.subr.mxu0 %v3546
    %3660 = vmatpush1.msra.mxu0 %v3545
    %3661 = vmatprep.subr.mxu0 %v3548
    %3662 = vmatpush1.msra.mxu0 %v3547
    %3663 = vmatprep.subr.mxu0 %v3550
    %3664 = vmatpush1.msra.mxu0 %v3549
    %3665 = vmatprep.subr.mxu0 %v3552
    %3666 = vmatpush1.msra.mxu0 %v3551
    %3667 = vmatprep.subr.mxu0 %v3554
    %3668 = vmatpush1.msra.mxu0 %v3553
    %3669 = vmatprep.subr.mxu0 %v3556
    %3670 = vmatpush1.msra.mxu0 %v3555
    %3671 = vmatprep.subr.mxu0 %v3558
    %3672 = vmatpush1.msra.mxu0 %v3557
    %3673 = vmatprep.subr.mxu0 %v3560
    %3674 = vmatpush1.msra.mxu0 %v3559
    %3675 = vmatprep.subr.mxu0 %v3562
    %3676 = vmatpush1.msra.mxu0 %v3561
    %3677 = vmatprep.subr.mxu0 %v3564
    %3678 = vmatpush1.msra.mxu0 %v3563
    %3679 = vmatprep.mubr.f32.mxu0 %v3606
    %3680 = vmatmul.mubr.f32.gmra.mrb[0].mxu0 %v3602
    %v3681 = vpop.f32.mrb[0].mxu0
    %v3682 = vadd.f32 %v3597, %v3681
    %v3683 = vpop.f32.mrb[0].mxu0
    %v3684 = vadd.f32 %v3597, %v3683
    %3685 = vdwg.mxu0
    %3686 = vmatprep.subr.mxu0 %v3566
    %3687 = vmatpush1.msra.mxu0 %v3565
    %3688 = vmatprep.subr.mxu0 %v3568
    %3689 = vmatpush1.msra.mxu0 %v3567
    %3690 = vmatprep.subr.mxu0 %v3570
    %3691 = vmatpush1.msra.mxu0 %v3569
    %3692 = vmatprep.subr.mxu0 %v3572
    %3693 = vmatpush1.msra.mxu0 %v3571
    %3694 = vmatprep.subr.mxu0 %v3574
    %3695 = vmatpush1.msra.mxu0 %v3573
    %3696 = vmatprep.subr.mxu0 %v3576
    %3697 = vmatpush1.msra.mxu0 %v3575
    %3698 = vmatprep.subr.mxu0 %v3578
    %3699 = vmatpush1.msra.mxu0 %v3577
    %3700 = vmatprep.subr.mxu0 %v3580
    %3701 = vmatpush1.msra.mxu0 %v3579
    %3702 = vmatprep.subr.mxu0 %v3582
    %3703 = vmatpush1.msra.mxu0 %v3581
    %3704 = vmatprep.subr.mxu0 %v3584
    %3705 = vmatpush1.msra.mxu0 %v3583
    %3706 = vmatprep.subr.mxu0 %v3586
    %3707 = vmatpush1.msra.mxu0 %v3585
    %3708 = vmatprep.subr.mxu0 %v3588
    %3709 = vmatpush1.msra.mxu0 %v3587
    %3710 = vmatprep.subr.mxu0 0.0
    %3711 = vmatpush1.msra.mxu0 0.0
    %3712 = vmatprep.subr.mxu0 0.0
    %3713 = vmatpush1.msra.mxu0 0.0
    %3714 = vmatprep.subr.mxu0 0.0
    %3715 = vmatpush1.msra.mxu0 0.0
    %3716 = vmatprep.subr.mxu0 0.0
    %3717 = vmatpush1.msra.mxu0 0.0
    %3718 = vmatprep.subr.mxu0 0.0
    %3719 = vmatpush1.msra.mxu0 0.0
    %3720 = vmatprep.subr.mxu0 0.0
    %3721 = vmatpush1.msra.mxu0 0.0
    %3722 = vmatprep.subr.mxu0 0.0
    %3723 = vmatpush1.msra.mxu0 0.0
    %3724 = vmatprep.subr.mxu0 0.0
    %3725 = vmatpush1.msra.mxu0 0.0
    %3726 = vmatprep.subr.mxu0 0.0
    %3727 = vmatpush1.msra.mxu0 0.0
    %3728 = vmatprep.subr.mxu0 0.0
    %3729 = vmatpush1.msra.mxu0 0.0
    %3730 = vmatprep.subr.mxu0 0.0
    %3731 = vmatpush1.msra.mxu0 0.0
    %3732 = vmatprep.subr.mxu0 0.0
    %3733 = vmatpush1.msra.mxu0 0.0
    %3734 = vmatprep.subr.mxu0 0.0
    %3735 = vmatpush1.msra.mxu0 0.0
    %3736 = vmatprep.subr.mxu0 0.0
    %3737 = vmatpush1.msra.mxu0 0.0
    %3738 = vmatprep.subr.mxu0 0.0
    %3739 = vmatpush1.msra.mxu0 0.0
    %3740 = vmatprep.subr.mxu0 0.0
    %3741 = vmatpush1.msra.mxu0 0.0
    %3742 = vmatprep.subr.mxu0 0.0
    %3743 = vmatpush1.msra.mxu0 0.0
    %3744 = vmatprep.subr.mxu0 0.0
    %3745 = vmatpush1.msra.mxu0 0.0
    %3746 = vmatprep.subr.mxu0 0.0
    %3747 = vmatpush1.msra.mxu0 0.0
    %3748 = vmatprep.subr.mxu0 0.0
    %3749 = vmatpush1.msra.mxu0 0.0
    %3750 = vmatprep.mubr.f32.mxu0 0.0
    %3751 = vmatmul.mubr.f32.gmra.mrb[0].mxu0 %v3613
    %v3752 = vpop.f32.mrb[0].mxu0
    %v3753 = vadd.f32 %v3682, %v3752
    %v3754 = vpop.f32.mrb[0].mxu0
    %v3755 = vadd.f32 %v3684, %v3754
    %3756 = vdwg.mxu0
    %v3757 = vxor.u32 %v3753, 2147483648
    %v3758 = vxor.u32 %v3755, 2147483648
    %v3759 = vmul.f32 %v3757, 1.442695
    %v3760 = vpow.pop %v3759
    %v3761 = vmul.f32 %v3758, 1.442695
    %v3762 = vpow.pop %v3761
    %v3763 = vadd.f32 %v3760, 1.0
    %v3764 = vadd.f32 %v3762, 1.0
    %v3765 = vrcp.pop %v3763
    %v3766 = vmul.f32 1.0, %v3765
    %v3767 = vrcp.pop %v3764
    %v3768 = vmul.f32 1.0, %v3767
    %v3771 = vcombine.low %v3766, %v3768
    %v3773 = vunpack.c.l.s4 1966171168
    %v3774 = vunpack.c.0.s8 %v3773
    %v3775 = vlaneseq
    %v3776 = vshrl.u32 %v3775, 7
    %v3777 = vsub.s32 %v3774, %v3776
    %v3778 = vrot.slane %v3771, %v3777
    %v3780 = vunpack.c.l.s4 1966171168
    %v3781 = vunpack.c.0.s8 %v3780
    %v3782 = vlaneseq
    %v3783 = vshrl.u32 %v3782, 7
    %v3784 = vsub.s32 %v3781, %v3783
    %v3785 = vrot.slane %v3778, %v3784
    %v3787 = vlaneseq
    %vm3788 = vcmp.ge.s32.totalorder %v3787, 0
    %vm3789 = vcmp.lt.s32.totalorder %v3787, 256
    %vm3790 = vmand %vm3788, %vm3789
    %3791 = vst.msk [vmem:[#allocation7] sm:$0x3] %vm3790, %v3785
    // Predicated region
    $region30: #{tpu_custom_call.1} parent=1 // pred_check
      _
    $region31: #{tpu_custom_call.1} parent=1 // pred_check_branch
      %3793 = sbr.rel (0) target = $region33
    $region32: #{tpu_custom_call.1} parent=1 // pred_region
      %s3795 = ssub.s32 32, 32
      %3796 = vsyncadd [#allocation6], %s3795
      %s3798 = sshll.u32 [#allocation7], 4
      %s3799 = int_to_ptr.vmem [resolvable:$true] %s3798
      %3801 = dma.vmem_to_hbm [thread:$0]  %s3799, 32, %s6, [#allocation6]
    $region33: #{tpu_custom_call.1} parent=1 // pred_fallthru
      _
    // Predicated region
    $region34: #{tpu_custom_call.1} parent=1 // pred_check
      _
    $region35: #{tpu_custom_call.1} parent=1 // pred_check_branch
      %3803 = sbr.rel (0) target = $region37
    $region36: #{tpu_custom_call.1} parent=1 // pred_region
      %3804 = dma.done [#allocation6], 32
    $region37: #{tpu_custom_call.1} parent=1 // pred_fallthru
      _
    %3805 = vsyncpa [#allocation5], 1
    %3806 = vsyncpa [#allocation6], 1

</llo_original>
